<compile_context>
chip_gen: v7x
topology: tpu7x:2x2x1
jax: 0.10.0
libtpu: 0.0.40
codegen_flags: <defaults>
</compile_context>

<pallas_src>
import jax
import jax.numpy as jnp
from jax import lax
from jax.experimental import pallas as pl
from jax.experimental.pallas import tpu as pltpu

BN_EPS = 1e-5


def _conv_stats_kernel(x_ref, w_ref, conv_ref, stats_ref, xs_ref):
    """Fused pad + 3x3 conv (one NCHW image) + per-image BN partial stats.

    x_ref     : (Cin, H, W)      one image (block-squeezed over n), f32, VMEM
    w_ref     : (Cout*Cin*9,)    OIHW conv weights, flattened, SMEM scalars
    conv_ref  : (Cout, Ho*Wo)    lane-dense conv output for this image
    stats_ref : (Cout, 2)        [sum, sum_of_squares] for this image, f32
    xs_ref    : (3, Cin, Hp*Wo)  VMEM scratch: 3 column-shifted, zero-padded,
                                 width-Wo flattened copies of the image so every
                                 3x3 tap is a contiguous (Ho*Wo,) slice.
    """
    cin, H, W = x_ref.shape
    cout, howo = conv_ref.shape
    Ho, Wo = H + 2, W + 2

    # ---- fused zero padding (manual pad 1 + conv pad 1 = 2 per side) --------
    # xs[dw, ci, h*Wo + j] = xpad[ci, h, j + dw]
    xs_ref[...] = jnp.zeros_like(xs_ref)
    for r in range(H):
        row = x_ref[:, r, :]                                    # (Cin, W)
        for dw in range(3):
            start = (2 + r) * Wo + (2 - dw)
            xs_ref[dw, :, start:start + W] = row

    # ---- 3x3 conv: 9*Cin lane-dense VPU FMAs per output channel -------------
    # tap(ci, dh, dw) = xpad[ci, dh:dh+Ho, dw:dw+Wo] flattened
    #                 = xs[dw, ci, dh*Wo : dh*Wo + Ho*Wo]
    for co in range(cout):
        acc = None
        k = co * cin * 9                       # OIHW flat weight index
        for ci in range(cin):
            for dh in range(3):
                for dw in range(3):
                    tap = xs_ref[dw, ci, dh * Wo:dh * Wo + howo]   # (Ho*Wo,)
                    term = w_ref[k] * tap
                    acc = term if acc is None else acc + term
                    k += 1
        conv_ref[co, :] = acc

    # ---- per-image BN partial statistics (fused: no extra HBM pass) ---------
    # TODO(synk): E[x^2]-E[x]^2 in f32 can lose precision at very large N*H*W;
    # fine at these sizes, switch to shifted/two-level accumulation at scale.
    conv = conv_ref[...]                                        # (Cout, Ho*Wo)
    stats_ref[:, 0:1] = jnp.sum(conv, axis=1, keepdims=True)
    stats_ref[:, 1:2] = jnp.sum(conv * conv, axis=1, keepdims=True)


def _bn_relu_kernel(conv_ref, scale_ref, shift_ref, o_ref):
    """Folded BatchNorm scale/shift + ReLU, in place on lane-dense row blocks."""
    o_ref[...] = jnp.maximum(
        conv_ref[...] * scale_ref[...] + shift_ref[...], 0.0).astype(o_ref.dtype)


def _pick_row_block(rows: int, row_bytes: int, budget_bytes: int = 4 << 20) -> int:
    """Row block for pass 2: whole array if it fits the budget, else the largest
    divisor of `rows` that is a multiple of 8 and fits."""
    if rows * row_bytes <= budget_bytes:
        return rows
    cap = max(8, min(rows, budget_bytes // max(row_bytes, 1)))
    for rb in range(cap, 7, -1):
        if rows % rb == 0 and rb % 8 == 0:
            return rb
    return rows


def convolution_block(x_nchw, w_oihw, b, gamma, beta):
    """NCHW in / NCHW out, matching PyTorch ConvolutionBlock.forward (training)."""
    N, Cin, H, W = x_nchw.shape
    Cout = w_oihw.shape[0]
    Ho, Wo = H + 2, W + 2
    Hp = H + 4

    # The conv bias shifts every activation of a channel by a constant, which
    # training-mode BatchNorm removes exactly (mean subtraction); variance is
    # unchanged.  It is therefore unused (kept in the signature for parity).
    del b

    x = x_nchw.astype(jnp.float32)
    w_flat = w_oihw.astype(jnp.float32).reshape(-1)        # (Cout*Cin*9,), OIHW

    cparams = pltpu.CompilerParams(
        dimension_semantics=("parallel",),   # megacore: shard images / row blocks
        vmem_limit_bytes=32 * 1024 * 1024)   # tiny working set; safe on v5e..v7x

    # ---- pass 1: fused pad + conv + per-image BN partial stats --------------
    # TODO(synk): for large spatial sizes, tile H with a 2-row halo instead of
    # holding the whole (tiny) image per grid step.
    conv, stats = pl.pallas_call(
        _conv_stats_kernel,
        grid=(N,),
        in_specs=[
            pl.BlockSpec((None, Cin, H, W), lambda n: (n, 0, 0, 0)),
            pl.BlockSpec(memory_space=pltpu.MemorySpace.SMEM),
        ],
        out_specs=[
            pl.BlockSpec((None, Cout, Ho * Wo), lambda n: (n, 0, 0)),
            pl.BlockSpec((None, Cout, 2), lambda n: (n, 0, 0)),
        ],
        out_shape=[
            jax.ShapeDtypeStruct((N, Cout, Ho * Wo), jnp.float32),
            jax.ShapeDtypeStruct((N, Cout, 2), jnp.float32),
        ],
        scratch_shapes=[pltpu.VMEM((3, Cin, Hp * Wo), jnp.float32)],
        compiler_params=cparams,
    )(x, w_flat)

    # ---- tiny O(Cout) reduction + folded BN affine ---------------------------
    m = float(N * Ho * Wo)
    tot = jnp.sum(stats, axis=0)                         # (Cout, 2)
    mean = tot[:, 0] / m
    var = jnp.maximum(tot[:, 1] / m - mean * mean, 0.0)  # biased, training-mode
    scale = gamma.astype(jnp.float32) * lax.rsqrt(var + BN_EPS)
    shift = beta.astype(jnp.float32) - mean * scale

    # ---- pass 2: BN scale/shift + ReLU, in place, lane-dense big blocks ------
    rows = N * Cout
    conv2d = conv.reshape(rows, Ho * Wo)                 # free (bitcast) reshape
    scale_rows = jnp.tile(scale, N).reshape(rows, 1)     # per-(n, cout) row
    shift_rows = jnp.tile(shift, N).reshape(rows, 1)

    rb = _pick_row_block(rows, Ho * Wo * 4)
    out2d = pl.pallas_call(
        _bn_relu_kernel,
        grid=(rows // rb,),
        in_specs=[
            pl.BlockSpec((rb, Ho * Wo), lambda r: (r, 0)),
            pl.BlockSpec((rb, 1), lambda r: (r, 0)),
            pl.BlockSpec((rb, 1), lambda r: (r, 0)),
        ],
        out_specs=pl.BlockSpec((rb, Ho * Wo), lambda r: (r, 0)),
        out_shape=jax.ShapeDtypeStruct((rows, Ho * Wo), jnp.float32),
        input_output_aliases={0: 0},                     # in place on conv buffer
        compiler_params=cparams,
    )(conv2d, scale_rows, shift_rows)

    # Free reshape back to NCHW (we stayed NCHW throughout: no transpose).
    return out2d.reshape(N, Cout, Ho, Wo)


def reference(x_nchw, w_oihw, b, gamma, beta):
    """Pure-JAX reference mirroring the PyTorch module exactly (incl. conv bias)."""
    x = x_nchw.astype(jnp.float32)
    x_pad = jnp.pad(x, ((0, 0), (0, 0), (1, 1), (1, 1)))        # manual padding()
    conv = lax.conv_general_dilated(
        x_pad, w_oihw.astype(jnp.float32), (1, 1), ((1, 1), (1, 1)),
        dimension_numbers=("NCHW", "OIHW", "NCHW")) + b[None, :, None, None]
    mean = jnp.mean(conv, axis=(0, 2, 3), keepdims=True)
    var = jnp.mean(jnp.square(conv - mean), axis=(0, 2, 3), keepdims=True)
    out = (conv - mean) * lax.rsqrt(var + BN_EPS) * gamma[None, :, None, None] \
        + beta[None, :, None, None]
    return jnp.maximum(out, 0.0)


if __name__ == "__main__":
    key = jax.random.PRNGKey(0)
    k_x, k_w, k_b = jax.random.split(key, 3)

    N, C_in, H, W = 2, 4, 16, 16
    C_out = 4

    x = jax.random.normal(k_x, (N, C_in, H, W), dtype=jnp.float32)

    # Conv2d-style init (uniform +/- 1/sqrt(fan_in)); BatchNorm2d default affine.
    fan_in = C_in * 3 * 3
    bound = 1.0 / (fan_in ** 0.5)
    w = jax.random.uniform(k_w, (C_out, C_in, 3, 3), jnp.float32, -bound, bound)
    b = jax.random.uniform(k_b, (C_out,), jnp.float32, -bound, bound)
    gamma = jnp.ones((C_out,), jnp.float32)
    beta = jnp.zeros((C_out,), jnp.float32)

    fwd = jax.jit(convolution_block)
    out = jax.block_until_ready(fwd(x, w, b, gamma, beta))

    ref = jax.block_until_ready(reference(x, w, b, gamma, beta))
    assert out.shape == (N, C_out, H + 2, W + 2), out.shape
    assert jnp.allclose(out, ref, atol=1e-4, rtol=1e-4), \
        float(jnp.max(jnp.abs(out - ref)))

    print("KERNEL_OK")
</pallas_src>

<mosaic_0001>
module attributes {stable_mosaic.version = 11 : i64} {
  func.func @_conv_stats_kernel(%arg0: i32, %arg1: memref<1x4x16x16xf32, #tpu.memory_space<vmem>>, %arg2: memref<144xf32, #tpu.memory_space<smem>>, %arg3: memref<1x4x324xf32, #tpu.memory_space<vmem>>, %arg4: memref<1x4x2xf32, #tpu.memory_space<vmem>>, %arg5: memref<3x4x360xf32, #tpu.memory_space<vmem>>) attributes {dimension_semantics = [#tpu.dimension_semantics<parallel>], iteration_bounds = array<i64: 2>, scalar_prefetch = 0 : i64, scratch_operands = 1 : i64, tpu.core_type = #tpu.core_type<tc>, window_params = [{transform_indices = @transform_0, window_bounds = array<i64: 1, 4, 16, 16>}, {transform_indices = @transform_1, window_bounds = array<i64: 144>}, {transform_indices = @transform_2, window_bounds = array<i64: 1, 4, 324>}, {transform_indices = @transform_3, window_bounds = array<i64: 1, 4, 2>}]} {
    %cst = arith.constant 0.000000e+00 : f32
    %0 = vector.broadcast %cst : f32 to vector<3x4x360xf32>
    %c0 = arith.constant 0 : index
    %c0_0 = arith.constant 0 : index
    %c0_1 = arith.constant 0 : index
    %1 = vector.load %arg5[%c0, %c0_0, %c0_1] : memref<3x4x360xf32, #tpu.memory_space<vmem>>, vector<3x4x360xf32>
    tpu.vector_store %arg5[%c0, %c0_0, %c0_1], %0 {strides = array<i32>} : memref<3x4x360xf32, #tpu.memory_space<vmem>>, vector<3x4x360xf32>,
    %c0_2 = arith.constant 0 : index
    %c0_3 = arith.constant 0 : index
    %c0_4 = arith.constant 0 : index
    %c0_5 = arith.constant 0 : index
    %2 = vector.load %arg1[%c0_2, %c0_3, %c0_4, %c0_5] : memref<1x4x16x16xf32, #tpu.memory_space<vmem>>, vector<1x4x1x16xf32>
    %3 = vector.shape_cast %2 : vector<1x4x1x16xf32> to vector<4x16xf32>
    %c0_6 = arith.constant 0 : index
    %c0_7 = arith.constant 0 : index
    %c38 = arith.constant 38 : index
    %4 = vector.load %arg5[%c0_6, %c0_7, %c38] : memref<3x4x360xf32, #tpu.memory_space<vmem>>, vector<1x4x16xf32>
    %5 = vector.shape_cast %4 : vector<1x4x16xf32> to vector<4x16xf32>
    %6 = vector.shape_cast %3 : vector<4x16xf32> to vector<1x4x16xf32>
    tpu.vector_store %arg5[%c0_6, %c0_7, %c38], %6 {strides = array<i32>} : memref<3x4x360xf32, #tpu.memory_space<vmem>>, vector<1x4x16xf32>,
    %c1 = arith.constant 1 : index
    %c0_8 = arith.constant 0 : index
    %c37 = arith.constant 37 : index
    %7 = vector.load %arg5[%c1, %c0_8, %c37] : memref<3x4x360xf32, #tpu.memory_space<vmem>>, vector<1x4x16xf32>
    %8 = vector.shape_cast %7 : vector<1x4x16xf32> to vector<4x16xf32>
    %9 = vector.shape_cast %3 : vector<4x16xf32> to vector<1x4x16xf32>
    tpu.vector_store %arg5[%c1, %c0_8, %c37], %9 {strides = array<i32>} : memref<3x4x360xf32, #tpu.memory_space<vmem>>, vector<1x4x16xf32>,
    %c2 = arith.constant 2 : index
    %c0_9 = arith.constant 0 : index
    %c36 = arith.constant 36 : index
    %10 = vector.load %arg5[%c2, %c0_9, %c36] : memref<3x4x360xf32, #tpu.memory_space<vmem>>, vector<1x4x16xf32>
    %11 = vector.shape_cast %10 : vector<1x4x16xf32> to vector<4x16xf32>
    %12 = vector.shape_cast %3 : vector<4x16xf32> to vector<1x4x16xf32>
    tpu.vector_store %arg5[%c2, %c0_9, %c36], %12 {strides = array<i32>} : memref<3x4x360xf32, #tpu.memory_space<vmem>>, vector<1x4x16xf32>,
    %c0_10 = arith.constant 0 : index
    %c0_11 = arith.constant 0 : index
    %c1_12 = arith.constant 1 : index
    %c0_13 = arith.constant 0 : index
    %13 = vector.load %arg1[%c0_10, %c0_11, %c1_12, %c0_13] : memref<1x4x16x16xf32, #tpu.memory_space<vmem>>, vector<1x4x1x16xf32>
    %14 = vector.shape_cast %13 : vector<1x4x1x16xf32> to vector<4x16xf32>
    %c0_14 = arith.constant 0 : index
    %c0_15 = arith.constant 0 : index
    %c56 = arith.constant 56 : index
    %15 = vector.load %arg5[%c0_14, %c0_15, %c56] : memref<3x4x360xf32, #tpu.memory_space<vmem>>, vector<1x4x16xf32>
    %16 = vector.shape_cast %15 : vector<1x4x16xf32> to vector<4x16xf32>
    %17 = vector.shape_cast %14 : vector<4x16xf32> to vector<1x4x16xf32>
    tpu.vector_store %arg5[%c0_14, %c0_15, %c56], %17 {strides = array<i32>} : memref<3x4x360xf32, #tpu.memory_space<vmem>>, vector<1x4x16xf32>,
    %c1_16 = arith.constant 1 : index
    %c0_17 = arith.constant 0 : index
    %c55 = arith.constant 55 : index
    %18 = vector.load %arg5[%c1_16, %c0_17, %c55] : memref<3x4x360xf32, #tpu.memory_space<vmem>>, vector<1x4x16xf32>
    %19 = vector.shape_cast %18 : vector<1x4x16xf32> to vector<4x16xf32>
    %20 = vector.shape_cast %14 : vector<4x16xf32> to vector<1x4x16xf32>
    tpu.vector_store %arg5[%c1_16, %c0_17, %c55], %20 {strides = array<i32>} : memref<3x4x360xf32, #tpu.memory_space<vmem>>, vector<1x4x16xf32>,
    %c2_18 = arith.constant 2 : index
    %c0_19 = arith.constant 0 : index
    %c54 = arith.constant 54 : index
    %21 = vector.load %arg5[%c2_18, %c0_19, %c54] : memref<3x4x360xf32, #tpu.memory_space<vmem>>, vector<1x4x16xf32>
    %22 = vector.shape_cast %21 : vector<1x4x16xf32> to vector<4x16xf32>
    %23 = vector.shape_cast %14 : vector<4x16xf32> to vector<1x4x16xf32>
    tpu.vector_store %arg5[%c2_18, %c0_19, %c54], %23 {strides = array<i32>} : memref<3x4x360xf32, #tpu.memory_space<vmem>>, vector<1x4x16xf32>,
    %c0_20 = arith.constant 0 : index
    %c0_21 = arith.constant 0 : index
    %c2_22 = arith.constant 2 : index
    %c0_23 = arith.constant 0 : index
    %24 = vector.load %arg1[%c0_20, %c0_21, %c2_22, %c0_23] : memref<1x4x16x16xf32, #tpu.memory_space<vmem>>, vector<1x4x1x16xf32>
    %25 = vector.shape_cast %24 : vector<1x4x1x16xf32> to vector<4x16xf32>
    %c0_24 = arith.constant 0 : index
    %c0_25 = arith.constant 0 : index
    %c74 = arith.constant 74 : index
    %26 = vector.load %arg5[%c0_24, %c0_25, %c74] : memref<3x4x360xf32, #tpu.memory_space<vmem>>, vector<1x4x16xf32>
    %27 = vector.shape_cast %26 : vector<1x4x16xf32> to vector<4x16xf32>
    %28 = vector.shape_cast %25 : vector<4x16xf32> to vector<1x4x16xf32>
    tpu.vector_store %arg5[%c0_24, %c0_25, %c74], %28 {strides = array<i32>} : memref<3x4x360xf32, #tpu.memory_space<vmem>>, vector<1x4x16xf32>,
    %c1_26 = arith.constant 1 : index
    %c0_27 = arith.constant 0 : index
    %c73 = arith.constant 73 : index
    %29 = vector.load %arg5[%c1_26, %c0_27, %c73] : memref<3x4x360xf32, #tpu.memory_space<vmem>>, vector<1x4x16xf32>
    %30 = vector.shape_cast %29 : vector<1x4x16xf32> to vector<4x16xf32>
    %31 = vector.shape_cast %25 : vector<4x16xf32> to vector<1x4x16xf32>
    tpu.vector_store %arg5[%c1_26, %c0_27, %c73], %31 {strides = array<i32>} : memref<3x4x360xf32, #tpu.memory_space<vmem>>, vector<1x4x16xf32>,
    %c2_28 = arith.constant 2 : index
    %c0_29 = arith.constant 0 : index
    %c72 = arith.constant 72 : index
    %32 = vector.load %arg5[%c2_28, %c0_29, %c72] : memref<3x4x360xf32, #tpu.memory_space<vmem>>, vector<1x4x16xf32>
    %33 = vector.shape_cast %32 : vector<1x4x16xf32> to vector<4x16xf32>
    %34 = vector.shape_cast %25 : vector<4x16xf32> to vector<1x4x16xf32>
    tpu.vector_store %arg5[%c2_28, %c0_29, %c72], %34 {strides = array<i32>} : memref<3x4x360xf32, #tpu.memory_space<vmem>>, vector<1x4x16xf32>,
    %c0_30 = arith.constant 0 : index
    %c0_31 = arith.constant 0 : index
    %c3 = arith.constant 3 : index
    %c0_32 = arith.constant 0 : index
    %35 = vector.load %arg1[%c0_30, %c0_31, %c3, %c0_32] : memref<1x4x16x16xf32, #tpu.memory_space<vmem>>, vector<1x4x1x16xf32>
    %36 = vector.shape_cast %35 : vector<1x4x1x16xf32> to vector<4x16xf32>
    %c0_33 = arith.constant 0 : index
    %c0_34 = arith.constant 0 : index
    %c92 = arith.constant 92 : index
    %37 = vector.load %arg5[%c0_33, %c0_34, %c92] : memref<3x4x360xf32, #tpu.memory_space<vmem>>, vector<1x4x16xf32>
    %38 = vector.shape_cast %37 : vector<1x4x16xf32> to vector<4x16xf32>
    %39 = vector.shape_cast %36 : vector<4x16xf32> to vector<1x4x16xf32>
    tpu.vector_store %arg5[%c0_33, %c0_34, %c92], %39 {strides = array<i32>} : memref<3x4x360xf32, #tpu.memory_space<vmem>>, vector<1x4x16xf32>,
    %c1_35 = arith.constant 1 : index
    %c0_36 = arith.constant 0 : index
    %c91 = arith.constant 91 : index
    %40 = vector.load %arg5[%c1_35, %c0_36, %c91] : memref<3x4x360xf32, #tpu.memory_space<vmem>>, vector<1x4x16xf32>
    %41 = vector.shape_cast %40 : vector<1x4x16xf32> to vector<4x16xf32>
    %42 = vector.shape_cast %36 : vector<4x16xf32> to vector<1x4x16xf32>
    tpu.vector_store %arg5[%c1_35, %c0_36, %c91], %42 {strides = array<i32>} : memref<3x4x360xf32, #tpu.memory_space<vmem>>, vector<1x4x16xf32>,
    %c2_37 = arith.constant 2 : index
    %c0_38 = arith.constant 0 : index
    %c90 = arith.constant 90 : index
    %43 = vector.load %arg5[%c2_37, %c0_38, %c90] : memref<3x4x360xf32, #tpu.memory_space<vmem>>, vector<1x4x16xf32>
    %44 = vector.shape_cast %43 : vector<1x4x16xf32> to vector<4x16xf32>
    %45 = vector.shape_cast %36 : vector<4x16xf32> to vector<1x4x16xf32>
    tpu.vector_store %arg5[%c2_37, %c0_38, %c90], %45 {strides = array<i32>} : memref<3x4x360xf32, #tpu.memory_space<vmem>>, vector<1x4x16xf32>,
    %c0_39 = arith.constant 0 : index
    %c0_40 = arith.constant 0 : index
    %c4 = arith.constant 4 : index
    %c0_41 = arith.constant 0 : index
    %46 = vector.load %arg1[%c0_39, %c0_40, %c4, %c0_41] : memref<1x4x16x16xf32, #tpu.memory_space<vmem>>, vector<1x4x1x16xf32>
    %47 = vector.shape_cast %46 : vector<1x4x1x16xf32> to vector<4x16xf32>
    %c0_42 = arith.constant 0 : index
    %c0_43 = arith.constant 0 : index
    %c110 = arith.constant 110 : index
    %48 = vector.load %arg5[%c0_42, %c0_43, %c110] : memref<3x4x360xf32, #tpu.memory_space<vmem>>, vector<1x4x16xf32>
    %49 = vector.shape_cast %48 : vector<1x4x16xf32> to vector<4x16xf32>
    %50 = vector.shape_cast %47 : vector<4x16xf32> to vector<1x4x16xf32>
    tpu.vector_store %arg5[%c0_42, %c0_43, %c110], %50 {strides = array<i32>} : memref<3x4x360xf32, #tpu.memory_space<vmem>>, vector<1x4x16xf32>,
    %c1_44 = arith.constant 1 : index
    %c0_45 = arith.constant 0 : index
    %c109 = arith.constant 109 : index
    %51 = vector.load %arg5[%c1_44, %c0_45, %c109] : memref<3x4x360xf32, #tpu.memory_space<vmem>>, vector<1x4x16xf32>
    %52 = vector.shape_cast %51 : vector<1x4x16xf32> to vector<4x16xf32>
    %53 = vector.shape_cast %47 : vector<4x16xf32> to vector<1x4x16xf32>
    tpu.vector_store %arg5[%c1_44, %c0_45, %c109], %53 {strides = array<i32>} : memref<3x4x360xf32, #tpu.memory_space<vmem>>, vector<1x4x16xf32>,
    %c2_46 = arith.constant 2 : index
    %c0_47 = arith.constant 0 : index
    %c108 = arith.constant 108 : index
    %54 = vector.load %arg5[%c2_46, %c0_47, %c108] : memref<3x4x360xf32, #tpu.memory_space<vmem>>, vector<1x4x16xf32>
    %55 = vector.shape_cast %54 : vector<1x4x16xf32> to vector<4x16xf32>
    %56 = vector.shape_cast %47 : vector<4x16xf32> to vector<1x4x16xf32>
    tpu.vector_store %arg5[%c2_46, %c0_47, %c108], %56 {strides = array<i32>} : memref<3x4x360xf32, #tpu.memory_space<vmem>>, vector<1x4x16xf32>,
    %c0_48 = arith.constant 0 : index
    %c0_49 = arith.constant 0 : index
    %c5 = arith.constant 5 : index
    %c0_50 = arith.constant 0 : index
    %57 = vector.load %arg1[%c0_48, %c0_49, %c5, %c0_50] : memref<1x4x16x16xf32, #tpu.memory_space<vmem>>, vector<1x4x1x16xf32>
    %58 = vector.shape_cast %57 : vector<1x4x1x16xf32> to vector<4x16xf32>
    %c0_51 = arith.constant 0 : index
    %c0_52 = arith.constant 0 : index
    %c128 = arith.constant 128 : index
    %59 = vector.load %arg5[%c0_51, %c0_52, %c128] : memref<3x4x360xf32, #tpu.memory_space<vmem>>, vector<1x4x16xf32>
    %60 = vector.shape_cast %59 : vector<1x4x16xf32> to vector<4x16xf32>
    %61 = vector.shape_cast %58 : vector<4x16xf32> to vector<1x4x16xf32>
    tpu.vector_store %arg5[%c0_51, %c0_52, %c128], %61 {strides = array<i32>} : memref<3x4x360xf32, #tpu.memory_space<vmem>>, vector<1x4x16xf32>,
    %c1_53 = arith.constant 1 : index
    %c0_54 = arith.constant 0 : index
    %c127 = arith.constant 127 : index
    %62 = vector.load %arg5[%c1_53, %c0_54, %c127] : memref<3x4x360xf32, #tpu.memory_space<vmem>>, vector<1x4x16xf32>
    %63 = vector.shape_cast %62 : vector<1x4x16xf32> to vector<4x16xf32>
    %64 = vector.shape_cast %58 : vector<4x16xf32> to vector<1x4x16xf32>
    tpu.vector_store %arg5[%c1_53, %c0_54, %c127], %64 {strides = array<i32>} : memref<3x4x360xf32, #tpu.memory_space<vmem>>, vector<1x4x16xf32>,
    %c2_55 = arith.constant 2 : index
    %c0_56 = arith.constant 0 : index
    %c126 = arith.constant 126 : index
    %65 = vector.load %arg5[%c2_55, %c0_56, %c126] : memref<3x4x360xf32, #tpu.memory_space<vmem>>, vector<1x4x16xf32>
    %66 = vector.shape_cast %65 : vector<1x4x16xf32> to vector<4x16xf32>
    %67 = vector.shape_cast %58 : vector<4x16xf32> to vector<1x4x16xf32>
    tpu.vector_store %arg5[%c2_55, %c0_56, %c126], %67 {strides = array<i32>} : memref<3x4x360xf32, #tpu.memory_space<vmem>>, vector<1x4x16xf32>,
    %c0_57 = arith.constant 0 : index
    %c0_58 = arith.constant 0 : index
    %c6 = arith.constant 6 : index
    %c0_59 = arith.constant 0 : index
    %68 = vector.load %arg1[%c0_57, %c0_58, %c6, %c0_59] : memref<1x4x16x16xf32, #tpu.memory_space<vmem>>, vector<1x4x1x16xf32>
    %69 = vector.shape_cast %68 : vector<1x4x1x16xf32> to vector<4x16xf32>
    %c0_60 = arith.constant 0 : index
    %c0_61 = arith.constant 0 : index
    %c146 = arith.constant 146 : index
    %70 = vector.load %arg5[%c0_60, %c0_61, %c146] : memref<3x4x360xf32, #tpu.memory_space<vmem>>, vector<1x4x16xf32>
    %71 = vector.shape_cast %70 : vector<1x4x16xf32> to vector<4x16xf32>
    %72 = vector.shape_cast %69 : vector<4x16xf32> to vector<1x4x16xf32>
    tpu.vector_store %arg5[%c0_60, %c0_61, %c146], %72 {strides = array<i32>} : memref<3x4x360xf32, #tpu.memory_space<vmem>>, vector<1x4x16xf32>,
    %c1_62 = arith.constant 1 : index
    %c0_63 = arith.constant 0 : index
    %c145 = arith.constant 145 : index
    %73 = vector.load %arg5[%c1_62, %c0_63, %c145] : memref<3x4x360xf32, #tpu.memory_space<vmem>>, vector<1x4x16xf32>
    %74 = vector.shape_cast %73 : vector<1x4x16xf32> to vector<4x16xf32>
    %75 = vector.shape_cast %69 : vector<4x16xf32> to vector<1x4x16xf32>
    tpu.vector_store %arg5[%c1_62, %c0_63, %c145], %75 {strides = array<i32>} : memref<3x4x360xf32, #tpu.memory_space<vmem>>, vector<1x4x16xf32>,
    %c2_64 = arith.constant 2 : index
    %c0_65 = arith.constant 0 : index
    %c144 = arith.constant 144 : index
    %76 = vector.load %arg5[%c2_64, %c0_65, %c144] : memref<3x4x360xf32, #tpu.memory_space<vmem>>, vector<1x4x16xf32>
    %77 = vector.shape_cast %76 : vector<1x4x16xf32> to vector<4x16xf32>
    %78 = vector.shape_cast %69 : vector<4x16xf32> to vector<1x4x16xf32>
    tpu.vector_store %arg5[%c2_64, %c0_65, %c144], %78 {strides = array<i32>} : memref<3x4x360xf32, #tpu.memory_space<vmem>>, vector<1x4x16xf32>,
    %c0_66 = arith.constant 0 : index
    %c0_67 = arith.constant 0 : index
    %c7 = arith.constant 7 : index
    %c0_68 = arith.constant 0 : index
    %79 = vector.load %arg1[%c0_66, %c0_67, %c7, %c0_68] : memref<1x4x16x16xf32, #tpu.memory_space<vmem>>, vector<1x4x1x16xf32>
    %80 = vector.shape_cast %79 : vector<1x4x1x16xf32> to vector<4x16xf32>
    %c0_69 = arith.constant 0 : index
    %c0_70 = arith.constant 0 : index
    %c164 = arith.constant 164 : index
    %81 = vector.load %arg5[%c0_69, %c0_70, %c164] : memref<3x4x360xf32, #tpu.memory_space<vmem>>, vector<1x4x16xf32>
    %82 = vector.shape_cast %81 : vector<1x4x16xf32> to vector<4x16xf32>
    %83 = vector.shape_cast %80 : vector<4x16xf32> to vector<1x4x16xf32>
    tpu.vector_store %arg5[%c0_69, %c0_70, %c164], %83 {strides = array<i32>} : memref<3x4x360xf32, #tpu.memory_space<vmem>>, vector<1x4x16xf32>,
    %c1_71 = arith.constant 1 : index
    %c0_72 = arith.constant 0 : index
    %c163 = arith.constant 163 : index
    %84 = vector.load %arg5[%c1_71, %c0_72, %c163] : memref<3x4x360xf32, #tpu.memory_space<vmem>>, vector<1x4x16xf32>
    %85 = vector.shape_cast %84 : vector<1x4x16xf32> to vector<4x16xf32>
    %86 = vector.shape_cast %80 : vector<4x16xf32> to vector<1x4x16xf32>
    tpu.vector_store %arg5[%c1_71, %c0_72, %c163], %86 {strides = array<i32>} : memref<3x4x360xf32, #tpu.memory_space<vmem>>, vector<1x4x16xf32>,
    %c2_73 = arith.constant 2 : index
    %c0_74 = arith.constant 0 : index
    %c162 = arith.constant 162 : index
    %87 = vector.load %arg5[%c2_73, %c0_74, %c162] : memref<3x4x360xf32, #tpu.memory_space<vmem>>, vector<1x4x16xf32>
    %88 = vector.shape_cast %87 : vector<1x4x16xf32> to vector<4x16xf32>
    %89 = vector.shape_cast %80 : vector<4x16xf32> to vector<1x4x16xf32>
    tpu.vector_store %arg5[%c2_73, %c0_74, %c162], %89 {strides = array<i32>} : memref<3x4x360xf32, #tpu.memory_space<vmem>>, vector<1x4x16xf32>,
    %c0_75 = arith.constant 0 : index
    %c0_76 = arith.constant 0 : index
    %c8 = arith.constant 8 : index
    %c0_77 = arith.constant 0 : index
    %90 = vector.load %arg1[%c0_75, %c0_76, %c8, %c0_77] : memref<1x4x16x16xf32, #tpu.memory_space<vmem>>, vector<1x4x1x16xf32>
    %91 = vector.shape_cast %90 : vector<1x4x1x16xf32> to vector<4x16xf32>
    %c0_78 = arith.constant 0 : index
    %c0_79 = arith.constant 0 : index
    %c182 = arith.constant 182 : index
    %92 = vector.load %arg5[%c0_78, %c0_79, %c182] : memref<3x4x360xf32, #tpu.memory_space<vmem>>, vector<1x4x16xf32>
    %93 = vector.shape_cast %92 : vector<1x4x16xf32> to vector<4x16xf32>
    %94 = vector.shape_cast %91 : vector<4x16xf32> to vector<1x4x16xf32>
    tpu.vector_store %arg5[%c0_78, %c0_79, %c182], %94 {strides = array<i32>} : memref<3x4x360xf32, #tpu.memory_space<vmem>>, vector<1x4x16xf32>,
    %c1_80 = arith.constant 1 : index
    %c0_81 = arith.constant 0 : index
    %c181 = arith.constant 181 : index
    %95 = vector.load %arg5[%c1_80, %c0_81, %c181] : memref<3x4x360xf32, #tpu.memory_space<vmem>>, vector<1x4x16xf32>
    %96 = vector.shape_cast %95 : vector<1x4x16xf32> to vector<4x16xf32>
    %97 = vector.shape_cast %91 : vector<4x16xf32> to vector<1x4x16xf32>
    tpu.vector_store %arg5[%c1_80, %c0_81, %c181], %97 {strides = array<i32>} : memref<3x4x360xf32, #tpu.memory_space<vmem>>, vector<1x4x16xf32>,
    %c2_82 = arith.constant 2 : index
    %c0_83 = arith.constant 0 : index
    %c180 = arith.constant 180 : index
    %98 = vector.load %arg5[%c2_82, %c0_83, %c180] : memref<3x4x360xf32, #tpu.memory_space<vmem>>, vector<1x4x16xf32>
    %99 = vector.shape_cast %98 : vector<1x4x16xf32> to vector<4x16xf32>
    %100 = vector.shape_cast %91 : vector<4x16xf32> to vector<1x4x16xf32>
    tpu.vector_store %arg5[%c2_82, %c0_83, %c180], %100 {strides = array<i32>} : memref<3x4x360xf32, #tpu.memory_space<vmem>>, vector<1x4x16xf32>,
    %c0_84 = arith.constant 0 : index
    %c0_85 = arith.constant 0 : index
    %c9 = arith.constant 9 : index
    %c0_86 = arith.constant 0 : index
    %101 = vector.load %arg1[%c0_84, %c0_85, %c9, %c0_86] : memref<1x4x16x16xf32, #tpu.memory_space<vmem>>, vector<1x4x1x16xf32>
    %102 = vector.shape_cast %101 : vector<1x4x1x16xf32> to vector<4x16xf32>
    %c0_87 = arith.constant 0 : index
    %c0_88 = arith.constant 0 : index
    %c200 = arith.constant 200 : index
    %103 = vector.load %arg5[%c0_87, %c0_88, %c200] : memref<3x4x360xf32, #tpu.memory_space<vmem>>, vector<1x4x16xf32>
    %104 = vector.shape_cast %103 : vector<1x4x16xf32> to vector<4x16xf32>
    %105 = vector.shape_cast %102 : vector<4x16xf32> to vector<1x4x16xf32>
    tpu.vector_store %arg5[%c0_87, %c0_88, %c200], %105 {strides = array<i32>} : memref<3x4x360xf32, #tpu.memory_space<vmem>>, vector<1x4x16xf32>,
    %c1_89 = arith.constant 1 : index
    %c0_90 = arith.constant 0 : index
    %c199 = arith.constant 199 : index
    %106 = vector.load %arg5[%c1_89, %c0_90, %c199] : memref<3x4x360xf32, #tpu.memory_space<vmem>>, vector<1x4x16xf32>
    %107 = vector.shape_cast %106 : vector<1x4x16xf32> to vector<4x16xf32>
    %108 = vector.shape_cast %102 : vector<4x16xf32> to vector<1x4x16xf32>
    tpu.vector_store %arg5[%c1_89, %c0_90, %c199], %108 {strides = array<i32>} : memref<3x4x360xf32, #tpu.memory_space<vmem>>, vector<1x4x16xf32>,
    %c2_91 = arith.constant 2 : index
    %c0_92 = arith.constant 0 : index
    %c198 = arith.constant 198 : index
    %109 = vector.load %arg5[%c2_91, %c0_92, %c198] : memref<3x4x360xf32, #tpu.memory_space<vmem>>, vector<1x4x16xf32>
    %110 = vector.shape_cast %109 : vector<1x4x16xf32> to vector<4x16xf32>
    %111 = vector.shape_cast %102 : vector<4x16xf32> to vector<1x4x16xf32>
    tpu.vector_store %arg5[%c2_91, %c0_92, %c198], %111 {strides = array<i32>} : memref<3x4x360xf32, #tpu.memory_space<vmem>>, vector<1x4x16xf32>,
    %c0_93 = arith.constant 0 : index
    %c0_94 = arith.constant 0 : index
    %c10 = arith.constant 10 : index
    %c0_95 = arith.constant 0 : index
    %112 = vector.load %arg1[%c0_93, %c0_94, %c10, %c0_95] : memref<1x4x16x16xf32, #tpu.memory_space<vmem>>, vector<1x4x1x16xf32>
    %113 = vector.shape_cast %112 : vector<1x4x1x16xf32> to vector<4x16xf32>
    %c0_96 = arith.constant 0 : index
    %c0_97 = arith.constant 0 : index
    %c218 = arith.constant 218 : index
    %114 = vector.load %arg5[%c0_96, %c0_97, %c218] : memref<3x4x360xf32, #tpu.memory_space<vmem>>, vector<1x4x16xf32>
    %115 = vector.shape_cast %114 : vector<1x4x16xf32> to vector<4x16xf32>
    %116 = vector.shape_cast %113 : vector<4x16xf32> to vector<1x4x16xf32>
    tpu.vector_store %arg5[%c0_96, %c0_97, %c218], %116 {strides = array<i32>} : memref<3x4x360xf32, #tpu.memory_space<vmem>>, vector<1x4x16xf32>,
    %c1_98 = arith.constant 1 : index
    %c0_99 = arith.constant 0 : index
    %c217 = arith.constant 217 : index
    %117 = vector.load %arg5[%c1_98, %c0_99, %c217] : memref<3x4x360xf32, #tpu.memory_space<vmem>>, vector<1x4x16xf32>
    %118 = vector.shape_cast %117 : vector<1x4x16xf32> to vector<4x16xf32>
    %119 = vector.shape_cast %113 : vector<4x16xf32> to vector<1x4x16xf32>
    tpu.vector_store %arg5[%c1_98, %c0_99, %c217], %119 {strides = array<i32>} : memref<3x4x360xf32, #tpu.memory_space<vmem>>, vector<1x4x16xf32>,
    %c2_100 = arith.constant 2 : index
    %c0_101 = arith.constant 0 : index
    %c216 = arith.constant 216 : index
    %120 = vector.load %arg5[%c2_100, %c0_101, %c216] : memref<3x4x360xf32, #tpu.memory_space<vmem>>, vector<1x4x16xf32>
    %121 = vector.shape_cast %120 : vector<1x4x16xf32> to vector<4x16xf32>
    %122 = vector.shape_cast %113 : vector<4x16xf32> to vector<1x4x16xf32>
    tpu.vector_store %arg5[%c2_100, %c0_101, %c216], %122 {strides = array<i32>} : memref<3x4x360xf32, #tpu.memory_space<vmem>>, vector<1x4x16xf32>,
    %c0_102 = arith.constant 0 : index
    %c0_103 = arith.constant 0 : index
    %c11 = arith.constant 11 : index
    %c0_104 = arith.constant 0 : index
    %123 = vector.load %arg1[%c0_102, %c0_103, %c11, %c0_104] : memref<1x4x16x16xf32, #tpu.memory_space<vmem>>, vector<1x4x1x16xf32>
    %124 = vector.shape_cast %123 : vector<1x4x1x16xf32> to vector<4x16xf32>
    %c0_105 = arith.constant 0 : index
    %c0_106 = arith.constant 0 : index
    %c236 = arith.constant 236 : index
    %125 = vector.load %arg5[%c0_105, %c0_106, %c236] : memref<3x4x360xf32, #tpu.memory_space<vmem>>, vector<1x4x16xf32>
    %126 = vector.shape_cast %125 : vector<1x4x16xf32> to vector<4x16xf32>
    %127 = vector.shape_cast %124 : vector<4x16xf32> to vector<1x4x16xf32>
    tpu.vector_store %arg5[%c0_105, %c0_106, %c236], %127 {strides = array<i32>} : memref<3x4x360xf32, #tpu.memory_space<vmem>>, vector<1x4x16xf32>,
    %c1_107 = arith.constant 1 : index
    %c0_108 = arith.constant 0 : index
    %c235 = arith.constant 235 : index
    %128 = vector.load %arg5[%c1_107, %c0_108, %c235] : memref<3x4x360xf32, #tpu.memory_space<vmem>>, vector<1x4x16xf32>
    %129 = vector.shape_cast %128 : vector<1x4x16xf32> to vector<4x16xf32>
    %130 = vector.shape_cast %124 : vector<4x16xf32> to vector<1x4x16xf32>
    tpu.vector_store %arg5[%c1_107, %c0_108, %c235], %130 {strides = array<i32>} : memref<3x4x360xf32, #tpu.memory_space<vmem>>, vector<1x4x16xf32>,
    %c2_109 = arith.constant 2 : index
    %c0_110 = arith.constant 0 : index
    %c234 = arith.constant 234 : index
    %131 = vector.load %arg5[%c2_109, %c0_110, %c234] : memref<3x4x360xf32, #tpu.memory_space<vmem>>, vector<1x4x16xf32>
    %132 = vector.shape_cast %131 : vector<1x4x16xf32> to vector<4x16xf32>
    %133 = vector.shape_cast %124 : vector<4x16xf32> to vector<1x4x16xf32>
    tpu.vector_store %arg5[%c2_109, %c0_110, %c234], %133 {strides = array<i32>} : memref<3x4x360xf32, #tpu.memory_space<vmem>>, vector<1x4x16xf32>,
    %c0_111 = arith.constant 0 : index
    %c0_112 = arith.constant 0 : index
    %c12 = arith.constant 12 : index
    %c0_113 = arith.constant 0 : index
    %134 = vector.load %arg1[%c0_111, %c0_112, %c12, %c0_113] : memref<1x4x16x16xf32, #tpu.memory_space<vmem>>, vector<1x4x1x16xf32>
    %135 = vector.shape_cast %134 : vector<1x4x1x16xf32> to vector<4x16xf32>
    %c0_114 = arith.constant 0 : index
    %c0_115 = arith.constant 0 : index
    %c254 = arith.constant 254 : index
    %136 = vector.load %arg5[%c0_114, %c0_115, %c254] : memref<3x4x360xf32, #tpu.memory_space<vmem>>, vector<1x4x16xf32>
    %137 = vector.shape_cast %136 : vector<1x4x16xf32> to vector<4x16xf32>
    %138 = vector.shape_cast %135 : vector<4x16xf32> to vector<1x4x16xf32>
    tpu.vector_store %arg5[%c0_114, %c0_115, %c254], %138 {strides = array<i32>} : memref<3x4x360xf32, #tpu.memory_space<vmem>>, vector<1x4x16xf32>,
    %c1_116 = arith.constant 1 : index
    %c0_117 = arith.constant 0 : index
    %c253 = arith.constant 253 : index
    %139 = vector.load %arg5[%c1_116, %c0_117, %c253] : memref<3x4x360xf32, #tpu.memory_space<vmem>>, vector<1x4x16xf32>
    %140 = vector.shape_cast %139 : vector<1x4x16xf32> to vector<4x16xf32>
    %141 = vector.shape_cast %135 : vector<4x16xf32> to vector<1x4x16xf32>
    tpu.vector_store %arg5[%c1_116, %c0_117, %c253], %141 {strides = array<i32>} : memref<3x4x360xf32, #tpu.memory_space<vmem>>, vector<1x4x16xf32>,
    %c2_118 = arith.constant 2 : index
    %c0_119 = arith.constant 0 : index
    %c252 = arith.constant 252 : index
    %142 = vector.load %arg5[%c2_118, %c0_119, %c252] : memref<3x4x360xf32, #tpu.memory_space<vmem>>, vector<1x4x16xf32>
    %143 = vector.shape_cast %142 : vector<1x4x16xf32> to vector<4x16xf32>
    %144 = vector.shape_cast %135 : vector<4x16xf32> to vector<1x4x16xf32>
    tpu.vector_store %arg5[%c2_118, %c0_119, %c252], %144 {strides = array<i32>} : memref<3x4x360xf32, #tpu.memory_space<vmem>>, vector<1x4x16xf32>,
    %c0_120 = arith.constant 0 : index
    %c0_121 = arith.constant 0 : index
    %c13 = arith.constant 13 : index
    %c0_122 = arith.constant 0 : index
    %145 = vector.load %arg1[%c0_120, %c0_121, %c13, %c0_122] : memref<1x4x16x16xf32, #tpu.memory_space<vmem>>, vector<1x4x1x16xf32>
    %146 = vector.shape_cast %145 : vector<1x4x1x16xf32> to vector<4x16xf32>
    %c0_123 = arith.constant 0 : index
    %c0_124 = arith.constant 0 : index
    %c272 = arith.constant 272 : index
    %147 = vector.load %arg5[%c0_123, %c0_124, %c272] : memref<3x4x360xf32, #tpu.memory_space<vmem>>, vector<1x4x16xf32>
    %148 = vector.shape_cast %147 : vector<1x4x16xf32> to vector<4x16xf32>
    %149 = vector.shape_cast %146 : vector<4x16xf32> to vector<1x4x16xf32>
    tpu.vector_store %arg5[%c0_123, %c0_124, %c272], %149 {strides = array<i32>} : memref<3x4x360xf32, #tpu.memory_space<vmem>>, vector<1x4x16xf32>,
    %c1_125 = arith.constant 1 : index
    %c0_126 = arith.constant 0 : index
    %c271 = arith.constant 271 : index
    %150 = vector.load %arg5[%c1_125, %c0_126, %c271] : memref<3x4x360xf32, #tpu.memory_space<vmem>>, vector<1x4x16xf32>
    %151 = vector.shape_cast %150 : vector<1x4x16xf32> to vector<4x16xf32>
    %152 = vector.shape_cast %146 : vector<4x16xf32> to vector<1x4x16xf32>
    tpu.vector_store %arg5[%c1_125, %c0_126, %c271], %152 {strides = array<i32>} : memref<3x4x360xf32, #tpu.memory_space<vmem>>, vector<1x4x16xf32>,
    %c2_127 = arith.constant 2 : index
    %c0_128 = arith.constant 0 : index
    %c270 = arith.constant 270 : index
    %153 = vector.load %arg5[%c2_127, %c0_128, %c270] : memref<3x4x360xf32, #tpu.memory_space<vmem>>, vector<1x4x16xf32>
    %154 = vector.shape_cast %153 : vector<1x4x16xf32> to vector<4x16xf32>
    %155 = vector.shape_cast %146 : vector<4x16xf32> to vector<1x4x16xf32>
    tpu.vector_store %arg5[%c2_127, %c0_128, %c270], %155 {strides = array<i32>} : memref<3x4x360xf32, #tpu.memory_space<vmem>>, vector<1x4x16xf32>,
    %c0_129 = arith.constant 0 : index
    %c0_130 = arith.constant 0 : index
    %c14 = arith.constant 14 : index
    %c0_131 = arith.constant 0 : index
    %156 = vector.load %arg1[%c0_129, %c0_130, %c14, %c0_131] : memref<1x4x16x16xf32, #tpu.memory_space<vmem>>, vector<1x4x1x16xf32>
    %157 = vector.shape_cast %156 : vector<1x4x1x16xf32> to vector<4x16xf32>
    %c0_132 = arith.constant 0 : index
    %c0_133 = arith.constant 0 : index
    %c290 = arith.constant 290 : index
    %158 = vector.load %arg5[%c0_132, %c0_133, %c290] : memref<3x4x360xf32, #tpu.memory_space<vmem>>, vector<1x4x16xf32>
    %159 = vector.shape_cast %158 : vector<1x4x16xf32> to vector<4x16xf32>
    %160 = vector.shape_cast %157 : vector<4x16xf32> to vector<1x4x16xf32>
    tpu.vector_store %arg5[%c0_132, %c0_133, %c290], %160 {strides = array<i32>} : memref<3x4x360xf32, #tpu.memory_space<vmem>>, vector<1x4x16xf32>,
    %c1_134 = arith.constant 1 : index
    %c0_135 = arith.constant 0 : index
    %c289 = arith.constant 289 : index
    %161 = vector.load %arg5[%c1_134, %c0_135, %c289] : memref<3x4x360xf32, #tpu.memory_space<vmem>>, vector<1x4x16xf32>
    %162 = vector.shape_cast %161 : vector<1x4x16xf32> to vector<4x16xf32>
    %163 = vector.shape_cast %157 : vector<4x16xf32> to vector<1x4x16xf32>
    tpu.vector_store %arg5[%c1_134, %c0_135, %c289], %163 {strides = array<i32>} : memref<3x4x360xf32, #tpu.memory_space<vmem>>, vector<1x4x16xf32>,
    %c2_136 = arith.constant 2 : index
    %c0_137 = arith.constant 0 : index
    %c288 = arith.constant 288 : index
    %164 = vector.load %arg5[%c2_136, %c0_137, %c288] : memref<3x4x360xf32, #tpu.memory_space<vmem>>, vector<1x4x16xf32>
    %165 = vector.shape_cast %164 : vector<1x4x16xf32> to vector<4x16xf32>
    %166 = vector.shape_cast %157 : vector<4x16xf32> to vector<1x4x16xf32>
    tpu.vector_store %arg5[%c2_136, %c0_137, %c288], %166 {strides = array<i32>} : memref<3x4x360xf32, #tpu.memory_space<vmem>>, vector<1x4x16xf32>,
    %c0_138 = arith.constant 0 : index
    %c0_139 = arith.constant 0 : index
    %c15 = arith.constant 15 : index
    %c0_140 = arith.constant 0 : index
    %167 = vector.load %arg1[%c0_138, %c0_139, %c15, %c0_140] : memref<1x4x16x16xf32, #tpu.memory_space<vmem>>, vector<1x4x1x16xf32>
    %168 = vector.shape_cast %167 : vector<1x4x1x16xf32> to vector<4x16xf32>
    %c0_141 = arith.constant 0 : index
    %c0_142 = arith.constant 0 : index
    %c308 = arith.constant 308 : index
    %169 = vector.load %arg5[%c0_141, %c0_142, %c308] : memref<3x4x360xf32, #tpu.memory_space<vmem>>, vector<1x4x16xf32>
    %170 = vector.shape_cast %169 : vector<1x4x16xf32> to vector<4x16xf32>
    %171 = vector.shape_cast %168 : vector<4x16xf32> to vector<1x4x16xf32>
    tpu.vector_store %arg5[%c0_141, %c0_142, %c308], %171 {strides = array<i32>} : memref<3x4x360xf32, #tpu.memory_space<vmem>>, vector<1x4x16xf32>,
    %c1_143 = arith.constant 1 : index
    %c0_144 = arith.constant 0 : index
    %c307 = arith.constant 307 : index
    %172 = vector.load %arg5[%c1_143, %c0_144, %c307] : memref<3x4x360xf32, #tpu.memory_space<vmem>>, vector<1x4x16xf32>
    %173 = vector.shape_cast %172 : vector<1x4x16xf32> to vector<4x16xf32>
    %174 = vector.shape_cast %168 : vector<4x16xf32> to vector<1x4x16xf32>
    tpu.vector_store %arg5[%c1_143, %c0_144, %c307], %174 {strides = array<i32>} : memref<3x4x360xf32, #tpu.memory_space<vmem>>, vector<1x4x16xf32>,
    %c2_145 = arith.constant 2 : index
    %c0_146 = arith.constant 0 : index
    %c306 = arith.constant 306 : index
    %175 = vector.load %arg5[%c2_145, %c0_146, %c306] : memref<3x4x360xf32, #tpu.memory_space<vmem>>, vector<1x4x16xf32>
    %176 = vector.shape_cast %175 : vector<1x4x16xf32> to vector<4x16xf32>
    %177 = vector.shape_cast %168 : vector<4x16xf32> to vector<1x4x16xf32>
    tpu.vector_store %arg5[%c2_145, %c0_146, %c306], %177 {strides = array<i32>} : memref<3x4x360xf32, #tpu.memory_space<vmem>>, vector<1x4x16xf32>,
    %c0_147 = arith.constant 0 : index
    %c0_148 = arith.constant 0 : index
    %c0_149 = arith.constant 0 : index
    %178 = vector.load %arg5[%c0_147, %c0_148, %c0_149] : memref<3x4x360xf32, #tpu.memory_space<vmem>>, vector<1x1x324xf32>
    %179 = vector.shape_cast %178 : vector<1x1x324xf32> to vector<324xf32>
    %c0_150 = arith.constant 0 : index
    %180 = memref.load %arg2[%c0_150] : memref<144xf32, #tpu.memory_space<smem>>
    %181 = vector.broadcast %180 : f32 to vector<324xf32>
    %182 = arith.mulf %181, %179 : vector<324xf32>
    %c1_151 = arith.constant 1 : index
    %c0_152 = arith.constant 0 : index
    %c0_153 = arith.constant 0 : index
    %183 = vector.load %arg5[%c1_151, %c0_152, %c0_153] : memref<3x4x360xf32, #tpu.memory_space<vmem>>, vector<1x1x324xf32>
    %184 = vector.shape_cast %183 : vector<1x1x324xf32> to vector<324xf32>
    %c1_154 = arith.constant 1 : index
    %185 = memref.load %arg2[%c1_154] : memref<144xf32, #tpu.memory_space<smem>>
    %186 = vector.broadcast %185 : f32 to vector<324xf32>
    %187 = arith.mulf %186, %184 : vector<324xf32>
    %188 = arith.addf %182, %187 : vector<324xf32>
    %c2_155 = arith.constant 2 : index
    %c0_156 = arith.constant 0 : index
    %c0_157 = arith.constant 0 : index
    %189 = vector.load %arg5[%c2_155, %c0_156, %c0_157] : memref<3x4x360xf32, #tpu.memory_space<vmem>>, vector<1x1x324xf32>
    %190 = vector.shape_cast %189 : vector<1x1x324xf32> to vector<324xf32>
    %c2_158 = arith.constant 2 : index
    %191 = memref.load %arg2[%c2_158] : memref<144xf32, #tpu.memory_space<smem>>
    %192 = vector.broadcast %191 : f32 to vector<324xf32>
    %193 = arith.mulf %192, %190 : vector<324xf32>
    %194 = arith.addf %188, %193 : vector<324xf32>
    %c0_159 = arith.constant 0 : index
    %c0_160 = arith.constant 0 : index
    %c18 = arith.constant 18 : index
    %195 = vector.load %arg5[%c0_159, %c0_160, %c18] : memref<3x4x360xf32, #tpu.memory_space<vmem>>, vector<1x1x324xf32>
    %196 = vector.shape_cast %195 : vector<1x1x324xf32> to vector<324xf32>
    %c3_161 = arith.constant 3 : index
    %197 = memref.load %arg2[%c3_161] : memref<144xf32, #tpu.memory_space<smem>>
    %198 = vector.broadcast %197 : f32 to vector<324xf32>
    %199 = arith.mulf %198, %196 : vector<324xf32>
    %200 = arith.addf %194, %199 : vector<324xf32>
    %c1_162 = arith.constant 1 : index
    %c0_163 = arith.constant 0 : index
    %c18_164 = arith.constant 18 : index
    %201 = vector.load %arg5[%c1_162, %c0_163, %c18_164] : memref<3x4x360xf32, #tpu.memory_space<vmem>>, vector<1x1x324xf32>
    %202 = vector.shape_cast %201 : vector<1x1x324xf32> to vector<324xf32>
    %c4_165 = arith.constant 4 : index
    %203 = memref.load %arg2[%c4_165] : memref<144xf32, #tpu.memory_space<smem>>
    %204 = vector.broadcast %203 : f32 to vector<324xf32>
    %205 = arith.mulf %204, %202 : vector<324xf32>
    %206 = arith.addf %200, %205 : vector<324xf32>
    %c2_166 = arith.constant 2 : index
    %c0_167 = arith.constant 0 : index
    %c18_168 = arith.constant 18 : index
    %207 = vector.load %arg5[%c2_166, %c0_167, %c18_168] : memref<3x4x360xf32, #tpu.memory_space<vmem>>, vector<1x1x324xf32>
    %208 = vector.shape_cast %207 : vector<1x1x324xf32> to vector<324xf32>
    %c5_169 = arith.constant 5 : index
    %209 = memref.load %arg2[%c5_169] : memref<144xf32, #tpu.memory_space<smem>>
    %210 = vector.broadcast %209 : f32 to vector<324xf32>
    %211 = arith.mulf %210, %208 : vector<324xf32>
    %212 = arith.addf %206, %211 : vector<324xf32>
    %c0_170 = arith.constant 0 : index
    %c0_171 = arith.constant 0 : index
    %c36_172 = arith.constant 36 : index
    %213 = vector.load %arg5[%c0_170, %c0_171, %c36_172] : memref<3x4x360xf32, #tpu.memory_space<vmem>>, vector<1x1x324xf32>
    %214 = vector.shape_cast %213 : vector<1x1x324xf32> to vector<324xf32>
    %c6_173 = arith.constant 6 : index
    %215 = memref.load %arg2[%c6_173] : memref<144xf32, #tpu.memory_space<smem>>
    %216 = vector.broadcast %215 : f32 to vector<324xf32>
    %217 = arith.mulf %216, %214 : vector<324xf32>
    %218 = arith.addf %212, %217 : vector<324xf32>
    %c1_174 = arith.constant 1 : index
    %c0_175 = arith.constant 0 : index
    %c36_176 = arith.constant 36 : index
    %219 = vector.load %arg5[%c1_174, %c0_175, %c36_176] : memref<3x4x360xf32, #tpu.memory_space<vmem>>, vector<1x1x324xf32>
    %220 = vector.shape_cast %219 : vector<1x1x324xf32> to vector<324xf32>
    %c7_177 = arith.constant 7 : index
    %221 = memref.load %arg2[%c7_177] : memref<144xf32, #tpu.memory_space<smem>>
    %222 = vector.broadcast %221 : f32 to vector<324xf32>
    %223 = arith.mulf %222, %220 : vector<324xf32>
    %224 = arith.addf %218, %223 : vector<324xf32>
    %c2_178 = arith.constant 2 : index
    %c0_179 = arith.constant 0 : index
    %c36_180 = arith.constant 36 : index
    %225 = vector.load %arg5[%c2_178, %c0_179, %c36_180] : memref<3x4x360xf32, #tpu.memory_space<vmem>>, vector<1x1x324xf32>
    %226 = vector.shape_cast %225 : vector<1x1x324xf32> to vector<324xf32>
    %c8_181 = arith.constant 8 : index
    %227 = memref.load %arg2[%c8_181] : memref<144xf32, #tpu.memory_space<smem>>
    %228 = vector.broadcast %227 : f32 to vector<324xf32>
    %229 = arith.mulf %228, %226 : vector<324xf32>
    %230 = arith.addf %224, %229 : vector<324xf32>
    %c0_182 = arith.constant 0 : index
    %c1_183 = arith.constant 1 : index
    %c0_184 = arith.constant 0 : index
    %231 = vector.load %arg5[%c0_182, %c1_183, %c0_184] : memref<3x4x360xf32, #tpu.memory_space<vmem>>, vector<1x1x324xf32>
    %232 = vector.shape_cast %231 : vector<1x1x324xf32> to vector<324xf32>
    %c9_185 = arith.constant 9 : index
    %233 = memref.load %arg2[%c9_185] : memref<144xf32, #tpu.memory_space<smem>>
    %234 = vector.broadcast %233 : f32 to vector<324xf32>
    %235 = arith.mulf %234, %232 : vector<324xf32>
    %236 = arith.addf %230, %235 : vector<324xf32>
    %c1_186 = arith.constant 1 : index
    %c1_187 = arith.constant 1 : index
    %c0_188 = arith.constant 0 : index
    %237 = vector.load %arg5[%c1_186, %c1_187, %c0_188] : memref<3x4x360xf32, #tpu.memory_space<vmem>>, vector<1x1x324xf32>
    %238 = vector.shape_cast %237 : vector<1x1x324xf32> to vector<324xf32>
    %c10_189 = arith.constant 10 : index
    %239 = memref.load %arg2[%c10_189] : memref<144xf32, #tpu.memory_space<smem>>
    %240 = vector.broadcast %239 : f32 to vector<324xf32>
    %241 = arith.mulf %240, %238 : vector<324xf32>
    %242 = arith.addf %236, %241 : vector<324xf32>
    %c2_190 = arith.constant 2 : index
    %c1_191 = arith.constant 1 : index
    %c0_192 = arith.constant 0 : index
    %243 = vector.load %arg5[%c2_190, %c1_191, %c0_192] : memref<3x4x360xf32, #tpu.memory_space<vmem>>, vector<1x1x324xf32>
    %244 = vector.shape_cast %243 : vector<1x1x324xf32> to vector<324xf32>
    %c11_193 = arith.constant 11 : index
    %245 = memref.load %arg2[%c11_193] : memref<144xf32, #tpu.memory_space<smem>>
    %246 = vector.broadcast %245 : f32 to vector<324xf32>
    %247 = arith.mulf %246, %244 : vector<324xf32>
    %248 = arith.addf %242, %247 : vector<324xf32>
    %c0_194 = arith.constant 0 : index
    %c1_195 = arith.constant 1 : index
    %c18_196 = arith.constant 18 : index
    %249 = vector.load %arg5[%c0_194, %c1_195, %c18_196] : memref<3x4x360xf32, #tpu.memory_space<vmem>>, vector<1x1x324xf32>
    %250 = vector.shape_cast %249 : vector<1x1x324xf32> to vector<324xf32>
    %c12_197 = arith.constant 12 : index
    %251 = memref.load %arg2[%c12_197] : memref<144xf32, #tpu.memory_space<smem>>
    %252 = vector.broadcast %251 : f32 to vector<324xf32>
    %253 = arith.mulf %252, %250 : vector<324xf32>
    %254 = arith.addf %248, %253 : vector<324xf32>
    %c1_198 = arith.constant 1 : index
    %c1_199 = arith.constant 1 : index
    %c18_200 = arith.constant 18 : index
    %255 = vector.load %arg5[%c1_198, %c1_199, %c18_200] : memref<3x4x360xf32, #tpu.memory_space<vmem>>, vector<1x1x324xf32>
    %256 = vector.shape_cast %255 : vector<1x1x324xf32> to vector<324xf32>
    %c13_201 = arith.constant 13 : index
    %257 = memref.load %arg2[%c13_201] : memref<144xf32, #tpu.memory_space<smem>>
    %258 = vector.broadcast %257 : f32 to vector<324xf32>
    %259 = arith.mulf %258, %256 : vector<324xf32>
    %260 = arith.addf %254, %259 : vector<324xf32>
    %c2_202 = arith.constant 2 : index
    %c1_203 = arith.constant 1 : index
    %c18_204 = arith.constant 18 : index
    %261 = vector.load %arg5[%c2_202, %c1_203, %c18_204] : memref<3x4x360xf32, #tpu.memory_space<vmem>>, vector<1x1x324xf32>
    %262 = vector.shape_cast %261 : vector<1x1x324xf32> to vector<324xf32>
    %c14_205 = arith.constant 14 : index
    %263 = memref.load %arg2[%c14_205] : memref<144xf32, #tpu.memory_space<smem>>
    %264 = vector.broadcast %263 : f32 to vector<324xf32>
    %265 = arith.mulf %264, %262 : vector<324xf32>
    %266 = arith.addf %260, %265 : vector<324xf32>
    %c0_206 = arith.constant 0 : index
    %c1_207 = arith.constant 1 : index
    %c36_208 = arith.constant 36 : index
    %267 = vector.load %arg5[%c0_206, %c1_207, %c36_208] : memref<3x4x360xf32, #tpu.memory_space<vmem>>, vector<1x1x324xf32>
    %268 = vector.shape_cast %267 : vector<1x1x324xf32> to vector<324xf32>
    %c15_209 = arith.constant 15 : index
    %269 = memref.load %arg2[%c15_209] : memref<144xf32, #tpu.memory_space<smem>>
    %270 = vector.broadcast %269 : f32 to vector<324xf32>
    %271 = arith.mulf %270, %268 : vector<324xf32>
    %272 = arith.addf %266, %271 : vector<324xf32>
    %c1_210 = arith.constant 1 : index
    %c1_211 = arith.constant 1 : index
    %c36_212 = arith.constant 36 : index
    %273 = vector.load %arg5[%c1_210, %c1_211, %c36_212] : memref<3x4x360xf32, #tpu.memory_space<vmem>>, vector<1x1x324xf32>
    %274 = vector.shape_cast %273 : vector<1x1x324xf32> to vector<324xf32>
    %c16 = arith.constant 16 : index
    %275 = memref.load %arg2[%c16] : memref<144xf32, #tpu.memory_space<smem>>
    %276 = vector.broadcast %275 : f32 to vector<324xf32>
    %277 = arith.mulf %276, %274 : vector<324xf32>
    %278 = arith.addf %272, %277 : vector<324xf32>
    %c2_213 = arith.constant 2 : index
    %c1_214 = arith.constant 1 : index
    %c36_215 = arith.constant 36 : index
    %279 = vector.load %arg5[%c2_213, %c1_214, %c36_215] : memref<3x4x360xf32, #tpu.memory_space<vmem>>, vector<1x1x324xf32>
    %280 = vector.shape_cast %279 : vector<1x1x324xf32> to vector<324xf32>
    %c17 = arith.constant 17 : index
    %281 = memref.load %arg2[%c17] : memref<144xf32, #tpu.memory_space<smem>>
    %282 = vector.broadcast %281 : f32 to vector<324xf32>
    %283 = arith.mulf %282, %280 : vector<324xf32>
    %284 = arith.addf %278, %283 : vector<324xf32>
    %c0_216 = arith.constant 0 : index
    %c2_217 = arith.constant 2 : index
    %c0_218 = arith.constant 0 : index
    %285 = vector.load %arg5[%c0_216, %c2_217, %c0_218] : memref<3x4x360xf32, #tpu.memory_space<vmem>>, vector<1x1x324xf32>
    %286 = vector.shape_cast %285 : vector<1x1x324xf32> to vector<324xf32>
    %c18_219 = arith.constant 18 : index
    %287 = memref.load %arg2[%c18_219] : memref<144xf32, #tpu.memory_space<smem>>
    %288 = vector.broadcast %287 : f32 to vector<324xf32>
    %289 = arith.mulf %288, %286 : vector<324xf32>
    %290 = arith.addf %284, %289 : vector<324xf32>
    %c1_220 = arith.constant 1 : index
    %c2_221 = arith.constant 2 : index
    %c0_222 = arith.constant 0 : index
    %291 = vector.load %arg5[%c1_220, %c2_221, %c0_222] : memref<3x4x360xf32, #tpu.memory_space<vmem>>, vector<1x1x324xf32>
    %292 = vector.shape_cast %291 : vector<1x1x324xf32> to vector<324xf32>
    %c19 = arith.constant 19 : index
    %293 = memref.load %arg2[%c19] : memref<144xf32, #tpu.memory_space<smem>>
    %294 = vector.broadcast %293 : f32 to vector<324xf32>
    %295 = arith.mulf %294, %292 : vector<324xf32>
    %296 = arith.addf %290, %295 : vector<324xf32>
    %c2_223 = arith.constant 2 : index
    %c2_224 = arith.constant 2 : index
    %c0_225 = arith.constant 0 : index
    %297 = vector.load %arg5[%c2_223, %c2_224, %c0_225] : memref<3x4x360xf32, #tpu.memory_space<vmem>>, vector<1x1x324xf32>
    %298 = vector.shape_cast %297 : vector<1x1x324xf32> to vector<324xf32>
    %c20 = arith.constant 20 : index
    %299 = memref.load %arg2[%c20] : memref<144xf32, #tpu.memory_space<smem>>
    %300 = vector.broadcast %299 : f32 to vector<324xf32>
    %301 = arith.mulf %300, %298 : vector<324xf32>
    %302 = arith.addf %296, %301 : vector<324xf32>
    %c0_226 = arith.constant 0 : index
    %c2_227 = arith.constant 2 : index
    %c18_228 = arith.constant 18 : index
    %303 = vector.load %arg5[%c0_226, %c2_227, %c18_228] : memref<3x4x360xf32, #tpu.memory_space<vmem>>, vector<1x1x324xf32>
    %304 = vector.shape_cast %303 : vector<1x1x324xf32> to vector<324xf32>
    %c21 = arith.constant 21 : index
    %305 = memref.load %arg2[%c21] : memref<144xf32, #tpu.memory_space<smem>>
    %306 = vector.broadcast %305 : f32 to vector<324xf32>
    %307 = arith.mulf %306, %304 : vector<324xf32>
    %308 = arith.addf %302, %307 : vector<324xf32>
    %c1_229 = arith.constant 1 : index
    %c2_230 = arith.constant 2 : index
    %c18_231 = arith.constant 18 : index
    %309 = vector.load %arg5[%c1_229, %c2_230, %c18_231] : memref<3x4x360xf32, #tpu.memory_space<vmem>>, vector<1x1x324xf32>
    %310 = vector.shape_cast %309 : vector<1x1x324xf32> to vector<324xf32>
    %c22 = arith.constant 22 : index
    %311 = memref.load %arg2[%c22] : memref<144xf32, #tpu.memory_space<smem>>
    %312 = vector.broadcast %311 : f32 to vector<324xf32>
    %313 = arith.mulf %312, %310 : vector<324xf32>
    %314 = arith.addf %308, %313 : vector<324xf32>
    %c2_232 = arith.constant 2 : index
    %c2_233 = arith.constant 2 : index
    %c18_234 = arith.constant 18 : index
    %315 = vector.load %arg5[%c2_232, %c2_233, %c18_234] : memref<3x4x360xf32, #tpu.memory_space<vmem>>, vector<1x1x324xf32>
    %316 = vector.shape_cast %315 : vector<1x1x324xf32> to vector<324xf32>
    %c23 = arith.constant 23 : index
    %317 = memref.load %arg2[%c23] : memref<144xf32, #tpu.memory_space<smem>>
    %318 = vector.broadcast %317 : f32 to vector<324xf32>
    %319 = arith.mulf %318, %316 : vector<324xf32>
    %320 = arith.addf %314, %319 : vector<324xf32>
    %c0_235 = arith.constant 0 : index
    %c2_236 = arith.constant 2 : index
    %c36_237 = arith.constant 36 : index
    %321 = vector.load %arg5[%c0_235, %c2_236, %c36_237] : memref<3x4x360xf32, #tpu.memory_space<vmem>>, vector<1x1x324xf32>
    %322 = vector.shape_cast %321 : vector<1x1x324xf32> to vector<324xf32>
    %c24 = arith.constant 24 : index
    %323 = memref.load %arg2[%c24] : memref<144xf32, #tpu.memory_space<smem>>
    %324 = vector.broadcast %323 : f32 to vector<324xf32>
    %325 = arith.mulf %324, %322 : vector<324xf32>
    %326 = arith.addf %320, %325 : vector<324xf32>
    %c1_238 = arith.constant 1 : index
    %c2_239 = arith.constant 2 : index
    %c36_240 = arith.constant 36 : index
    %327 = vector.load %arg5[%c1_238, %c2_239, %c36_240] : memref<3x4x360xf32, #tpu.memory_space<vmem>>, vector<1x1x324xf32>
    %328 = vector.shape_cast %327 : vector<1x1x324xf32> to vector<324xf32>
    %c25 = arith.constant 25 : index
    %329 = memref.load %arg2[%c25] : memref<144xf32, #tpu.memory_space<smem>>
    %330 = vector.broadcast %329 : f32 to vector<324xf32>
    %331 = arith.mulf %330, %328 : vector<324xf32>
    %332 = arith.addf %326, %331 : vector<324xf32>
    %c2_241 = arith.constant 2 : index
    %c2_242 = arith.constant 2 : index
    %c36_243 = arith.constant 36 : index
    %333 = vector.load %arg5[%c2_241, %c2_242, %c36_243] : memref<3x4x360xf32, #tpu.memory_space<vmem>>, vector<1x1x324xf32>
    %334 = vector.shape_cast %333 : vector<1x1x324xf32> to vector<324xf32>
    %c26 = arith.constant 26 : index
    %335 = memref.load %arg2[%c26] : memref<144xf32, #tpu.memory_space<smem>>
    %336 = vector.broadcast %335 : f32 to vector<324xf32>
    %337 = arith.mulf %336, %334 : vector<324xf32>
    %338 = arith.addf %332, %337 : vector<324xf32>
    %c0_244 = arith.constant 0 : index
    %c3_245 = arith.constant 3 : index
    %c0_246 = arith.constant 0 : index
    %339 = vector.load %arg5[%c0_244, %c3_245, %c0_246] : memref<3x4x360xf32, #tpu.memory_space<vmem>>, vector<1x1x324xf32>
    %340 = vector.shape_cast %339 : vector<1x1x324xf32> to vector<324xf32>
    %c27 = arith.constant 27 : index
    %341 = memref.load %arg2[%c27] : memref<144xf32, #tpu.memory_space<smem>>
    %342 = vector.broadcast %341 : f32 to vector<324xf32>
    %343 = arith.mulf %342, %340 : vector<324xf32>
    %344 = arith.addf %338, %343 : vector<324xf32>
    %c1_247 = arith.constant 1 : index
    %c3_248 = arith.constant 3 : index
    %c0_249 = arith.constant 0 : index
    %345 = vector.load %arg5[%c1_247, %c3_248, %c0_249] : memref<3x4x360xf32, #tpu.memory_space<vmem>>, vector<1x1x324xf32>
    %346 = vector.shape_cast %345 : vector<1x1x324xf32> to vector<324xf32>
    %c28 = arith.constant 28 : index
    %347 = memref.load %arg2[%c28] : memref<144xf32, #tpu.memory_space<smem>>
    %348 = vector.broadcast %347 : f32 to vector<324xf32>
    %349 = arith.mulf %348, %346 : vector<324xf32>
    %350 = arith.addf %344, %349 : vector<324xf32>
    %c2_250 = arith.constant 2 : index
    %c3_251 = arith.constant 3 : index
    %c0_252 = arith.constant 0 : index
    %351 = vector.load %arg5[%c2_250, %c3_251, %c0_252] : memref<3x4x360xf32, #tpu.memory_space<vmem>>, vector<1x1x324xf32>
    %352 = vector.shape_cast %351 : vector<1x1x324xf32> to vector<324xf32>
    %c29 = arith.constant 29 : index
    %353 = memref.load %arg2[%c29] : memref<144xf32, #tpu.memory_space<smem>>
    %354 = vector.broadcast %353 : f32 to vector<324xf32>
    %355 = arith.mulf %354, %352 : vector<324xf32>
    %356 = arith.addf %350, %355 : vector<324xf32>
    %c0_253 = arith.constant 0 : index
    %c3_254 = arith.constant 3 : index
    %c18_255 = arith.constant 18 : index
    %357 = vector.load %arg5[%c0_253, %c3_254, %c18_255] : memref<3x4x360xf32, #tpu.memory_space<vmem>>, vector<1x1x324xf32>
    %358 = vector.shape_cast %357 : vector<1x1x324xf32> to vector<324xf32>
    %c30 = arith.constant 30 : index
    %359 = memref.load %arg2[%c30] : memref<144xf32, #tpu.memory_space<smem>>
    %360 = vector.broadcast %359 : f32 to vector<324xf32>
    %361 = arith.mulf %360, %358 : vector<324xf32>
    %362 = arith.addf %356, %361 : vector<324xf32>
    %c1_256 = arith.constant 1 : index
    %c3_257 = arith.constant 3 : index
    %c18_258 = arith.constant 18 : index
    %363 = vector.load %arg5[%c1_256, %c3_257, %c18_258] : memref<3x4x360xf32, #tpu.memory_space<vmem>>, vector<1x1x324xf32>
    %364 = vector.shape_cast %363 : vector<1x1x324xf32> to vector<324xf32>
    %c31 = arith.constant 31 : index
    %365 = memref.load %arg2[%c31] : memref<144xf32, #tpu.memory_space<smem>>
    %366 = vector.broadcast %365 : f32 to vector<324xf32>
    %367 = arith.mulf %366, %364 : vector<324xf32>
    %368 = arith.addf %362, %367 : vector<324xf32>
    %c2_259 = arith.constant 2 : index
    %c3_260 = arith.constant 3 : index
    %c18_261 = arith.constant 18 : index
    %369 = vector.load %arg5[%c2_259, %c3_260, %c18_261] : memref<3x4x360xf32, #tpu.memory_space<vmem>>, vector<1x1x324xf32>
    %370 = vector.shape_cast %369 : vector<1x1x324xf32> to vector<324xf32>
    %c32 = arith.constant 32 : index
    %371 = memref.load %arg2[%c32] : memref<144xf32, #tpu.memory_space<smem>>
    %372 = vector.broadcast %371 : f32 to vector<324xf32>
    %373 = arith.mulf %372, %370 : vector<324xf32>
    %374 = arith.addf %368, %373 : vector<324xf32>
    %c0_262 = arith.constant 0 : index
    %c3_263 = arith.constant 3 : index
    %c36_264 = arith.constant 36 : index
    %375 = vector.load %arg5[%c0_262, %c3_263, %c36_264] : memref<3x4x360xf32, #tpu.memory_space<vmem>>, vector<1x1x324xf32>
    %376 = vector.shape_cast %375 : vector<1x1x324xf32> to vector<324xf32>
    %c33 = arith.constant 33 : index
    %377 = memref.load %arg2[%c33] : memref<144xf32, #tpu.memory_space<smem>>
    %378 = vector.broadcast %377 : f32 to vector<324xf32>
    %379 = arith.mulf %378, %376 : vector<324xf32>
    %380 = arith.addf %374, %379 : vector<324xf32>
    %c1_265 = arith.constant 1 : index
    %c3_266 = arith.constant 3 : index
    %c36_267 = arith.constant 36 : index
    %381 = vector.load %arg5[%c1_265, %c3_266, %c36_267] : memref<3x4x360xf32, #tpu.memory_space<vmem>>, vector<1x1x324xf32>
    %382 = vector.shape_cast %381 : vector<1x1x324xf32> to vector<324xf32>
    %c34 = arith.constant 34 : index
    %383 = memref.load %arg2[%c34] : memref<144xf32, #tpu.memory_space<smem>>
    %384 = vector.broadcast %383 : f32 to vector<324xf32>
    %385 = arith.mulf %384, %382 : vector<324xf32>
    %386 = arith.addf %380, %385 : vector<324xf32>
    %c2_268 = arith.constant 2 : index
    %c3_269 = arith.constant 3 : index
    %c36_270 = arith.constant 36 : index
    %387 = vector.load %arg5[%c2_268, %c3_269, %c36_270] : memref<3x4x360xf32, #tpu.memory_space<vmem>>, vector<1x1x324xf32>
    %388 = vector.shape_cast %387 : vector<1x1x324xf32> to vector<324xf32>
    %c35 = arith.constant 35 : index
    %389 = memref.load %arg2[%c35] : memref<144xf32, #tpu.memory_space<smem>>
    %390 = vector.broadcast %389 : f32 to vector<324xf32>
    %391 = arith.mulf %390, %388 : vector<324xf32>
    %392 = arith.addf %386, %391 : vector<324xf32>
    %c0_271 = arith.constant 0 : index
    %c0_272 = arith.constant 0 : index
    %c0_273 = arith.constant 0 : index
    %393 = vector.load %arg3[%c0_271, %c0_272, %c0_273] : memref<1x4x324xf32, #tpu.memory_space<vmem>>, vector<1x1x324xf32>
    %394 = vector.shape_cast %393 : vector<1x1x324xf32> to vector<324xf32>
    %395 = vector.shape_cast %392 : vector<324xf32> to vector<1x1x324xf32>
    tpu.vector_store %arg3[%c0_271, %c0_272, %c0_273], %395 {strides = array<i32>} : memref<1x4x324xf32, #tpu.memory_space<vmem>>, vector<1x1x324xf32>,
    %c0_274 = arith.constant 0 : index
    %c0_275 = arith.constant 0 : index
    %c0_276 = arith.constant 0 : index
    %396 = vector.load %arg5[%c0_274, %c0_275, %c0_276] : memref<3x4x360xf32, #tpu.memory_space<vmem>>, vector<1x1x324xf32>
    %397 = vector.shape_cast %396 : vector<1x1x324xf32> to vector<324xf32>
    %c36_277 = arith.constant 36 : index
    %398 = memref.load %arg2[%c36_277] : memref<144xf32, #tpu.memory_space<smem>>
    %399 = vector.broadcast %398 : f32 to vector<324xf32>
    %400 = arith.mulf %399, %397 : vector<324xf32>
    %c1_278 = arith.constant 1 : index
    %c0_279 = arith.constant 0 : index
    %c0_280 = arith.constant 0 : index
    %401 = vector.load %arg5[%c1_278, %c0_279, %c0_280] : memref<3x4x360xf32, #tpu.memory_space<vmem>>, vector<1x1x324xf32>
    %402 = vector.shape_cast %401 : vector<1x1x324xf32> to vector<324xf32>
    %c37_281 = arith.constant 37 : index
    %403 = memref.load %arg2[%c37_281] : memref<144xf32, #tpu.memory_space<smem>>
    %404 = vector.broadcast %403 : f32 to vector<324xf32>
    %405 = arith.mulf %404, %402 : vector<324xf32>
    %406 = arith.addf %400, %405 : vector<324xf32>
    %c2_282 = arith.constant 2 : index
    %c0_283 = arith.constant 0 : index
    %c0_284 = arith.constant 0 : index
    %407 = vector.load %arg5[%c2_282, %c0_283, %c0_284] : memref<3x4x360xf32, #tpu.memory_space<vmem>>, vector<1x1x324xf32>
    %408 = vector.shape_cast %407 : vector<1x1x324xf32> to vector<324xf32>
    %c38_285 = arith.constant 38 : index
    %409 = memref.load %arg2[%c38_285] : memref<144xf32, #tpu.memory_space<smem>>
    %410 = vector.broadcast %409 : f32 to vector<324xf32>
    %411 = arith.mulf %410, %408 : vector<324xf32>
    %412 = arith.addf %406, %411 : vector<324xf32>
    %c0_286 = arith.constant 0 : index
    %c0_287 = arith.constant 0 : index
    %c18_288 = arith.constant 18 : index
    %413 = vector.load %arg5[%c0_286, %c0_287, %c18_288] : memref<3x4x360xf32, #tpu.memory_space<vmem>>, vector<1x1x324xf32>
    %414 = vector.shape_cast %413 : vector<1x1x324xf32> to vector<324xf32>
    %c39 = arith.constant 39 : index
    %415 = memref.load %arg2[%c39] : memref<144xf32, #tpu.memory_space<smem>>
    %416 = vector.broadcast %415 : f32 to vector<324xf32>
    %417 = arith.mulf %416, %414 : vector<324xf32>
    %418 = arith.addf %412, %417 : vector<324xf32>
    %c1_289 = arith.constant 1 : index
    %c0_290 = arith.constant 0 : index
    %c18_291 = arith.constant 18 : index
    %419 = vector.load %arg5[%c1_289, %c0_290, %c18_291] : memref<3x4x360xf32, #tpu.memory_space<vmem>>, vector<1x1x324xf32>
    %420 = vector.shape_cast %419 : vector<1x1x324xf32> to vector<324xf32>
    %c40 = arith.constant 40 : index
    %421 = memref.load %arg2[%c40] : memref<144xf32, #tpu.memory_space<smem>>
    %422 = vector.broadcast %421 : f32 to vector<324xf32>
    %423 = arith.mulf %422, %420 : vector<324xf32>
    %424 = arith.addf %418, %423 : vector<324xf32>
    %c2_292 = arith.constant 2 : index
    %c0_293 = arith.constant 0 : index
    %c18_294 = arith.constant 18 : index
    %425 = vector.load %arg5[%c2_292, %c0_293, %c18_294] : memref<3x4x360xf32, #tpu.memory_space<vmem>>, vector<1x1x324xf32>
    %426 = vector.shape_cast %425 : vector<1x1x324xf32> to vector<324xf32>
    %c41 = arith.constant 41 : index
    %427 = memref.load %arg2[%c41] : memref<144xf32, #tpu.memory_space<smem>>
    %428 = vector.broadcast %427 : f32 to vector<324xf32>
    %429 = arith.mulf %428, %426 : vector<324xf32>
    %430 = arith.addf %424, %429 : vector<324xf32>
    %c0_295 = arith.constant 0 : index
    %c0_296 = arith.constant 0 : index
    %c36_297 = arith.constant 36 : index
    %431 = vector.load %arg5[%c0_295, %c0_296, %c36_297] : memref<3x4x360xf32, #tpu.memory_space<vmem>>, vector<1x1x324xf32>
    %432 = vector.shape_cast %431 : vector<1x1x324xf32> to vector<324xf32>
    %c42 = arith.constant 42 : index
    %433 = memref.load %arg2[%c42] : memref<144xf32, #tpu.memory_space<smem>>
    %434 = vector.broadcast %433 : f32 to vector<324xf32>
    %435 = arith.mulf %434, %432 : vector<324xf32>
    %436 = arith.addf %430, %435 : vector<324xf32>
    %c1_298 = arith.constant 1 : index
    %c0_299 = arith.constant 0 : index
    %c36_300 = arith.constant 36 : index
    %437 = vector.load %arg5[%c1_298, %c0_299, %c36_300] : memref<3x4x360xf32, #tpu.memory_space<vmem>>, vector<1x1x324xf32>
    %438 = vector.shape_cast %437 : vector<1x1x324xf32> to vector<324xf32>
    %c43 = arith.constant 43 : index
    %439 = memref.load %arg2[%c43] : memref<144xf32, #tpu.memory_space<smem>>
    %440 = vector.broadcast %439 : f32 to vector<324xf32>
    %441 = arith.mulf %440, %438 : vector<324xf32>
    %442 = arith.addf %436, %441 : vector<324xf32>
    %c2_301 = arith.constant 2 : index
    %c0_302 = arith.constant 0 : index
    %c36_303 = arith.constant 36 : index
    %443 = vector.load %arg5[%c2_301, %c0_302, %c36_303] : memref<3x4x360xf32, #tpu.memory_space<vmem>>, vector<1x1x324xf32>
    %444 = vector.shape_cast %443 : vector<1x1x324xf32> to vector<324xf32>
    %c44 = arith.constant 44 : index
    %445 = memref.load %arg2[%c44] : memref<144xf32, #tpu.memory_space<smem>>
    %446 = vector.broadcast %445 : f32 to vector<324xf32>
    %447 = arith.mulf %446, %444 : vector<324xf32>
    %448 = arith.addf %442, %447 : vector<324xf32>
    %c0_304 = arith.constant 0 : index
    %c1_305 = arith.constant 1 : index
    %c0_306 = arith.constant 0 : index
    %449 = vector.load %arg5[%c0_304, %c1_305, %c0_306] : memref<3x4x360xf32, #tpu.memory_space<vmem>>, vector<1x1x324xf32>
    %450 = vector.shape_cast %449 : vector<1x1x324xf32> to vector<324xf32>
    %c45 = arith.constant 45 : index
    %451 = memref.load %arg2[%c45] : memref<144xf32, #tpu.memory_space<smem>>
    %452 = vector.broadcast %451 : f32 to vector<324xf32>
    %453 = arith.mulf %452, %450 : vector<324xf32>
    %454 = arith.addf %448, %453 : vector<324xf32>
    %c1_307 = arith.constant 1 : index
    %c1_308 = arith.constant 1 : index
    %c0_309 = arith.constant 0 : index
    %455 = vector.load %arg5[%c1_307, %c1_308, %c0_309] : memref<3x4x360xf32, #tpu.memory_space<vmem>>, vector<1x1x324xf32>
    %456 = vector.shape_cast %455 : vector<1x1x324xf32> to vector<324xf32>
    %c46 = arith.constant 46 : index
    %457 = memref.load %arg2[%c46] : memref<144xf32, #tpu.memory_space<smem>>
    %458 = vector.broadcast %457 : f32 to vector<324xf32>
    %459 = arith.mulf %458, %456 : vector<324xf32>
    %460 = arith.addf %454, %459 : vector<324xf32>
    %c2_310 = arith.constant 2 : index
    %c1_311 = arith.constant 1 : index
    %c0_312 = arith.constant 0 : index
    %461 = vector.load %arg5[%c2_310, %c1_311, %c0_312] : memref<3x4x360xf32, #tpu.memory_space<vmem>>, vector<1x1x324xf32>
    %462 = vector.shape_cast %461 : vector<1x1x324xf32> to vector<324xf32>
    %c47 = arith.constant 47 : index
    %463 = memref.load %arg2[%c47] : memref<144xf32, #tpu.memory_space<smem>>
    %464 = vector.broadcast %463 : f32 to vector<324xf32>
    %465 = arith.mulf %464, %462 : vector<324xf32>
    %466 = arith.addf %460, %465 : vector<324xf32>
    %c0_313 = arith.constant 0 : index
    %c1_314 = arith.constant 1 : index
    %c18_315 = arith.constant 18 : index
    %467 = vector.load %arg5[%c0_313, %c1_314, %c18_315] : memref<3x4x360xf32, #tpu.memory_space<vmem>>, vector<1x1x324xf32>
    %468 = vector.shape_cast %467 : vector<1x1x324xf32> to vector<324xf32>
    %c48 = arith.constant 48 : index
    %469 = memref.load %arg2[%c48] : memref<144xf32, #tpu.memory_space<smem>>
    %470 = vector.broadcast %469 : f32 to vector<324xf32>
    %471 = arith.mulf %470, %468 : vector<324xf32>
    %472 = arith.addf %466, %471 : vector<324xf32>
    %c1_316 = arith.constant 1 : index
    %c1_317 = arith.constant 1 : index
    %c18_318 = arith.constant 18 : index
    %473 = vector.load %arg5[%c1_316, %c1_317, %c18_318] : memref<3x4x360xf32, #tpu.memory_space<vmem>>, vector<1x1x324xf32>
    %474 = vector.shape_cast %473 : vector<1x1x324xf32> to vector<324xf32>
    %c49 = arith.constant 49 : index
    %475 = memref.load %arg2[%c49] : memref<144xf32, #tpu.memory_space<smem>>
    %476 = vector.broadcast %475 : f32 to vector<324xf32>
    %477 = arith.mulf %476, %474 : vector<324xf32>
    %478 = arith.addf %472, %477 : vector<324xf32>
    %c2_319 = arith.constant 2 : index
    %c1_320 = arith.constant 1 : index
    %c18_321 = arith.constant 18 : index
    %479 = vector.load %arg5[%c2_319, %c1_320, %c18_321] : memref<3x4x360xf32, #tpu.memory_space<vmem>>, vector<1x1x324xf32>
    %480 = vector.shape_cast %479 : vector<1x1x324xf32> to vector<324xf32>
    %c50 = arith.constant 50 : index
    %481 = memref.load %arg2[%c50] : memref<144xf32, #tpu.memory_space<smem>>
    %482 = vector.broadcast %481 : f32 to vector<324xf32>
    %483 = arith.mulf %482, %480 : vector<324xf32>
    %484 = arith.addf %478, %483 : vector<324xf32>
    %c0_322 = arith.constant 0 : index
    %c1_323 = arith.constant 1 : index
    %c36_324 = arith.constant 36 : index
    %485 = vector.load %arg5[%c0_322, %c1_323, %c36_324] : memref<3x4x360xf32, #tpu.memory_space<vmem>>, vector<1x1x324xf32>
    %486 = vector.shape_cast %485 : vector<1x1x324xf32> to vector<324xf32>
    %c51 = arith.constant 51 : index
    %487 = memref.load %arg2[%c51] : memref<144xf32, #tpu.memory_space<smem>>
    %488 = vector.broadcast %487 : f32 to vector<324xf32>
    %489 = arith.mulf %488, %486 : vector<324xf32>
    %490 = arith.addf %484, %489 : vector<324xf32>
    %c1_325 = arith.constant 1 : index
    %c1_326 = arith.constant 1 : index
    %c36_327 = arith.constant 36 : index
    %491 = vector.load %arg5[%c1_325, %c1_326, %c36_327] : memref<3x4x360xf32, #tpu.memory_space<vmem>>, vector<1x1x324xf32>
    %492 = vector.shape_cast %491 : vector<1x1x324xf32> to vector<324xf32>
    %c52 = arith.constant 52 : index
    %493 = memref.load %arg2[%c52] : memref<144xf32, #tpu.memory_space<smem>>
    %494 = vector.broadcast %493 : f32 to vector<324xf32>
    %495 = arith.mulf %494, %492 : vector<324xf32>
    %496 = arith.addf %490, %495 : vector<324xf32>
    %c2_328 = arith.constant 2 : index
    %c1_329 = arith.constant 1 : index
    %c36_330 = arith.constant 36 : index
    %497 = vector.load %arg5[%c2_328, %c1_329, %c36_330] : memref<3x4x360xf32, #tpu.memory_space<vmem>>, vector<1x1x324xf32>
    %498 = vector.shape_cast %497 : vector<1x1x324xf32> to vector<324xf32>
    %c53 = arith.constant 53 : index
    %499 = memref.load %arg2[%c53] : memref<144xf32, #tpu.memory_space<smem>>
    %500 = vector.broadcast %499 : f32 to vector<324xf32>
    %501 = arith.mulf %500, %498 : vector<324xf32>
    %502 = arith.addf %496, %501 : vector<324xf32>
    %c0_331 = arith.constant 0 : index
    %c2_332 = arith.constant 2 : index
    %c0_333 = arith.constant 0 : index
    %503 = vector.load %arg5[%c0_331, %c2_332, %c0_333] : memref<3x4x360xf32, #tpu.memory_space<vmem>>, vector<1x1x324xf32>
    %504 = vector.shape_cast %503 : vector<1x1x324xf32> to vector<324xf32>
    %c54_334 = arith.constant 54 : index
    %505 = memref.load %arg2[%c54_334] : memref<144xf32, #tpu.memory_space<smem>>
    %506 = vector.broadcast %505 : f32 to vector<324xf32>
    %507 = arith.mulf %506, %504 : vector<324xf32>
    %508 = arith.addf %502, %507 : vector<324xf32>
    %c1_335 = arith.constant 1 : index
    %c2_336 = arith.constant 2 : index
    %c0_337 = arith.constant 0 : index
    %509 = vector.load %arg5[%c1_335, %c2_336, %c0_337] : memref<3x4x360xf32, #tpu.memory_space<vmem>>, vector<1x1x324xf32>
    %510 = vector.shape_cast %509 : vector<1x1x324xf32> to vector<324xf32>
    %c55_338 = arith.constant 55 : index
    %511 = memref.load %arg2[%c55_338] : memref<144xf32, #tpu.memory_space<smem>>
    %512 = vector.broadcast %511 : f32 to vector<324xf32>
    %513 = arith.mulf %512, %510 : vector<324xf32>
    %514 = arith.addf %508, %513 : vector<324xf32>
    %c2_339 = arith.constant 2 : index
    %c2_340 = arith.constant 2 : index
    %c0_341 = arith.constant 0 : index
    %515 = vector.load %arg5[%c2_339, %c2_340, %c0_341] : memref<3x4x360xf32, #tpu.memory_space<vmem>>, vector<1x1x324xf32>
    %516 = vector.shape_cast %515 : vector<1x1x324xf32> to vector<324xf32>
    %c56_342 = arith.constant 56 : index
    %517 = memref.load %arg2[%c56_342] : memref<144xf32, #tpu.memory_space<smem>>
    %518 = vector.broadcast %517 : f32 to vector<324xf32>
    %519 = arith.mulf %518, %516 : vector<324xf32>
    %520 = arith.addf %514, %519 : vector<324xf32>
    %c0_343 = arith.constant 0 : index
    %c2_344 = arith.constant 2 : index
    %c18_345 = arith.constant 18 : index
    %521 = vector.load %arg5[%c0_343, %c2_344, %c18_345] : memref<3x4x360xf32, #tpu.memory_space<vmem>>, vector<1x1x324xf32>
    %522 = vector.shape_cast %521 : vector<1x1x324xf32> to vector<324xf32>
    %c57 = arith.constant 57 : index
    %523 = memref.load %arg2[%c57] : memref<144xf32, #tpu.memory_space<smem>>
    %524 = vector.broadcast %523 : f32 to vector<324xf32>
    %525 = arith.mulf %524, %522 : vector<324xf32>
    %526 = arith.addf %520, %525 : vector<324xf32>
    %c1_346 = arith.constant 1 : index
    %c2_347 = arith.constant 2 : index
    %c18_348 = arith.constant 18 : index
    %527 = vector.load %arg5[%c1_346, %c2_347, %c18_348] : memref<3x4x360xf32, #tpu.memory_space<vmem>>, vector<1x1x324xf32>
    %528 = vector.shape_cast %527 : vector<1x1x324xf32> to vector<324xf32>
    %c58 = arith.constant 58 : index
    %529 = memref.load %arg2[%c58] : memref<144xf32, #tpu.memory_space<smem>>
    %530 = vector.broadcast %529 : f32 to vector<324xf32>
    %531 = arith.mulf %530, %528 : vector<324xf32>
    %532 = arith.addf %526, %531 : vector<324xf32>
    %c2_349 = arith.constant 2 : index
    %c2_350 = arith.constant 2 : index
    %c18_351 = arith.constant 18 : index
    %533 = vector.load %arg5[%c2_349, %c2_350, %c18_351] : memref<3x4x360xf32, #tpu.memory_space<vmem>>, vector<1x1x324xf32>
    %534 = vector.shape_cast %533 : vector<1x1x324xf32> to vector<324xf32>
    %c59 = arith.constant 59 : index
    %535 = memref.load %arg2[%c59] : memref<144xf32, #tpu.memory_space<smem>>
    %536 = vector.broadcast %535 : f32 to vector<324xf32>
    %537 = arith.mulf %536, %534 : vector<324xf32>
    %538 = arith.addf %532, %537 : vector<324xf32>
    %c0_352 = arith.constant 0 : index
    %c2_353 = arith.constant 2 : index
    %c36_354 = arith.constant 36 : index
    %539 = vector.load %arg5[%c0_352, %c2_353, %c36_354] : memref<3x4x360xf32, #tpu.memory_space<vmem>>, vector<1x1x324xf32>
    %540 = vector.shape_cast %539 : vector<1x1x324xf32> to vector<324xf32>
    %c60 = arith.constant 60 : index
    %541 = memref.load %arg2[%c60] : memref<144xf32, #tpu.memory_space<smem>>
    %542 = vector.broadcast %541 : f32 to vector<324xf32>
    %543 = arith.mulf %542, %540 : vector<324xf32>
    %544 = arith.addf %538, %543 : vector<324xf32>
    %c1_355 = arith.constant 1 : index
    %c2_356 = arith.constant 2 : index
    %c36_357 = arith.constant 36 : index
    %545 = vector.load %arg5[%c1_355, %c2_356, %c36_357] : memref<3x4x360xf32, #tpu.memory_space<vmem>>, vector<1x1x324xf32>
    %546 = vector.shape_cast %545 : vector<1x1x324xf32> to vector<324xf32>
    %c61 = arith.constant 61 : index
    %547 = memref.load %arg2[%c61] : memref<144xf32, #tpu.memory_space<smem>>
    %548 = vector.broadcast %547 : f32 to vector<324xf32>
    %549 = arith.mulf %548, %546 : vector<324xf32>
    %550 = arith.addf %544, %549 : vector<324xf32>
    %c2_358 = arith.constant 2 : index
    %c2_359 = arith.constant 2 : index
    %c36_360 = arith.constant 36 : index
    %551 = vector.load %arg5[%c2_358, %c2_359, %c36_360] : memref<3x4x360xf32, #tpu.memory_space<vmem>>, vector<1x1x324xf32>
    %552 = vector.shape_cast %551 : vector<1x1x324xf32> to vector<324xf32>
    %c62 = arith.constant 62 : index
    %553 = memref.load %arg2[%c62] : memref<144xf32, #tpu.memory_space<smem>>
    %554 = vector.broadcast %553 : f32 to vector<324xf32>
    %555 = arith.mulf %554, %552 : vector<324xf32>
    %556 = arith.addf %550, %555 : vector<324xf32>
    %c0_361 = arith.constant 0 : index
    %c3_362 = arith.constant 3 : index
    %c0_363 = arith.constant 0 : index
    %557 = vector.load %arg5[%c0_361, %c3_362, %c0_363] : memref<3x4x360xf32, #tpu.memory_space<vmem>>, vector<1x1x324xf32>
    %558 = vector.shape_cast %557 : vector<1x1x324xf32> to vector<324xf32>
    %c63 = arith.constant 63 : index
    %559 = memref.load %arg2[%c63] : memref<144xf32, #tpu.memory_space<smem>>
    %560 = vector.broadcast %559 : f32 to vector<324xf32>
    %561 = arith.mulf %560, %558 : vector<324xf32>
    %562 = arith.addf %556, %561 : vector<324xf32>
    %c1_364 = arith.constant 1 : index
    %c3_365 = arith.constant 3 : index
    %c0_366 = arith.constant 0 : index
    %563 = vector.load %arg5[%c1_364, %c3_365, %c0_366] : memref<3x4x360xf32, #tpu.memory_space<vmem>>, vector<1x1x324xf32>
    %564 = vector.shape_cast %563 : vector<1x1x324xf32> to vector<324xf32>
    %c64 = arith.constant 64 : index
    %565 = memref.load %arg2[%c64] : memref<144xf32, #tpu.memory_space<smem>>
    %566 = vector.broadcast %565 : f32 to vector<324xf32>
    %567 = arith.mulf %566, %564 : vector<324xf32>
    %568 = arith.addf %562, %567 : vector<324xf32>
    %c2_367 = arith.constant 2 : index
    %c3_368 = arith.constant 3 : index
    %c0_369 = arith.constant 0 : index
    %569 = vector.load %arg5[%c2_367, %c3_368, %c0_369] : memref<3x4x360xf32, #tpu.memory_space<vmem>>, vector<1x1x324xf32>
    %570 = vector.shape_cast %569 : vector<1x1x324xf32> to vector<324xf32>
    %c65 = arith.constant 65 : index
    %571 = memref.load %arg2[%c65] : memref<144xf32, #tpu.memory_space<smem>>
    %572 = vector.broadcast %571 : f32 to vector<324xf32>
    %573 = arith.mulf %572, %570 : vector<324xf32>
    %574 = arith.addf %568, %573 : vector<324xf32>
    %c0_370 = arith.constant 0 : index
    %c3_371 = arith.constant 3 : index
    %c18_372 = arith.constant 18 : index
    %575 = vector.load %arg5[%c0_370, %c3_371, %c18_372] : memref<3x4x360xf32, #tpu.memory_space<vmem>>, vector<1x1x324xf32>
    %576 = vector.shape_cast %575 : vector<1x1x324xf32> to vector<324xf32>
    %c66 = arith.constant 66 : index
    %577 = memref.load %arg2[%c66] : memref<144xf32, #tpu.memory_space<smem>>
    %578 = vector.broadcast %577 : f32 to vector<324xf32>
    %579 = arith.mulf %578, %576 : vector<324xf32>
    %580 = arith.addf %574, %579 : vector<324xf32>
    %c1_373 = arith.constant 1 : index
    %c3_374 = arith.constant 3 : index
    %c18_375 = arith.constant 18 : index
    %581 = vector.load %arg5[%c1_373, %c3_374, %c18_375] : memref<3x4x360xf32, #tpu.memory_space<vmem>>, vector<1x1x324xf32>
    %582 = vector.shape_cast %581 : vector<1x1x324xf32> to vector<324xf32>
    %c67 = arith.constant 67 : index
    %583 = memref.load %arg2[%c67] : memref<144xf32, #tpu.memory_space<smem>>
    %584 = vector.broadcast %583 : f32 to vector<324xf32>
    %585 = arith.mulf %584, %582 : vector<324xf32>
    %586 = arith.addf %580, %585 : vector<324xf32>
    %c2_376 = arith.constant 2 : index
    %c3_377 = arith.constant 3 : index
    %c18_378 = arith.constant 18 : index
    %587 = vector.load %arg5[%c2_376, %c3_377, %c18_378] : memref<3x4x360xf32, #tpu.memory_space<vmem>>, vector<1x1x324xf32>
    %588 = vector.shape_cast %587 : vector<1x1x324xf32> to vector<324xf32>
    %c68 = arith.constant 68 : index
    %589 = memref.load %arg2[%c68] : memref<144xf32, #tpu.memory_space<smem>>
    %590 = vector.broadcast %589 : f32 to vector<324xf32>
    %591 = arith.mulf %590, %588 : vector<324xf32>
    %592 = arith.addf %586, %591 : vector<324xf32>
    %c0_379 = arith.constant 0 : index
    %c3_380 = arith.constant 3 : index
    %c36_381 = arith.constant 36 : index
    %593 = vector.load %arg5[%c0_379, %c3_380, %c36_381] : memref<3x4x360xf32, #tpu.memory_space<vmem>>, vector<1x1x324xf32>
    %594 = vector.shape_cast %593 : vector<1x1x324xf32> to vector<324xf32>
    %c69 = arith.constant 69 : index
    %595 = memref.load %arg2[%c69] : memref<144xf32, #tpu.memory_space<smem>>
    %596 = vector.broadcast %595 : f32 to vector<324xf32>
    %597 = arith.mulf %596, %594 : vector<324xf32>
    %598 = arith.addf %592, %597 : vector<324xf32>
    %c1_382 = arith.constant 1 : index
    %c3_383 = arith.constant 3 : index
    %c36_384 = arith.constant 36 : index
    %599 = vector.load %arg5[%c1_382, %c3_383, %c36_384] : memref<3x4x360xf32, #tpu.memory_space<vmem>>, vector<1x1x324xf32>
    %600 = vector.shape_cast %599 : vector<1x1x324xf32> to vector<324xf32>
    %c70 = arith.constant 70 : index
    %601 = memref.load %arg2[%c70] : memref<144xf32, #tpu.memory_space<smem>>
    %602 = vector.broadcast %601 : f32 to vector<324xf32>
    %603 = arith.mulf %602, %600 : vector<324xf32>
    %604 = arith.addf %598, %603 : vector<324xf32>
    %c2_385 = arith.constant 2 : index
    %c3_386 = arith.constant 3 : index
    %c36_387 = arith.constant 36 : index
    %605 = vector.load %arg5[%c2_385, %c3_386, %c36_387] : memref<3x4x360xf32, #tpu.memory_space<vmem>>, vector<1x1x324xf32>
    %606 = vector.shape_cast %605 : vector<1x1x324xf32> to vector<324xf32>
    %c71 = arith.constant 71 : index
    %607 = memref.load %arg2[%c71] : memref<144xf32, #tpu.memory_space<smem>>
    %608 = vector.broadcast %607 : f32 to vector<324xf32>
    %609 = arith.mulf %608, %606 : vector<324xf32>
    %610 = arith.addf %604, %609 : vector<324xf32>
    %c0_388 = arith.constant 0 : index
    %c1_389 = arith.constant 1 : index
    %c0_390 = arith.constant 0 : index
    %611 = vector.load %arg3[%c0_388, %c1_389, %c0_390] : memref<1x4x324xf32, #tpu.memory_space<vmem>>, vector<1x1x324xf32>
    %612 = vector.shape_cast %611 : vector<1x1x324xf32> to vector<324xf32>
    %613 = vector.shape_cast %610 : vector<324xf32> to vector<1x1x324xf32>
    tpu.vector_store %arg3[%c0_388, %c1_389, %c0_390], %613 {strides = array<i32>} : memref<1x4x324xf32, #tpu.memory_space<vmem>>, vector<1x1x324xf32>,
    %c0_391 = arith.constant 0 : index
    %c0_392 = arith.constant 0 : index
    %c0_393 = arith.constant 0 : index
    %614 = vector.load %arg5[%c0_391, %c0_392, %c0_393] : memref<3x4x360xf32, #tpu.memory_space<vmem>>, vector<1x1x324xf32>
    %615 = vector.shape_cast %614 : vector<1x1x324xf32> to vector<324xf32>
    %c72_394 = arith.constant 72 : index
    %616 = memref.load %arg2[%c72_394] : memref<144xf32, #tpu.memory_space<smem>>
    %617 = vector.broadcast %616 : f32 to vector<324xf32>
    %618 = arith.mulf %617, %615 : vector<324xf32>
    %c1_395 = arith.constant 1 : index
    %c0_396 = arith.constant 0 : index
    %c0_397 = arith.constant 0 : index
    %619 = vector.load %arg5[%c1_395, %c0_396, %c0_397] : memref<3x4x360xf32, #tpu.memory_space<vmem>>, vector<1x1x324xf32>
    %620 = vector.shape_cast %619 : vector<1x1x324xf32> to vector<324xf32>
    %c73_398 = arith.constant 73 : index
    %621 = memref.load %arg2[%c73_398] : memref<144xf32, #tpu.memory_space<smem>>
    %622 = vector.broadcast %621 : f32 to vector<324xf32>
    %623 = arith.mulf %622, %620 : vector<324xf32>
    %624 = arith.addf %618, %623 : vector<324xf32>
    %c2_399 = arith.constant 2 : index
    %c0_400 = arith.constant 0 : index
    %c0_401 = arith.constant 0 : index
    %625 = vector.load %arg5[%c2_399, %c0_400, %c0_401] : memref<3x4x360xf32, #tpu.memory_space<vmem>>, vector<1x1x324xf32>
    %626 = vector.shape_cast %625 : vector<1x1x324xf32> to vector<324xf32>
    %c74_402 = arith.constant 74 : index
    %627 = memref.load %arg2[%c74_402] : memref<144xf32, #tpu.memory_space<smem>>
    %628 = vector.broadcast %627 : f32 to vector<324xf32>
    %629 = arith.mulf %628, %626 : vector<324xf32>
    %630 = arith.addf %624, %629 : vector<324xf32>
    %c0_403 = arith.constant 0 : index
    %c0_404 = arith.constant 0 : index
    %c18_405 = arith.constant 18 : index
    %631 = vector.load %arg5[%c0_403, %c0_404, %c18_405] : memref<3x4x360xf32, #tpu.memory_space<vmem>>, vector<1x1x324xf32>
    %632 = vector.shape_cast %631 : vector<1x1x324xf32> to vector<324xf32>
    %c75 = arith.constant 75 : index
    %633 = memref.load %arg2[%c75] : memref<144xf32, #tpu.memory_space<smem>>
    %634 = vector.broadcast %633 : f32 to vector<324xf32>
    %635 = arith.mulf %634, %632 : vector<324xf32>
    %636 = arith.addf %630, %635 : vector<324xf32>
    %c1_406 = arith.constant 1 : index
    %c0_407 = arith.constant 0 : index
    %c18_408 = arith.constant 18 : index
    %637 = vector.load %arg5[%c1_406, %c0_407, %c18_408] : memref<3x4x360xf32, #tpu.memory_space<vmem>>, vector<1x1x324xf32>
    %638 = vector.shape_cast %637 : vector<1x1x324xf32> to vector<324xf32>
    %c76 = arith.constant 76 : index
    %639 = memref.load %arg2[%c76] : memref<144xf32, #tpu.memory_space<smem>>
    %640 = vector.broadcast %639 : f32 to vector<324xf32>
    %641 = arith.mulf %640, %638 : vector<324xf32>
    %642 = arith.addf %636, %641 : vector<324xf32>
    %c2_409 = arith.constant 2 : index
    %c0_410 = arith.constant 0 : index
    %c18_411 = arith.constant 18 : index
    %643 = vector.load %arg5[%c2_409, %c0_410, %c18_411] : memref<3x4x360xf32, #tpu.memory_space<vmem>>, vector<1x1x324xf32>
    %644 = vector.shape_cast %643 : vector<1x1x324xf32> to vector<324xf32>
    %c77 = arith.constant 77 : index
    %645 = memref.load %arg2[%c77] : memref<144xf32, #tpu.memory_space<smem>>
    %646 = vector.broadcast %645 : f32 to vector<324xf32>
    %647 = arith.mulf %646, %644 : vector<324xf32>
    %648 = arith.addf %642, %647 : vector<324xf32>
    %c0_412 = arith.constant 0 : index
    %c0_413 = arith.constant 0 : index
    %c36_414 = arith.constant 36 : index
    %649 = vector.load %arg5[%c0_412, %c0_413, %c36_414] : memref<3x4x360xf32, #tpu.memory_space<vmem>>, vector<1x1x324xf32>
    %650 = vector.shape_cast %649 : vector<1x1x324xf32> to vector<324xf32>
    %c78 = arith.constant 78 : index
    %651 = memref.load %arg2[%c78] : memref<144xf32, #tpu.memory_space<smem>>
    %652 = vector.broadcast %651 : f32 to vector<324xf32>
    %653 = arith.mulf %652, %650 : vector<324xf32>
    %654 = arith.addf %648, %653 : vector<324xf32>
    %c1_415 = arith.constant 1 : index
    %c0_416 = arith.constant 0 : index
    %c36_417 = arith.constant 36 : index
    %655 = vector.load %arg5[%c1_415, %c0_416, %c36_417] : memref<3x4x360xf32, #tpu.memory_space<vmem>>, vector<1x1x324xf32>
    %656 = vector.shape_cast %655 : vector<1x1x324xf32> to vector<324xf32>
    %c79 = arith.constant 79 : index
    %657 = memref.load %arg2[%c79] : memref<144xf32, #tpu.memory_space<smem>>
    %658 = vector.broadcast %657 : f32 to vector<324xf32>
    %659 = arith.mulf %658, %656 : vector<324xf32>
    %660 = arith.addf %654, %659 : vector<324xf32>
    %c2_418 = arith.constant 2 : index
    %c0_419 = arith.constant 0 : index
    %c36_420 = arith.constant 36 : index
    %661 = vector.load %arg5[%c2_418, %c0_419, %c36_420] : memref<3x4x360xf32, #tpu.memory_space<vmem>>, vector<1x1x324xf32>
    %662 = vector.shape_cast %661 : vector<1x1x324xf32> to vector<324xf32>
    %c80 = arith.constant 80 : index
    %663 = memref.load %arg2[%c80] : memref<144xf32, #tpu.memory_space<smem>>
    %664 = vector.broadcast %663 : f32 to vector<324xf32>
    %665 = arith.mulf %664, %662 : vector<324xf32>
    %666 = arith.addf %660, %665 : vector<324xf32>
    %c0_421 = arith.constant 0 : index
    %c1_422 = arith.constant 1 : index
    %c0_423 = arith.constant 0 : index
    %667 = vector.load %arg5[%c0_421, %c1_422, %c0_423] : memref<3x4x360xf32, #tpu.memory_space<vmem>>, vector<1x1x324xf32>
    %668 = vector.shape_cast %667 : vector<1x1x324xf32> to vector<324xf32>
    %c81 = arith.constant 81 : index
    %669 = memref.load %arg2[%c81] : memref<144xf32, #tpu.memory_space<smem>>
    %670 = vector.broadcast %669 : f32 to vector<324xf32>
    %671 = arith.mulf %670, %668 : vector<324xf32>
    %672 = arith.addf %666, %671 : vector<324xf32>
    %c1_424 = arith.constant 1 : index
    %c1_425 = arith.constant 1 : index
    %c0_426 = arith.constant 0 : index
    %673 = vector.load %arg5[%c1_424, %c1_425, %c0_426] : memref<3x4x360xf32, #tpu.memory_space<vmem>>, vector<1x1x324xf32>
    %674 = vector.shape_cast %673 : vector<1x1x324xf32> to vector<324xf32>
    %c82 = arith.constant 82 : index
    %675 = memref.load %arg2[%c82] : memref<144xf32, #tpu.memory_space<smem>>
    %676 = vector.broadcast %675 : f32 to vector<324xf32>
    %677 = arith.mulf %676, %674 : vector<324xf32>
    %678 = arith.addf %672, %677 : vector<324xf32>
    %c2_427 = arith.constant 2 : index
    %c1_428 = arith.constant 1 : index
    %c0_429 = arith.constant 0 : index
    %679 = vector.load %arg5[%c2_427, %c1_428, %c0_429] : memref<3x4x360xf32, #tpu.memory_space<vmem>>, vector<1x1x324xf32>
    %680 = vector.shape_cast %679 : vector<1x1x324xf32> to vector<324xf32>
    %c83 = arith.constant 83 : index
    %681 = memref.load %arg2[%c83] : memref<144xf32, #tpu.memory_space<smem>>
    %682 = vector.broadcast %681 : f32 to vector<324xf32>
    %683 = arith.mulf %682, %680 : vector<324xf32>
    %684 = arith.addf %678, %683 : vector<324xf32>
    %c0_430 = arith.constant 0 : index
    %c1_431 = arith.constant 1 : index
    %c18_432 = arith.constant 18 : index
    %685 = vector.load %arg5[%c0_430, %c1_431, %c18_432] : memref<3x4x360xf32, #tpu.memory_space<vmem>>, vector<1x1x324xf32>
    %686 = vector.shape_cast %685 : vector<1x1x324xf32> to vector<324xf32>
    %c84 = arith.constant 84 : index
    %687 = memref.load %arg2[%c84] : memref<144xf32, #tpu.memory_space<smem>>
    %688 = vector.broadcast %687 : f32 to vector<324xf32>
    %689 = arith.mulf %688, %686 : vector<324xf32>
    %690 = arith.addf %684, %689 : vector<324xf32>
    %c1_433 = arith.constant 1 : index
    %c1_434 = arith.constant 1 : index
    %c18_435 = arith.constant 18 : index
    %691 = vector.load %arg5[%c1_433, %c1_434, %c18_435] : memref<3x4x360xf32, #tpu.memory_space<vmem>>, vector<1x1x324xf32>
    %692 = vector.shape_cast %691 : vector<1x1x324xf32> to vector<324xf32>
    %c85 = arith.constant 85 : index
    %693 = memref.load %arg2[%c85] : memref<144xf32, #tpu.memory_space<smem>>
    %694 = vector.broadcast %693 : f32 to vector<324xf32>
    %695 = arith.mulf %694, %692 : vector<324xf32>
    %696 = arith.addf %690, %695 : vector<324xf32>
    %c2_436 = arith.constant 2 : index
    %c1_437 = arith.constant 1 : index
    %c18_438 = arith.constant 18 : index
    %697 = vector.load %arg5[%c2_436, %c1_437, %c18_438] : memref<3x4x360xf32, #tpu.memory_space<vmem>>, vector<1x1x324xf32>
    %698 = vector.shape_cast %697 : vector<1x1x324xf32> to vector<324xf32>
    %c86 = arith.constant 86 : index
    %699 = memref.load %arg2[%c86] : memref<144xf32, #tpu.memory_space<smem>>
    %700 = vector.broadcast %699 : f32 to vector<324xf32>
    %701 = arith.mulf %700, %698 : vector<324xf32>
    %702 = arith.addf %696, %701 : vector<324xf32>
    %c0_439 = arith.constant 0 : index
    %c1_440 = arith.constant 1 : index
    %c36_441 = arith.constant 36 : index
    %703 = vector.load %arg5[%c0_439, %c1_440, %c36_441] : memref<3x4x360xf32, #tpu.memory_space<vmem>>, vector<1x1x324xf32>
    %704 = vector.shape_cast %703 : vector<1x1x324xf32> to vector<324xf32>
    %c87 = arith.constant 87 : index
    %705 = memref.load %arg2[%c87] : memref<144xf32, #tpu.memory_space<smem>>
    %706 = vector.broadcast %705 : f32 to vector<324xf32>
    %707 = arith.mulf %706, %704 : vector<324xf32>
    %708 = arith.addf %702, %707 : vector<324xf32>
    %c1_442 = arith.constant 1 : index
    %c1_443 = arith.constant 1 : index
    %c36_444 = arith.constant 36 : index
    %709 = vector.load %arg5[%c1_442, %c1_443, %c36_444] : memref<3x4x360xf32, #tpu.memory_space<vmem>>, vector<1x1x324xf32>
    %710 = vector.shape_cast %709 : vector<1x1x324xf32> to vector<324xf32>
    %c88 = arith.constant 88 : index
    %711 = memref.load %arg2[%c88] : memref<144xf32, #tpu.memory_space<smem>>
    %712 = vector.broadcast %711 : f32 to vector<324xf32>
    %713 = arith.mulf %712, %710 : vector<324xf32>
    %714 = arith.addf %708, %713 : vector<324xf32>
    %c2_445 = arith.constant 2 : index
    %c1_446 = arith.constant 1 : index
    %c36_447 = arith.constant 36 : index
    %715 = vector.load %arg5[%c2_445, %c1_446, %c36_447] : memref<3x4x360xf32, #tpu.memory_space<vmem>>, vector<1x1x324xf32>
    %716 = vector.shape_cast %715 : vector<1x1x324xf32> to vector<324xf32>
    %c89 = arith.constant 89 : index
    %717 = memref.load %arg2[%c89] : memref<144xf32, #tpu.memory_space<smem>>
    %718 = vector.broadcast %717 : f32 to vector<324xf32>
    %719 = arith.mulf %718, %716 : vector<324xf32>
    %720 = arith.addf %714, %719 : vector<324xf32>
    %c0_448 = arith.constant 0 : index
    %c2_449 = arith.constant 2 : index
    %c0_450 = arith.constant 0 : index
    %721 = vector.load %arg5[%c0_448, %c2_449, %c0_450] : memref<3x4x360xf32, #tpu.memory_space<vmem>>, vector<1x1x324xf32>
    %722 = vector.shape_cast %721 : vector<1x1x324xf32> to vector<324xf32>
    %c90_451 = arith.constant 90 : index
    %723 = memref.load %arg2[%c90_451] : memref<144xf32, #tpu.memory_space<smem>>
    %724 = vector.broadcast %723 : f32 to vector<324xf32>
    %725 = arith.mulf %724, %722 : vector<324xf32>
    %726 = arith.addf %720, %725 : vector<324xf32>
    %c1_452 = arith.constant 1 : index
    %c2_453 = arith.constant 2 : index
    %c0_454 = arith.constant 0 : index
    %727 = vector.load %arg5[%c1_452, %c2_453, %c0_454] : memref<3x4x360xf32, #tpu.memory_space<vmem>>, vector<1x1x324xf32>
    %728 = vector.shape_cast %727 : vector<1x1x324xf32> to vector<324xf32>
    %c91_455 = arith.constant 91 : index
    %729 = memref.load %arg2[%c91_455] : memref<144xf32, #tpu.memory_space<smem>>
    %730 = vector.broadcast %729 : f32 to vector<324xf32>
    %731 = arith.mulf %730, %728 : vector<324xf32>
    %732 = arith.addf %726, %731 : vector<324xf32>
    %c2_456 = arith.constant 2 : index
    %c2_457 = arith.constant 2 : index
    %c0_458 = arith.constant 0 : index
    %733 = vector.load %arg5[%c2_456, %c2_457, %c0_458] : memref<3x4x360xf32, #tpu.memory_space<vmem>>, vector<1x1x324xf32>
    %734 = vector.shape_cast %733 : vector<1x1x324xf32> to vector<324xf32>
    %c92_459 = arith.constant 92 : index
    %735 = memref.load %arg2[%c92_459] : memref<144xf32, #tpu.memory_space<smem>>
    %736 = vector.broadcast %735 : f32 to vector<324xf32>
    %737 = arith.mulf %736, %734 : vector<324xf32>
    %738 = arith.addf %732, %737 : vector<324xf32>
    %c0_460 = arith.constant 0 : index
    %c2_461 = arith.constant 2 : index
    %c18_462 = arith.constant 18 : index
    %739 = vector.load %arg5[%c0_460, %c2_461, %c18_462] : memref<3x4x360xf32, #tpu.memory_space<vmem>>, vector<1x1x324xf32>
    %740 = vector.shape_cast %739 : vector<1x1x324xf32> to vector<324xf32>
    %c93 = arith.constant 93 : index
    %741 = memref.load %arg2[%c93] : memref<144xf32, #tpu.memory_space<smem>>
    %742 = vector.broadcast %741 : f32 to vector<324xf32>
    %743 = arith.mulf %742, %740 : vector<324xf32>
    %744 = arith.addf %738, %743 : vector<324xf32>
    %c1_463 = arith.constant 1 : index
    %c2_464 = arith.constant 2 : index
    %c18_465 = arith.constant 18 : index
    %745 = vector.load %arg5[%c1_463, %c2_464, %c18_465] : memref<3x4x360xf32, #tpu.memory_space<vmem>>, vector<1x1x324xf32>
    %746 = vector.shape_cast %745 : vector<1x1x324xf32> to vector<324xf32>
    %c94 = arith.constant 94 : index
    %747 = memref.load %arg2[%c94] : memref<144xf32, #tpu.memory_space<smem>>
    %748 = vector.broadcast %747 : f32 to vector<324xf32>
    %749 = arith.mulf %748, %746 : vector<324xf32>
    %750 = arith.addf %744, %749 : vector<324xf32>
    %c2_466 = arith.constant 2 : index
    %c2_467 = arith.constant 2 : index
    %c18_468 = arith.constant 18 : index
    %751 = vector.load %arg5[%c2_466, %c2_467, %c18_468] : memref<3x4x360xf32, #tpu.memory_space<vmem>>, vector<1x1x324xf32>
    %752 = vector.shape_cast %751 : vector<1x1x324xf32> to vector<324xf32>
    %c95 = arith.constant 95 : index
    %753 = memref.load %arg2[%c95] : memref<144xf32, #tpu.memory_space<smem>>
    %754 = vector.broadcast %753 : f32 to vector<324xf32>
    %755 = arith.mulf %754, %752 : vector<324xf32>
    %756 = arith.addf %750, %755 : vector<324xf32>
    %c0_469 = arith.constant 0 : index
    %c2_470 = arith.constant 2 : index
    %c36_471 = arith.constant 36 : index
    %757 = vector.load %arg5[%c0_469, %c2_470, %c36_471] : memref<3x4x360xf32, #tpu.memory_space<vmem>>, vector<1x1x324xf32>
    %758 = vector.shape_cast %757 : vector<1x1x324xf32> to vector<324xf32>
    %c96 = arith.constant 96 : index
    %759 = memref.load %arg2[%c96] : memref<144xf32, #tpu.memory_space<smem>>
    %760 = vector.broadcast %759 : f32 to vector<324xf32>
    %761 = arith.mulf %760, %758 : vector<324xf32>
    %762 = arith.addf %756, %761 : vector<324xf32>
    %c1_472 = arith.constant 1 : index
    %c2_473 = arith.constant 2 : index
    %c36_474 = arith.constant 36 : index
    %763 = vector.load %arg5[%c1_472, %c2_473, %c36_474] : memref<3x4x360xf32, #tpu.memory_space<vmem>>, vector<1x1x324xf32>
    %764 = vector.shape_cast %763 : vector<1x1x324xf32> to vector<324xf32>
    %c97 = arith.constant 97 : index
    %765 = memref.load %arg2[%c97] : memref<144xf32, #tpu.memory_space<smem>>
    %766 = vector.broadcast %765 : f32 to vector<324xf32>
    %767 = arith.mulf %766, %764 : vector<324xf32>
    %768 = arith.addf %762, %767 : vector<324xf32>
    %c2_475 = arith.constant 2 : index
    %c2_476 = arith.constant 2 : index
    %c36_477 = arith.constant 36 : index
    %769 = vector.load %arg5[%c2_475, %c2_476, %c36_477] : memref<3x4x360xf32, #tpu.memory_space<vmem>>, vector<1x1x324xf32>
    %770 = vector.shape_cast %769 : vector<1x1x324xf32> to vector<324xf32>
    %c98 = arith.constant 98 : index
    %771 = memref.load %arg2[%c98] : memref<144xf32, #tpu.memory_space<smem>>
    %772 = vector.broadcast %771 : f32 to vector<324xf32>
    %773 = arith.mulf %772, %770 : vector<324xf32>
    %774 = arith.addf %768, %773 : vector<324xf32>
    %c0_478 = arith.constant 0 : index
    %c3_479 = arith.constant 3 : index
    %c0_480 = arith.constant 0 : index
    %775 = vector.load %arg5[%c0_478, %c3_479, %c0_480] : memref<3x4x360xf32, #tpu.memory_space<vmem>>, vector<1x1x324xf32>
    %776 = vector.shape_cast %775 : vector<1x1x324xf32> to vector<324xf32>
    %c99 = arith.constant 99 : index
    %777 = memref.load %arg2[%c99] : memref<144xf32, #tpu.memory_space<smem>>
    %778 = vector.broadcast %777 : f32 to vector<324xf32>
    %779 = arith.mulf %778, %776 : vector<324xf32>
    %780 = arith.addf %774, %779 : vector<324xf32>
    %c1_481 = arith.constant 1 : index
    %c3_482 = arith.constant 3 : index
    %c0_483 = arith.constant 0 : index
    %781 = vector.load %arg5[%c1_481, %c3_482, %c0_483] : memref<3x4x360xf32, #tpu.memory_space<vmem>>, vector<1x1x324xf32>
    %782 = vector.shape_cast %781 : vector<1x1x324xf32> to vector<324xf32>
    %c100 = arith.constant 100 : index
    %783 = memref.load %arg2[%c100] : memref<144xf32, #tpu.memory_space<smem>>
    %784 = vector.broadcast %783 : f32 to vector<324xf32>
    %785 = arith.mulf %784, %782 : vector<324xf32>
    %786 = arith.addf %780, %785 : vector<324xf32>
    %c2_484 = arith.constant 2 : index
    %c3_485 = arith.constant 3 : index
    %c0_486 = arith.constant 0 : index
    %787 = vector.load %arg5[%c2_484, %c3_485, %c0_486] : memref<3x4x360xf32, #tpu.memory_space<vmem>>, vector<1x1x324xf32>
    %788 = vector.shape_cast %787 : vector<1x1x324xf32> to vector<324xf32>
    %c101 = arith.constant 101 : index
    %789 = memref.load %arg2[%c101] : memref<144xf32, #tpu.memory_space<smem>>
    %790 = vector.broadcast %789 : f32 to vector<324xf32>
    %791 = arith.mulf %790, %788 : vector<324xf32>
    %792 = arith.addf %786, %791 : vector<324xf32>
    %c0_487 = arith.constant 0 : index
    %c3_488 = arith.constant 3 : index
    %c18_489 = arith.constant 18 : index
    %793 = vector.load %arg5[%c0_487, %c3_488, %c18_489] : memref<3x4x360xf32, #tpu.memory_space<vmem>>, vector<1x1x324xf32>
    %794 = vector.shape_cast %793 : vector<1x1x324xf32> to vector<324xf32>
    %c102 = arith.constant 102 : index
    %795 = memref.load %arg2[%c102] : memref<144xf32, #tpu.memory_space<smem>>
    %796 = vector.broadcast %795 : f32 to vector<324xf32>
    %797 = arith.mulf %796, %794 : vector<324xf32>
    %798 = arith.addf %792, %797 : vector<324xf32>
    %c1_490 = arith.constant 1 : index
    %c3_491 = arith.constant 3 : index
    %c18_492 = arith.constant 18 : index
    %799 = vector.load %arg5[%c1_490, %c3_491, %c18_492] : memref<3x4x360xf32, #tpu.memory_space<vmem>>, vector<1x1x324xf32>
    %800 = vector.shape_cast %799 : vector<1x1x324xf32> to vector<324xf32>
    %c103 = arith.constant 103 : index
    %801 = memref.load %arg2[%c103] : memref<144xf32, #tpu.memory_space<smem>>
    %802 = vector.broadcast %801 : f32 to vector<324xf32>
    %803 = arith.mulf %802, %800 : vector<324xf32>
    %804 = arith.addf %798, %803 : vector<324xf32>
    %c2_493 = arith.constant 2 : index
    %c3_494 = arith.constant 3 : index
    %c18_495 = arith.constant 18 : index
    %805 = vector.load %arg5[%c2_493, %c3_494, %c18_495] : memref<3x4x360xf32, #tpu.memory_space<vmem>>, vector<1x1x324xf32>
    %806 = vector.shape_cast %805 : vector<1x1x324xf32> to vector<324xf32>
    %c104 = arith.constant 104 : index
    %807 = memref.load %arg2[%c104] : memref<144xf32, #tpu.memory_space<smem>>
    %808 = vector.broadcast %807 : f32 to vector<324xf32>
    %809 = arith.mulf %808, %806 : vector<324xf32>
    %810 = arith.addf %804, %809 : vector<324xf32>
    %c0_496 = arith.constant 0 : index
    %c3_497 = arith.constant 3 : index
    %c36_498 = arith.constant 36 : index
    %811 = vector.load %arg5[%c0_496, %c3_497, %c36_498] : memref<3x4x360xf32, #tpu.memory_space<vmem>>, vector<1x1x324xf32>
    %812 = vector.shape_cast %811 : vector<1x1x324xf32> to vector<324xf32>
    %c105 = arith.constant 105 : index
    %813 = memref.load %arg2[%c105] : memref<144xf32, #tpu.memory_space<smem>>
    %814 = vector.broadcast %813 : f32 to vector<324xf32>
    %815 = arith.mulf %814, %812 : vector<324xf32>
    %816 = arith.addf %810, %815 : vector<324xf32>
    %c1_499 = arith.constant 1 : index
    %c3_500 = arith.constant 3 : index
    %c36_501 = arith.constant 36 : index
    %817 = vector.load %arg5[%c1_499, %c3_500, %c36_501] : memref<3x4x360xf32, #tpu.memory_space<vmem>>, vector<1x1x324xf32>
    %818 = vector.shape_cast %817 : vector<1x1x324xf32> to vector<324xf32>
    %c106 = arith.constant 106 : index
    %819 = memref.load %arg2[%c106] : memref<144xf32, #tpu.memory_space<smem>>
    %820 = vector.broadcast %819 : f32 to vector<324xf32>
    %821 = arith.mulf %820, %818 : vector<324xf32>
    %822 = arith.addf %816, %821 : vector<324xf32>
    %c2_502 = arith.constant 2 : index
    %c3_503 = arith.constant 3 : index
    %c36_504 = arith.constant 36 : index
    %823 = vector.load %arg5[%c2_502, %c3_503, %c36_504] : memref<3x4x360xf32, #tpu.memory_space<vmem>>, vector<1x1x324xf32>
    %824 = vector.shape_cast %823 : vector<1x1x324xf32> to vector<324xf32>
    %c107 = arith.constant 107 : index
    %825 = memref.load %arg2[%c107] : memref<144xf32, #tpu.memory_space<smem>>
    %826 = vector.broadcast %825 : f32 to vector<324xf32>
    %827 = arith.mulf %826, %824 : vector<324xf32>
    %828 = arith.addf %822, %827 : vector<324xf32>
    %c0_505 = arith.constant 0 : index
    %c2_506 = arith.constant 2 : index
    %c0_507 = arith.constant 0 : index
    %829 = vector.load %arg3[%c0_505, %c2_506, %c0_507] : memref<1x4x324xf32, #tpu.memory_space<vmem>>, vector<1x1x324xf32>
    %830 = vector.shape_cast %829 : vector<1x1x324xf32> to vector<324xf32>
    %831 = vector.shape_cast %828 : vector<324xf32> to vector<1x1x324xf32>
    tpu.vector_store %arg3[%c0_505, %c2_506, %c0_507], %831 {strides = array<i32>} : memref<1x4x324xf32, #tpu.memory_space<vmem>>, vector<1x1x324xf32>,
    %c0_508 = arith.constant 0 : index
    %c0_509 = arith.constant 0 : index
    %c0_510 = arith.constant 0 : index
    %832 = vector.load %arg5[%c0_508, %c0_509, %c0_510] : memref<3x4x360xf32, #tpu.memory_space<vmem>>, vector<1x1x324xf32>
    %833 = vector.shape_cast %832 : vector<1x1x324xf32> to vector<324xf32>
    %c108_511 = arith.constant 108 : index
    %834 = memref.load %arg2[%c108_511] : memref<144xf32, #tpu.memory_space<smem>>
    %835 = vector.broadcast %834 : f32 to vector<324xf32>
    %836 = arith.mulf %835, %833 : vector<324xf32>
    %c1_512 = arith.constant 1 : index
    %c0_513 = arith.constant 0 : index
    %c0_514 = arith.constant 0 : index
    %837 = vector.load %arg5[%c1_512, %c0_513, %c0_514] : memref<3x4x360xf32, #tpu.memory_space<vmem>>, vector<1x1x324xf32>
    %838 = vector.shape_cast %837 : vector<1x1x324xf32> to vector<324xf32>
    %c109_515 = arith.constant 109 : index
    %839 = memref.load %arg2[%c109_515] : memref<144xf32, #tpu.memory_space<smem>>
    %840 = vector.broadcast %839 : f32 to vector<324xf32>
    %841 = arith.mulf %840, %838 : vector<324xf32>
    %842 = arith.addf %836, %841 : vector<324xf32>
    %c2_516 = arith.constant 2 : index
    %c0_517 = arith.constant 0 : index
    %c0_518 = arith.constant 0 : index
    %843 = vector.load %arg5[%c2_516, %c0_517, %c0_518] : memref<3x4x360xf32, #tpu.memory_space<vmem>>, vector<1x1x324xf32>
    %844 = vector.shape_cast %843 : vector<1x1x324xf32> to vector<324xf32>
    %c110_519 = arith.constant 110 : index
    %845 = memref.load %arg2[%c110_519] : memref<144xf32, #tpu.memory_space<smem>>
    %846 = vector.broadcast %845 : f32 to vector<324xf32>
    %847 = arith.mulf %846, %844 : vector<324xf32>
    %848 = arith.addf %842, %847 : vector<324xf32>
    %c0_520 = arith.constant 0 : index
    %c0_521 = arith.constant 0 : index
    %c18_522 = arith.constant 18 : index
    %849 = vector.load %arg5[%c0_520, %c0_521, %c18_522] : memref<3x4x360xf32, #tpu.memory_space<vmem>>, vector<1x1x324xf32>
    %850 = vector.shape_cast %849 : vector<1x1x324xf32> to vector<324xf32>
    %c111 = arith.constant 111 : index
    %851 = memref.load %arg2[%c111] : memref<144xf32, #tpu.memory_space<smem>>
    %852 = vector.broadcast %851 : f32 to vector<324xf32>
    %853 = arith.mulf %852, %850 : vector<324xf32>
    %854 = arith.addf %848, %853 : vector<324xf32>
    %c1_523 = arith.constant 1 : index
    %c0_524 = arith.constant 0 : index
    %c18_525 = arith.constant 18 : index
    %855 = vector.load %arg5[%c1_523, %c0_524, %c18_525] : memref<3x4x360xf32, #tpu.memory_space<vmem>>, vector<1x1x324xf32>
    %856 = vector.shape_cast %855 : vector<1x1x324xf32> to vector<324xf32>
    %c112 = arith.constant 112 : index
    %857 = memref.load %arg2[%c112] : memref<144xf32, #tpu.memory_space<smem>>
    %858 = vector.broadcast %857 : f32 to vector<324xf32>
    %859 = arith.mulf %858, %856 : vector<324xf32>
    %860 = arith.addf %854, %859 : vector<324xf32>
    %c2_526 = arith.constant 2 : index
    %c0_527 = arith.constant 0 : index
    %c18_528 = arith.constant 18 : index
    %861 = vector.load %arg5[%c2_526, %c0_527, %c18_528] : memref<3x4x360xf32, #tpu.memory_space<vmem>>, vector<1x1x324xf32>
    %862 = vector.shape_cast %861 : vector<1x1x324xf32> to vector<324xf32>
    %c113 = arith.constant 113 : index
    %863 = memref.load %arg2[%c113] : memref<144xf32, #tpu.memory_space<smem>>
    %864 = vector.broadcast %863 : f32 to vector<324xf32>
    %865 = arith.mulf %864, %862 : vector<324xf32>
    %866 = arith.addf %860, %865 : vector<324xf32>
    %c0_529 = arith.constant 0 : index
    %c0_530 = arith.constant 0 : index
    %c36_531 = arith.constant 36 : index
    %867 = vector.load %arg5[%c0_529, %c0_530, %c36_531] : memref<3x4x360xf32, #tpu.memory_space<vmem>>, vector<1x1x324xf32>
    %868 = vector.shape_cast %867 : vector<1x1x324xf32> to vector<324xf32>
    %c114 = arith.constant 114 : index
    %869 = memref.load %arg2[%c114] : memref<144xf32, #tpu.memory_space<smem>>
    %870 = vector.broadcast %869 : f32 to vector<324xf32>
    %871 = arith.mulf %870, %868 : vector<324xf32>
    %872 = arith.addf %866, %871 : vector<324xf32>
    %c1_532 = arith.constant 1 : index
    %c0_533 = arith.constant 0 : index
    %c36_534 = arith.constant 36 : index
    %873 = vector.load %arg5[%c1_532, %c0_533, %c36_534] : memref<3x4x360xf32, #tpu.memory_space<vmem>>, vector<1x1x324xf32>
    %874 = vector.shape_cast %873 : vector<1x1x324xf32> to vector<324xf32>
    %c115 = arith.constant 115 : index
    %875 = memref.load %arg2[%c115] : memref<144xf32, #tpu.memory_space<smem>>
    %876 = vector.broadcast %875 : f32 to vector<324xf32>
    %877 = arith.mulf %876, %874 : vector<324xf32>
    %878 = arith.addf %872, %877 : vector<324xf32>
    %c2_535 = arith.constant 2 : index
    %c0_536 = arith.constant 0 : index
    %c36_537 = arith.constant 36 : index
    %879 = vector.load %arg5[%c2_535, %c0_536, %c36_537] : memref<3x4x360xf32, #tpu.memory_space<vmem>>, vector<1x1x324xf32>
    %880 = vector.shape_cast %879 : vector<1x1x324xf32> to vector<324xf32>
    %c116 = arith.constant 116 : index
    %881 = memref.load %arg2[%c116] : memref<144xf32, #tpu.memory_space<smem>>
    %882 = vector.broadcast %881 : f32 to vector<324xf32>
    %883 = arith.mulf %882, %880 : vector<324xf32>
    %884 = arith.addf %878, %883 : vector<324xf32>
    %c0_538 = arith.constant 0 : index
    %c1_539 = arith.constant 1 : index
    %c0_540 = arith.constant 0 : index
    %885 = vector.load %arg5[%c0_538, %c1_539, %c0_540] : memref<3x4x360xf32, #tpu.memory_space<vmem>>, vector<1x1x324xf32>
    %886 = vector.shape_cast %885 : vector<1x1x324xf32> to vector<324xf32>
    %c117 = arith.constant 117 : index
    %887 = memref.load %arg2[%c117] : memref<144xf32, #tpu.memory_space<smem>>
    %888 = vector.broadcast %887 : f32 to vector<324xf32>
    %889 = arith.mulf %888, %886 : vector<324xf32>
    %890 = arith.addf %884, %889 : vector<324xf32>
    %c1_541 = arith.constant 1 : index
    %c1_542 = arith.constant 1 : index
    %c0_543 = arith.constant 0 : index
    %891 = vector.load %arg5[%c1_541, %c1_542, %c0_543] : memref<3x4x360xf32, #tpu.memory_space<vmem>>, vector<1x1x324xf32>
    %892 = vector.shape_cast %891 : vector<1x1x324xf32> to vector<324xf32>
    %c118 = arith.constant 118 : index
    %893 = memref.load %arg2[%c118] : memref<144xf32, #tpu.memory_space<smem>>
    %894 = vector.broadcast %893 : f32 to vector<324xf32>
    %895 = arith.mulf %894, %892 : vector<324xf32>
    %896 = arith.addf %890, %895 : vector<324xf32>
    %c2_544 = arith.constant 2 : index
    %c1_545 = arith.constant 1 : index
    %c0_546 = arith.constant 0 : index
    %897 = vector.load %arg5[%c2_544, %c1_545, %c0_546] : memref<3x4x360xf32, #tpu.memory_space<vmem>>, vector<1x1x324xf32>
    %898 = vector.shape_cast %897 : vector<1x1x324xf32> to vector<324xf32>
    %c119 = arith.constant 119 : index
    %899 = memref.load %arg2[%c119] : memref<144xf32, #tpu.memory_space<smem>>
    %900 = vector.broadcast %899 : f32 to vector<324xf32>
    %901 = arith.mulf %900, %898 : vector<324xf32>
    %902 = arith.addf %896, %901 : vector<324xf32>
    %c0_547 = arith.constant 0 : index
    %c1_548 = arith.constant 1 : index
    %c18_549 = arith.constant 18 : index
    %903 = vector.load %arg5[%c0_547, %c1_548, %c18_549] : memref<3x4x360xf32, #tpu.memory_space<vmem>>, vector<1x1x324xf32>
    %904 = vector.shape_cast %903 : vector<1x1x324xf32> to vector<324xf32>
    %c120 = arith.constant 120 : index
    %905 = memref.load %arg2[%c120] : memref<144xf32, #tpu.memory_space<smem>>
    %906 = vector.broadcast %905 : f32 to vector<324xf32>
    %907 = arith.mulf %906, %904 : vector<324xf32>
    %908 = arith.addf %902, %907 : vector<324xf32>
    %c1_550 = arith.constant 1 : index
    %c1_551 = arith.constant 1 : index
    %c18_552 = arith.constant 18 : index
    %909 = vector.load %arg5[%c1_550, %c1_551, %c18_552] : memref<3x4x360xf32, #tpu.memory_space<vmem>>, vector<1x1x324xf32>
    %910 = vector.shape_cast %909 : vector<1x1x324xf32> to vector<324xf32>
    %c121 = arith.constant 121 : index
    %911 = memref.load %arg2[%c121] : memref<144xf32, #tpu.memory_space<smem>>
    %912 = vector.broadcast %911 : f32 to vector<324xf32>
    %913 = arith.mulf %912, %910 : vector<324xf32>
    %914 = arith.addf %908, %913 : vector<324xf32>
    %c2_553 = arith.constant 2 : index
    %c1_554 = arith.constant 1 : index
    %c18_555 = arith.constant 18 : index
    %915 = vector.load %arg5[%c2_553, %c1_554, %c18_555] : memref<3x4x360xf32, #tpu.memory_space<vmem>>, vector<1x1x324xf32>
    %916 = vector.shape_cast %915 : vector<1x1x324xf32> to vector<324xf32>
    %c122 = arith.constant 122 : index
    %917 = memref.load %arg2[%c122] : memref<144xf32, #tpu.memory_space<smem>>
    %918 = vector.broadcast %917 : f32 to vector<324xf32>
    %919 = arith.mulf %918, %916 : vector<324xf32>
    %920 = arith.addf %914, %919 : vector<324xf32>
    %c0_556 = arith.constant 0 : index
    %c1_557 = arith.constant 1 : index
    %c36_558 = arith.constant 36 : index
    %921 = vector.load %arg5[%c0_556, %c1_557, %c36_558] : memref<3x4x360xf32, #tpu.memory_space<vmem>>, vector<1x1x324xf32>
    %922 = vector.shape_cast %921 : vector<1x1x324xf32> to vector<324xf32>
    %c123 = arith.constant 123 : index
    %923 = memref.load %arg2[%c123] : memref<144xf32, #tpu.memory_space<smem>>
    %924 = vector.broadcast %923 : f32 to vector<324xf32>
    %925 = arith.mulf %924, %922 : vector<324xf32>
    %926 = arith.addf %920, %925 : vector<324xf32>
    %c1_559 = arith.constant 1 : index
    %c1_560 = arith.constant 1 : index
    %c36_561 = arith.constant 36 : index
    %927 = vector.load %arg5[%c1_559, %c1_560, %c36_561] : memref<3x4x360xf32, #tpu.memory_space<vmem>>, vector<1x1x324xf32>
    %928 = vector.shape_cast %927 : vector<1x1x324xf32> to vector<324xf32>
    %c124 = arith.constant 124 : index
    %929 = memref.load %arg2[%c124] : memref<144xf32, #tpu.memory_space<smem>>
    %930 = vector.broadcast %929 : f32 to vector<324xf32>
    %931 = arith.mulf %930, %928 : vector<324xf32>
    %932 = arith.addf %926, %931 : vector<324xf32>
    %c2_562 = arith.constant 2 : index
    %c1_563 = arith.constant 1 : index
    %c36_564 = arith.constant 36 : index
    %933 = vector.load %arg5[%c2_562, %c1_563, %c36_564] : memref<3x4x360xf32, #tpu.memory_space<vmem>>, vector<1x1x324xf32>
    %934 = vector.shape_cast %933 : vector<1x1x324xf32> to vector<324xf32>
    %c125 = arith.constant 125 : index
    %935 = memref.load %arg2[%c125] : memref<144xf32, #tpu.memory_space<smem>>
    %936 = vector.broadcast %935 : f32 to vector<324xf32>
    %937 = arith.mulf %936, %934 : vector<324xf32>
    %938 = arith.addf %932, %937 : vector<324xf32>
    %c0_565 = arith.constant 0 : index
    %c2_566 = arith.constant 2 : index
    %c0_567 = arith.constant 0 : index
    %939 = vector.load %arg5[%c0_565, %c2_566, %c0_567] : memref<3x4x360xf32, #tpu.memory_space<vmem>>, vector<1x1x324xf32>
    %940 = vector.shape_cast %939 : vector<1x1x324xf32> to vector<324xf32>
    %c126_568 = arith.constant 126 : index
    %941 = memref.load %arg2[%c126_568] : memref<144xf32, #tpu.memory_space<smem>>
    %942 = vector.broadcast %941 : f32 to vector<324xf32>
    %943 = arith.mulf %942, %940 : vector<324xf32>
    %944 = arith.addf %938, %943 : vector<324xf32>
    %c1_569 = arith.constant 1 : index
    %c2_570 = arith.constant 2 : index
    %c0_571 = arith.constant 0 : index
    %945 = vector.load %arg5[%c1_569, %c2_570, %c0_571] : memref<3x4x360xf32, #tpu.memory_space<vmem>>, vector<1x1x324xf32>
    %946 = vector.shape_cast %945 : vector<1x1x324xf32> to vector<324xf32>
    %c127_572 = arith.constant 127 : index
    %947 = memref.load %arg2[%c127_572] : memref<144xf32, #tpu.memory_space<smem>>
    %948 = vector.broadcast %947 : f32 to vector<324xf32>
    %949 = arith.mulf %948, %946 : vector<324xf32>
    %950 = arith.addf %944, %949 : vector<324xf32>
    %c2_573 = arith.constant 2 : index
    %c2_574 = arith.constant 2 : index
    %c0_575 = arith.constant 0 : index
    %951 = vector.load %arg5[%c2_573, %c2_574, %c0_575] : memref<3x4x360xf32, #tpu.memory_space<vmem>>, vector<1x1x324xf32>
    %952 = vector.shape_cast %951 : vector<1x1x324xf32> to vector<324xf32>
    %c128_576 = arith.constant 128 : index
    %953 = memref.load %arg2[%c128_576] : memref<144xf32, #tpu.memory_space<smem>>
    %954 = vector.broadcast %953 : f32 to vector<324xf32>
    %955 = arith.mulf %954, %952 : vector<324xf32>
    %956 = arith.addf %950, %955 : vector<324xf32>
    %c0_577 = arith.constant 0 : index
    %c2_578 = arith.constant 2 : index
    %c18_579 = arith.constant 18 : index
    %957 = vector.load %arg5[%c0_577, %c2_578, %c18_579] : memref<3x4x360xf32, #tpu.memory_space<vmem>>, vector<1x1x324xf32>
    %958 = vector.shape_cast %957 : vector<1x1x324xf32> to vector<324xf32>
    %c129 = arith.constant 129 : index
    %959 = memref.load %arg2[%c129] : memref<144xf32, #tpu.memory_space<smem>>
    %960 = vector.broadcast %959 : f32 to vector<324xf32>
    %961 = arith.mulf %960, %958 : vector<324xf32>
    %962 = arith.addf %956, %961 : vector<324xf32>
    %c1_580 = arith.constant 1 : index
    %c2_581 = arith.constant 2 : index
    %c18_582 = arith.constant 18 : index
    %963 = vector.load %arg5[%c1_580, %c2_581, %c18_582] : memref<3x4x360xf32, #tpu.memory_space<vmem>>, vector<1x1x324xf32>
    %964 = vector.shape_cast %963 : vector<1x1x324xf32> to vector<324xf32>
    %c130 = arith.constant 130 : index
    %965 = memref.load %arg2[%c130] : memref<144xf32, #tpu.memory_space<smem>>
    %966 = vector.broadcast %965 : f32 to vector<324xf32>
    %967 = arith.mulf %966, %964 : vector<324xf32>
    %968 = arith.addf %962, %967 : vector<324xf32>
    %c2_583 = arith.constant 2 : index
    %c2_584 = arith.constant 2 : index
    %c18_585 = arith.constant 18 : index
    %969 = vector.load %arg5[%c2_583, %c2_584, %c18_585] : memref<3x4x360xf32, #tpu.memory_space<vmem>>, vector<1x1x324xf32>
    %970 = vector.shape_cast %969 : vector<1x1x324xf32> to vector<324xf32>
    %c131 = arith.constant 131 : index
    %971 = memref.load %arg2[%c131] : memref<144xf32, #tpu.memory_space<smem>>
    %972 = vector.broadcast %971 : f32 to vector<324xf32>
    %973 = arith.mulf %972, %970 : vector<324xf32>
    %974 = arith.addf %968, %973 : vector<324xf32>
    %c0_586 = arith.constant 0 : index
    %c2_587 = arith.constant 2 : index
    %c36_588 = arith.constant 36 : index
    %975 = vector.load %arg5[%c0_586, %c2_587, %c36_588] : memref<3x4x360xf32, #tpu.memory_space<vmem>>, vector<1x1x324xf32>
    %976 = vector.shape_cast %975 : vector<1x1x324xf32> to vector<324xf32>
    %c132 = arith.constant 132 : index
    %977 = memref.load %arg2[%c132] : memref<144xf32, #tpu.memory_space<smem>>
    %978 = vector.broadcast %977 : f32 to vector<324xf32>
    %979 = arith.mulf %978, %976 : vector<324xf32>
    %980 = arith.addf %974, %979 : vector<324xf32>
    %c1_589 = arith.constant 1 : index
    %c2_590 = arith.constant 2 : index
    %c36_591 = arith.constant 36 : index
    %981 = vector.load %arg5[%c1_589, %c2_590, %c36_591] : memref<3x4x360xf32, #tpu.memory_space<vmem>>, vector<1x1x324xf32>
    %982 = vector.shape_cast %981 : vector<1x1x324xf32> to vector<324xf32>
    %c133 = arith.constant 133 : index
    %983 = memref.load %arg2[%c133] : memref<144xf32, #tpu.memory_space<smem>>
    %984 = vector.broadcast %983 : f32 to vector<324xf32>
    %985 = arith.mulf %984, %982 : vector<324xf32>
    %986 = arith.addf %980, %985 : vector<324xf32>
    %c2_592 = arith.constant 2 : index
    %c2_593 = arith.constant 2 : index
    %c36_594 = arith.constant 36 : index
    %987 = vector.load %arg5[%c2_592, %c2_593, %c36_594] : memref<3x4x360xf32, #tpu.memory_space<vmem>>, vector<1x1x324xf32>
    %988 = vector.shape_cast %987 : vector<1x1x324xf32> to vector<324xf32>
    %c134 = arith.constant 134 : index
    %989 = memref.load %arg2[%c134] : memref<144xf32, #tpu.memory_space<smem>>
    %990 = vector.broadcast %989 : f32 to vector<324xf32>
    %991 = arith.mulf %990, %988 : vector<324xf32>
    %992 = arith.addf %986, %991 : vector<324xf32>
    %c0_595 = arith.constant 0 : index
    %c3_596 = arith.constant 3 : index
    %c0_597 = arith.constant 0 : index
    %993 = vector.load %arg5[%c0_595, %c3_596, %c0_597] : memref<3x4x360xf32, #tpu.memory_space<vmem>>, vector<1x1x324xf32>
    %994 = vector.shape_cast %993 : vector<1x1x324xf32> to vector<324xf32>
    %c135 = arith.constant 135 : index
    %995 = memref.load %arg2[%c135] : memref<144xf32, #tpu.memory_space<smem>>
    %996 = vector.broadcast %995 : f32 to vector<324xf32>
    %997 = arith.mulf %996, %994 : vector<324xf32>
    %998 = arith.addf %992, %997 : vector<324xf32>
    %c1_598 = arith.constant 1 : index
    %c3_599 = arith.constant 3 : index
    %c0_600 = arith.constant 0 : index
    %999 = vector.load %arg5[%c1_598, %c3_599, %c0_600] : memref<3x4x360xf32, #tpu.memory_space<vmem>>, vector<1x1x324xf32>
    %1000 = vector.shape_cast %999 : vector<1x1x324xf32> to vector<324xf32>
    %c136 = arith.constant 136 : index
    %1001 = memref.load %arg2[%c136] : memref<144xf32, #tpu.memory_space<smem>>
    %1002 = vector.broadcast %1001 : f32 to vector<324xf32>
    %1003 = arith.mulf %1002, %1000 : vector<324xf32>
    %1004 = arith.addf %998, %1003 : vector<324xf32>
    %c2_601 = arith.constant 2 : index
    %c3_602 = arith.constant 3 : index
    %c0_603 = arith.constant 0 : index
    %1005 = vector.load %arg5[%c2_601, %c3_602, %c0_603] : memref<3x4x360xf32, #tpu.memory_space<vmem>>, vector<1x1x324xf32>
    %1006 = vector.shape_cast %1005 : vector<1x1x324xf32> to vector<324xf32>
    %c137 = arith.constant 137 : index
    %1007 = memref.load %arg2[%c137] : memref<144xf32, #tpu.memory_space<smem>>
    %1008 = vector.broadcast %1007 : f32 to vector<324xf32>
    %1009 = arith.mulf %1008, %1006 : vector<324xf32>
    %1010 = arith.addf %1004, %1009 : vector<324xf32>
    %c0_604 = arith.constant 0 : index
    %c3_605 = arith.constant 3 : index
    %c18_606 = arith.constant 18 : index
    %1011 = vector.load %arg5[%c0_604, %c3_605, %c18_606] : memref<3x4x360xf32, #tpu.memory_space<vmem>>, vector<1x1x324xf32>
    %1012 = vector.shape_cast %1011 : vector<1x1x324xf32> to vector<324xf32>
    %c138 = arith.constant 138 : index
    %1013 = memref.load %arg2[%c138] : memref<144xf32, #tpu.memory_space<smem>>
    %1014 = vector.broadcast %1013 : f32 to vector<324xf32>
    %1015 = arith.mulf %1014, %1012 : vector<324xf32>
    %1016 = arith.addf %1010, %1015 : vector<324xf32>
    %c1_607 = arith.constant 1 : index
    %c3_608 = arith.constant 3 : index
    %c18_609 = arith.constant 18 : index
    %1017 = vector.load %arg5[%c1_607, %c3_608, %c18_609] : memref<3x4x360xf32, #tpu.memory_space<vmem>>, vector<1x1x324xf32>
    %1018 = vector.shape_cast %1017 : vector<1x1x324xf32> to vector<324xf32>
    %c139 = arith.constant 139 : index
    %1019 = memref.load %arg2[%c139] : memref<144xf32, #tpu.memory_space<smem>>
    %1020 = vector.broadcast %1019 : f32 to vector<324xf32>
    %1021 = arith.mulf %1020, %1018 : vector<324xf32>
    %1022 = arith.addf %1016, %1021 : vector<324xf32>
    %c2_610 = arith.constant 2 : index
    %c3_611 = arith.constant 3 : index
    %c18_612 = arith.constant 18 : index
    %1023 = vector.load %arg5[%c2_610, %c3_611, %c18_612] : memref<3x4x360xf32, #tpu.memory_space<vmem>>, vector<1x1x324xf32>
    %1024 = vector.shape_cast %1023 : vector<1x1x324xf32> to vector<324xf32>
    %c140 = arith.constant 140 : index
    %1025 = memref.load %arg2[%c140] : memref<144xf32, #tpu.memory_space<smem>>
    %1026 = vector.broadcast %1025 : f32 to vector<324xf32>
    %1027 = arith.mulf %1026, %1024 : vector<324xf32>
    %1028 = arith.addf %1022, %1027 : vector<324xf32>
    %c0_613 = arith.constant 0 : index
    %c3_614 = arith.constant 3 : index
    %c36_615 = arith.constant 36 : index
    %1029 = vector.load %arg5[%c0_613, %c3_614, %c36_615] : memref<3x4x360xf32, #tpu.memory_space<vmem>>, vector<1x1x324xf32>
    %1030 = vector.shape_cast %1029 : vector<1x1x324xf32> to vector<324xf32>
    %c141 = arith.constant 141 : index
    %1031 = memref.load %arg2[%c141] : memref<144xf32, #tpu.memory_space<smem>>
    %1032 = vector.broadcast %1031 : f32 to vector<324xf32>
    %1033 = arith.mulf %1032, %1030 : vector<324xf32>
    %1034 = arith.addf %1028, %1033 : vector<324xf32>
    %c1_616 = arith.constant 1 : index
    %c3_617 = arith.constant 3 : index
    %c36_618 = arith.constant 36 : index
    %1035 = vector.load %arg5[%c1_616, %c3_617, %c36_618] : memref<3x4x360xf32, #tpu.memory_space<vmem>>, vector<1x1x324xf32>
    %1036 = vector.shape_cast %1035 : vector<1x1x324xf32> to vector<324xf32>
    %c142 = arith.constant 142 : index
    %1037 = memref.load %arg2[%c142] : memref<144xf32, #tpu.memory_space<smem>>
    %1038 = vector.broadcast %1037 : f32 to vector<324xf32>
    %1039 = arith.mulf %1038, %1036 : vector<324xf32>
    %1040 = arith.addf %1034, %1039 : vector<324xf32>
    %c2_619 = arith.constant 2 : index
    %c3_620 = arith.constant 3 : index
    %c36_621 = arith.constant 36 : index
    %1041 = vector.load %arg5[%c2_619, %c3_620, %c36_621] : memref<3x4x360xf32, #tpu.memory_space<vmem>>, vector<1x1x324xf32>
    %1042 = vector.shape_cast %1041 : vector<1x1x324xf32> to vector<324xf32>
    %c143 = arith.constant 143 : index
    %1043 = memref.load %arg2[%c143] : memref<144xf32, #tpu.memory_space<smem>>
    %1044 = vector.broadcast %1043 : f32 to vector<324xf32>
    %1045 = arith.mulf %1044, %1042 : vector<324xf32>
    %1046 = arith.addf %1040, %1045 : vector<324xf32>
    %c0_622 = arith.constant 0 : index
    %c3_623 = arith.constant 3 : index
    %c0_624 = arith.constant 0 : index
    %1047 = vector.load %arg3[%c0_622, %c3_623, %c0_624] : memref<1x4x324xf32, #tpu.memory_space<vmem>>, vector<1x1x324xf32>
    %1048 = vector.shape_cast %1047 : vector<1x1x324xf32> to vector<324xf32>
    %1049 = vector.shape_cast %1046 : vector<324xf32> to vector<1x1x324xf32>
    tpu.vector_store %arg3[%c0_622, %c3_623, %c0_624], %1049 {strides = array<i32>} : memref<1x4x324xf32, #tpu.memory_space<vmem>>, vector<1x1x324xf32>,
    %c0_625 = arith.constant 0 : index
    %c0_626 = arith.constant 0 : index
    %c0_627 = arith.constant 0 : index
    %1050 = vector.load %arg3[%c0_625, %c0_626, %c0_627] : memref<1x4x324xf32, #tpu.memory_space<vmem>>, vector<1x4x324xf32>
    %1051 = vector.shape_cast %1050 : vector<1x4x324xf32> to vector<4x324xf32>
    %cst_628 = arith.constant dense<0.000000e+00> : vector<4xf32>
    %1052 = vector.multi_reduction <add>, %1051, %cst_628 [1] : vector<4x324xf32> to vector<4xf32>
    %1053 = vector.shape_cast %1052 : vector<4xf32> to vector<4x1xf32>
    %c0_629 = arith.constant 0 : index
    %c0_630 = arith.constant 0 : index
    %c0_631 = arith.constant 0 : index
    %1054 = vector.load %arg4[%c0_629, %c0_630, %c0_631] : memref<1x4x2xf32, #tpu.memory_space<vmem>>, vector<1x4x1xf32>
    %1055 = vector.shape_cast %1054 : vector<1x4x1xf32> to vector<4x1xf32>
    %1056 = vector.shape_cast %1053 : vector<4x1xf32> to vector<1x4x1xf32>
    tpu.vector_store %arg4[%c0_629, %c0_630, %c0_631], %1056 {strides = array<i32>} : memref<1x4x2xf32, #tpu.memory_space<vmem>>, vector<1x4x1xf32>,
    %1057 = arith.mulf %1051, %1051 : vector<4x324xf32>
    %cst_632 = arith.constant dense<0.000000e+00> : vector<4xf32>
    %1058 = vector.multi_reduction <add>, %1057, %cst_632 [1] : vector<4x324xf32> to vector<4xf32>
    %1059 = vector.shape_cast %1058 : vector<4xf32> to vector<4x1xf32>
    %c0_633 = arith.constant 0 : index
    %c0_634 = arith.constant 0 : index
    %c1_635 = arith.constant 1 : index
    %1060 = vector.load %arg4[%c0_633, %c0_634, %c1_635] : memref<1x4x2xf32, #tpu.memory_space<vmem>>, vector<1x4x1xf32>
    %1061 = vector.shape_cast %1060 : vector<1x4x1xf32> to vector<4x1xf32>
    %1062 = vector.shape_cast %1059 : vector<4x1xf32> to vector<1x4x1xf32>
    tpu.vector_store %arg4[%c0_633, %c0_634, %c1_635], %1062 {strides = array<i32>} : memref<1x4x2xf32, #tpu.memory_space<vmem>>, vector<1x4x1xf32>,
    return
  }
  func.func @transform_0(%arg0: i32) -> (i32, i32, i32, i32) {
    %c0_i32 = arith.constant 0 : i32
    %c0_i32_0 = arith.constant 0 : i32
    %c0_i32_1 = arith.constant 0 : i32
    %c0_i32_2 = arith.constant 0 : i32
    return %arg0, %c0_i32, %c0_i32_0, %c0_i32_1 : i32, i32, i32, i32
  }
  func.func @transform_1(%arg0: i32) -> i32 {
    %c0_i32 = arith.constant 0 : i32
    %c0_i32_0 = arith.constant 0 : i32
    return %c0_i32 : i32
  }
  func.func @transform_2(%arg0: i32) -> (i32, i32, i32) {
    %c0_i32 = arith.constant 0 : i32
    %c0_i32_0 = arith.constant 0 : i32
    %c0_i32_1 = arith.constant 0 : i32
    return %arg0, %c0_i32, %c0_i32_0 : i32, i32, i32
  }
  func.func @transform_3(%arg0: i32) -> (i32, i32, i32) {
    %c0_i32 = arith.constant 0 : i32
    %c0_i32_0 = arith.constant 0 : i32
    %c0_i32_1 = arith.constant 0 : i32
    return %arg0, %c0_i32, %c0_i32_0 : i32, i32, i32
  }
}

module attributes {stable_mosaic.version = 11 : i64} {
  func.func @_bn_relu_kernel(%arg0: i32, %arg1: memref<8x324xf32, #tpu.memory_space<vmem>>, %arg2: memref<8x1xf32, #tpu.memory_space<vmem>>, %arg3: memref<8x1xf32, #tpu.memory_space<vmem>>, %arg4: memref<8x324xf32, #tpu.memory_space<vmem>>) attributes {dimension_semantics = [#tpu.dimension_semantics<parallel>], iteration_bounds = array<i64: 1>, scalar_prefetch = 0 : i64, scratch_operands = 0 : i64, tpu.core_type = #tpu.core_type<tc>, window_params = [{transform_indices = @transform_0, window_bounds = array<i64: 8, 324>}, {transform_indices = @transform_1, window_bounds = array<i64: 8, 1>}, {transform_indices = @transform_2, window_bounds = array<i64: 8, 1>}, {transform_indices = @transform_3, window_bounds = array<i64: 8, 324>}]} {
    %c0 = arith.constant 0 : index
    %c0_0 = arith.constant 0 : index
    %0 = vector.load %arg1[%c0, %c0_0] : memref<8x324xf32, #tpu.memory_space<vmem>>, vector<8x324xf32>
    %c0_1 = arith.constant 0 : index
    %c0_2 = arith.constant 0 : index
    %1 = vector.load %arg2[%c0_1, %c0_2] : memref<8x1xf32, #tpu.memory_space<vmem>>, vector<8x1xf32>
    %2 = vector.broadcast %1 : vector<8x1xf32> to vector<8x324xf32>
    %3 = arith.mulf %0, %2 : vector<8x324xf32>
    %c0_3 = arith.constant 0 : index
    %c0_4 = arith.constant 0 : index
    %4 = vector.load %arg3[%c0_3, %c0_4] : memref<8x1xf32, #tpu.memory_space<vmem>>, vector<8x1xf32>
    %5 = vector.broadcast %4 : vector<8x1xf32> to vector<8x324xf32>
    %6 = arith.addf %3, %5 : vector<8x324xf32>
    %cst = arith.constant 0.000000e+00 : f32
    %7 = vector.broadcast %cst : f32 to vector<8x324xf32>
    %8 = arith.maximumf %6, %7 : vector<8x324xf32>
    %c0_5 = arith.constant 0 : index
    %c0_6 = arith.constant 0 : index
    %9 = vector.load %arg4[%c0_5, %c0_6] : memref<8x324xf32, #tpu.memory_space<vmem>>, vector<8x324xf32>
    tpu.vector_store %arg4[%c0_5, %c0_6], %8 {strides = array<i32>} : memref<8x324xf32, #tpu.memory_space<vmem>>, vector<8x324xf32>,
    return
  }
  func.func @transform_0(%arg0: i32) -> (i32, i32) {
    %c0_i32 = arith.constant 0 : i32
    %c0_i32_0 = arith.constant 0 : i32
    return %arg0, %c0_i32 : i32, i32
  }
  func.func @transform_1(%arg0: i32) -> (i32, i32) {
    %c0_i32 = arith.constant 0 : i32
    %c0_i32_0 = arith.constant 0 : i32
    return %arg0, %c0_i32 : i32, i32
  }
  func.func @transform_2(%arg0: i32) -> (i32, i32) {
    %c0_i32 = arith.constant 0 : i32
    %c0_i32_0 = arith.constant 0 : i32
    return %arg0, %c0_i32 : i32, i32
  }
  func.func @transform_3(%arg0: i32) -> (i32, i32) {
    %c0_i32 = arith.constant 0 : i32
    %c0_i32_0 = arith.constant 0 : i32
    return %arg0, %c0_i32 : i32, i32
  }
}

</mosaic_0001>

<llo_original>
// kernel: tile.18
$region0: #{tile.18}
  #allocation0 [shape = 's32[1]{0}', space=sflag, size = 0x4, scoped, tag = 'scoped memory for tile.18']
  %s0 = inlined_call_operand.vmem [shape: f32[4], index: 0, kind: input, shape index: {}]
  %s1 = inlined_call_operand.vmem [shape: f32[2,4], index: 1, kind: output, shape index: {}]
  // Predicated region
  $region2: #{tile.18} parent=0 // pred_check
    _
  $region3: #{tile.18} parent=0 // pred_check_branch
    %3 = sbr.rel (0) target = $region5
  $region4: #{tile.18} parent=0 // pred_region
    _
  $region5: #{tile.18} parent=0 // pred_fallthru
    _
  %v4 = vld [vmem:[%s0] ss:$0 sm:$0xff]
  %5 = vst [vmem:[%s1] sm:$0x3] %v4

// kernel: tile.0
$region0: #{tile.0}
  %s0 = inlined_call_operand.vmem [shape: f32[2,4], index: 0, kind: input, shape index: {}]
  %s1 = inlined_call_operand.vmem [shape: f32[8,1], index: 1, kind: output, shape index: {}]
  $region1: #{tile.0} parent=0
    #allocation0 [shape = 'u8[4096]{0}', space=vmem, size = 0x1000, scoped, tag = 'scoped mem for input reshape']
    %s3 = sshllo.u32 0, 2
    %v4 = vld [vmem:[%s0] sm:%s3]
    %5 = vst [vmem:[#allocation0] sm:%s3] %v4
    %v6 = vld [vmem:[#allocation0] sm:$0x3]
    %vm7 = vcmask 7168
    %8 = vst.msk [vmem:[%s1] ss:$4 sm:$0x3] %vm7, %v6
    %v9 = vld [vmem:[#allocation0] sm:$0x3]
    %10 = vrot.lane.b32.xlu0 %v9, 127
    %v11 = vpop.permute.xlu0 %10
    %vm12 = vcmask 7168
    %s13 = scalar_lea.vmem %s1, 1
    %14 = vst.msk [vmem:[%s13] ss:$4 sm:$0x3] %vm12, %v11
    %v15 = vld [vmem:[#allocation0] sm:$0x3]
    %16 = vrot.lane.b32.xlu0 %v15, 126
    %v17 = vpop.permute.xlu0 %16
    %vm18 = vcmask 7168
    %s19 = scalar_lea.vmem %s1, 2
    %20 = vst.msk [vmem:[%s19] ss:$4 sm:$0x3] %vm18, %v17
    %v21 = vld [vmem:[#allocation0] sm:$0x3]
    %22 = vrot.lane.b32.xlu0 %v21, 125
    %v23 = vpop.permute.xlu0 %22
    %vm24 = vcmask 7168
    %s25 = scalar_lea.vmem %s1, 3
    %26 = vst.msk [vmem:[%s25] ss:$4 sm:$0x3] %vm24, %v23

// kernel: convolution_block.3
$region0: #{convolution_block.3}
  #allocation0 [shape = 'u32[]', space=smem, size = 0x4, offset = 0x4, fixed_abs, tag = 'smem constant byte address 0x4 - core index']
  #allocation1 [shape = 'u32[144,128]{1,0:T(1,128)}', space=vmem, size = 0x12000, scoped, tag = 'internal scratch']
  %s0 = inlined_call_operand.vmem [shape: f32[8,324], index: 0, kind: input, shape index: {}, may-alias: {0,3}]
  %s1 = inlined_call_operand.vmem [shape: f32[8,1], index: 1, kind: input, shape index: {}]
  %s2 = inlined_call_operand.vmem [shape: f32[8,1], index: 2, kind: input, shape index: {}]
  %s3 = inlined_call_operand.vmem [shape: f32[8,324], index: 3, kind: output, shape index: {}, may-alias: {0,3}]
  %s4 = sld [smem:[#allocation0]]
  $region22: #{convolution_block.3} parent=0
    _
  %s6 = ssub.s32 1, %s4
  %s7 = scalar_select 0, %s6, %s4
  // Predicated region
  $region2: #{convolution_block.3} parent=0 // pred_check
    _
  $region3: #{convolution_block.3} parent=0 // pred_check_branch
    %9 = sbr.rel (0) target = $region5
  $region4: #{convolution_block.3} parent=0 // pred_region
    _
  $region5: #{convolution_block.3} parent=0 // pred_fallthru
    _
  // Predicated region
  $region6: #{convolution_block.3} parent=0 // pred_check
    _
  $region7: #{convolution_block.3} parent=0 // pred_check_branch
    %11 = sbr.rel (0) target = $region9
  $region8: #{convolution_block.3} parent=0 // pred_region
    _
  $region9: #{convolution_block.3} parent=0 // pred_fallthru
    _
  // Predicated region
  $region10: #{convolution_block.3} parent=0 // pred_check
    _
  $region11: #{convolution_block.3} parent=0 // pred_check_branch
    %13 = sbr.rel (0) target = $region13
  $region12: #{convolution_block.3} parent=0 // pred_region
    _
  $region13: #{convolution_block.3} parent=0 // pred_fallthru
    _
  %v14 = vld [vmem:[%s0] sm:$0xff]
  %v15 = vld [vmem:[%s0 + $0x8] sm:$0xff]
  %v16 = vld [vmem:[%s0 + $0x10] sm:$0xff]
  %v17 = vld [vmem:[%s1] sm:$0xff]
  %19 = vset.pattern.permute.xlu0 0
  %20 = vperm.xlu0 %19, %v17
  %v21 = vpop.permute.xlu0 %20
  %v23 = vmul.f32 %v14, %v21
  %v24 = vmul.f32 %v15, %v21
  %v25 = vmul.f32 %v16, %v21
  %v26 = vld [vmem:[%s2] sm:$0xff]
  %28 = vset.pattern.permute.xlu0 0
  %29 = vperm.xlu0 %28, %v26
  %v30 = vpop.permute.xlu0 %29
  %v32 = vadd.f32 %v23, %v30
  %v33 = vadd.f32 %v24, %v30
  %v34 = vadd.f32 %v25, %v30
  %v35 = vmax.f32 %v32, 0.0
  %v36 = vmax.f32 %v33, 0.0
  %v37 = vmax.f32 %v34, 0.0
  %38 = vst [vmem:[%s3] sm:$0xff] %v35
  %39 = vst [vmem:[%s3 + $0x8] sm:$0xff] %v36
  %vm40 = vcmask 556032
  %41 = vst.msk [vmem:[%s3 + $0x10] sm:$0xff] %vm40, %v37
  // Predicated region
  $region14: #{convolution_block.3} parent=0 // pred_check
    _
  $region15: #{convolution_block.3} parent=0 // pred_check_branch
    %43 = sbr.rel (0) target = $region17
  $region16: #{convolution_block.3} parent=0 // pred_region
    _
  $region17: #{convolution_block.3} parent=0 // pred_fallthru
    _
  // Predicated region
  $region18: #{convolution_block.3} parent=0 // pred_check
    _
  $region19: #{convolution_block.3} parent=0 // pred_check_branch
    %45 = sbr.rel (0) target = $region21
  $region20: #{convolution_block.3} parent=0 // pred_region
    _
  $region21: #{convolution_block.3} parent=0 // pred_fallthru
    _

// kernel: convolution_block.2
$region0: #{convolution_block.2}
  #allocation0 [shape = 'u32[]', space=smem, size = 0x4, offset = 0x4, fixed_abs, tag = 'smem constant byte address 0x4 - core index']
  #allocation1 [shape = 'u32[144,128]{1,0:T(1,128)}', space=vmem, size = 0x12000, scoped, tag = 'internal scratch']
  #allocation2 [shape = 'f32[3,4,360]{2,1,0:T(4,128)}', space=vmem, size = 0x4800, scoped, tag = 'scratch operand']
  %s0 = inlined_call_operand.vmem [shape: f32[2,4,16,16], index: 0, kind: input, shape index: {}]
  %s1 = inlined_call_operand.vmem [shape: f32[144], index: 1, kind: input, shape index: {}]
  %s2 = inlined_call_operand.vmem [shape: f32[2,4,324], index: 2, kind: output, shape index: {0}]
  %s3 = inlined_call_operand.vmem [shape: f32[2,4,2], index: 3, kind: output, shape index: {1}]
  %4 = xla_tuple %s2, %s3
  %s5 = sld [smem:[#allocation0]]
  $region53: #{convolution_block.2} parent=0
    _
  %s7 = ssub.s32 1, %s5
  %s8 = scalar_select 0, %s7, %s5
  $region1: #{convolution_block.2} parent=0
    #allocation3 [shape = 'u8[1024]{0}', space=smem, size = 0x400, scoped, tag = 'input window, operand 1, single buffered']
    #allocation4 [shape = 's32[2]{0}', space=sflag, size = 0x8, scoped, tag = 'scoped memory for convolution_block.2']
    %9 = vsyncpa [#allocation4], 0
    loop: start=0, step=1, limit=4
    $region2: #{convolution_block.2} parent=1 // loop_pre_header
      _
    $region3: #{convolution_block.2} parent=1 // loop_header
      %s11 = sphi 0, %s15
      %p12 = scmp.ge.s32.totalorder %s11, 4
      %s21 = sphi 0, %s23
      %s24 = sphi 0, %s21
      %s25 = sphi 0, %s24
      %s41 = sphi 0, %s25
      %s45 = sphi 0, %s45
      %s47 = sphi 0, %s45
      %s48 = sphi 0, %s47
      %s62 = sphi 0, %s48
      %s68 = sphi 0, %s70
      %s71 = sphi 0, %s68
      %s72 = sphi 0, %s71
      %s88 = sphi 0, %s72
      %s94 = sphi 0, %s96
      %s97 = sphi 0, %s94
      %s98 = sphi 0, %s97
      %s114 = sphi 0, %s98
    $region4: #{convolution_block.2} parent=1 // loop_header_branch
      %14 = sbr.rel (%p12) target = $region8
    $region5: #{convolution_block.2} parent=1 // loop_body
      %s16 = ssub.s32 %s11, 1
      %s17 = ssub.s32 %s11, 2
      %s18 = sadd.s32 %s11, 1
      %s19 = ssub.s32 %s11, %s18
      %p20 = scmp.eq.s32.totalorder %s19, 0
      %s22 = sadd.s32 %s21, 1
      %s23 = scalar_select %p20, %s21, %s22
      %p26 = pneg %p20
      %p27 = scmp.eq.s32.totalorder %s11, 1
      %p28 = por %p26, %p27
      %p29 = scmp.ne.s32.totalorder %s21, %s24
      %p30 = scmp.eq.s32.totalorder %s11, 0
      %p31 = por %p29, %p30
      %p32 = scmp.ne.s32.totalorder %s21, %s24
      %p33 = scmp.eq.s32.totalorder %s16, 1
      %p34 = por %p32, %p33
      %p35 = scmp.ne.s32.totalorder %s24, %s25
      %p36 = scmp.eq.s32.totalorder %s16, 0
      %p37 = por %p35, %p36
      %p38 = scmp.ne.s32.totalorder %s24, %s25
      %p39 = scmp.eq.s32.totalorder %s17, 1
      %p40 = por %p38, %p39
      %p42 = scmp.ne.s32.totalorder %s25, %s41
      %p43 = scmp.eq.s32.totalorder %s17, 0
      %p44 = por %p42, %p43
      %s46 = sadd.s32 %s45, 1
      %p49 = scmp.eq.s32.totalorder %s11, 1
      %p50 = scmp.ne.s32.totalorder %s45, %s47
      %p51 = scmp.eq.s32.totalorder %s11, 0
      %p52 = por %p50, %p51
      %p53 = scmp.ne.s32.totalorder %s45, %s47
      %p54 = scmp.eq.s32.totalorder %s16, 1
      %p55 = por %p53, %p54
      %p56 = scmp.ne.s32.totalorder %s47, %s48
      %p57 = scmp.eq.s32.totalorder %s16, 0
      %p58 = por %p56, %p57
      %p59 = scmp.ne.s32.totalorder %s47, %s48
      %p60 = scmp.eq.s32.totalorder %s17, 1
      %p61 = por %p59, %p60
      %p63 = scmp.ne.s32.totalorder %s48, %s62
      %p64 = scmp.eq.s32.totalorder %s17, 0
      %p65 = por %p63, %p64
      %s66 = ssub.s32 %s11, %s18
      %p67 = scmp.eq.s32.totalorder %s66, 0
      %s69 = sadd.s32 %s68, 1
      %s70 = scalar_select %p67, %s68, %s69
      %p73 = pneg %p67
      %p74 = scmp.eq.s32.totalorder %s11, 1
      %p75 = por %p73, %p74
      %p76 = scmp.ne.s32.totalorder %s68, %s71
      %p77 = scmp.eq.s32.totalorder %s11, 0
      %p78 = por %p76, %p77
      %p79 = scmp.ne.s32.totalorder %s68, %s71
      %p80 = scmp.eq.s32.totalorder %s16, 1
      %p81 = por %p79, %p80
      %p82 = scmp.ne.s32.totalorder %s71, %s72
      %p83 = scmp.eq.s32.totalorder %s16, 0
      %p84 = por %p82, %p83
      %p85 = scmp.ne.s32.totalorder %s71, %s72
      %p86 = scmp.eq.s32.totalorder %s17, 1
      %p87 = por %p85, %p86
      %p89 = scmp.ne.s32.totalorder %s72, %s88
      %p90 = scmp.eq.s32.totalorder %s17, 0
      %p91 = por %p89, %p90
      %s92 = ssub.s32 %s11, %s18
      %p93 = scmp.eq.s32.totalorder %s92, 0
      %s95 = sadd.s32 %s94, 1
      %s96 = scalar_select %p93, %s94, %s95
      %p99 = pneg %p93
      %p100 = scmp.eq.s32.totalorder %s11, 1
      %p101 = por %p99, %p100
      %p102 = scmp.ne.s32.totalorder %s94, %s97
      %p103 = scmp.eq.s32.totalorder %s11, 0
      %p104 = por %p102, %p103
      %p105 = scmp.ne.s32.totalorder %s94, %s97
      %p106 = scmp.eq.s32.totalorder %s16, 1
      %p107 = por %p105, %p106
      %p108 = scmp.ne.s32.totalorder %s97, %s98
      %p109 = scmp.eq.s32.totalorder %s16, 0
      %p110 = por %p108, %p109
      %p111 = scmp.ne.s32.totalorder %s97, %s98
      %p112 = scmp.eq.s32.totalorder %s17, 1
      %p113 = por %p111, %p112
      %p115 = scmp.ne.s32.totalorder %s98, %s114
      %p116 = scmp.eq.s32.totalorder %s17, 0
      %p117 = por %p115, %p116
      %p118 = scmp.le.s32.totalorder 1, %s11
      %p119 = scmp.lt.s32.totalorder %s11, 3
      %p120 = pnand %p118, %p119
      %p121 = pneg %p120
      // Predicated region
      $region9: #{convolution_block.2} parent=5 // pred_check
        _
      $region10: #{convolution_block.2} parent=5 // pred_check_branch
        %123 = sbr.rel (%p120) target = $region12
      $region11: #{convolution_block.2} parent=5 // pred_region
        %s124 = ssub.s32 %s11, 1
        // Predicated region
        $region13: #{convolution_block.2} parent=11 // pred_check
          %p125 = pneg %p58
        $region14: #{convolution_block.2} parent=11 // pred_check_branch
          %127 = sbr.rel (%p125) target = $region16
        $region15: #{convolution_block.2} parent=11 // pred_region
          %s129 = ssub.s32 32, 32
          %130 = vsyncadd [#allocation4], %s129
          %s132 = sshll.u32 %s1, 4
          %s133 = int_to_ptr.vmem [resolvable:$true] %s132
          %135 = dma.vmem_to_smem %s133, 32, [#allocation3], [#allocation4]
        $region16: #{convolution_block.2} parent=11 // pred_fallthru
          _
      $region12: #{convolution_block.2} parent=5 // pred_fallthru
        _
      %p136 = scmp.lt.s32.totalorder %s11, 2
      // Predicated region
      $region17: #{convolution_block.2} parent=5 // pred_check
        %p137 = pneg %p136
      $region18: #{convolution_block.2} parent=5 // pred_check_branch
        %139 = sbr.rel (%p137) target = $region20
      $region19: #{convolution_block.2} parent=5 // pred_region
        // Predicated region
        $region21: #{convolution_block.2} parent=19 // pred_check
          %p140 = pneg %p31
        $region22: #{convolution_block.2} parent=19 // pred_check_branch
          %142 = sbr.rel (%p140) target = $region24
        $region23: #{convolution_block.2} parent=19 // pred_region
          %p143 = scmp.lt.s32.totalorder %s11, 1
          %s144 = scalar_select %p143, %s11, 1
          %s145 = smul.addr %s144, 8
          %s146 = smul.addr %s145, 8
          %s147 = scalar_lea.vmem %s0, %s146
        $region24: #{convolution_block.2} parent=19 // pred_fallthru
          _
      $region20: #{convolution_block.2} parent=5 // pred_fallthru
        _
      %p148 = scmp.le.s32.totalorder 1, %s11
      %p149 = scmp.lt.s32.totalorder %s11, 3
      %p150 = pnand %p148, %p149
      %p151 = pneg %p150
      // Predicated region
      $region25: #{convolution_block.2} parent=5 // pred_check
        _
      $region26: #{convolution_block.2} parent=5 // pred_check_branch
        %153 = sbr.rel (%p150) target = $region28
      $region27: #{convolution_block.2} parent=5 // pred_region
        %s154 = ssub.s32 %s11, 1
        // Predicated region
        $region29: #{convolution_block.2} parent=27 // pred_check
          %p155 = pneg %p58
        $region30: #{convolution_block.2} parent=27 // pred_check_branch
          %157 = sbr.rel (%p155) target = $region32
        $region31: #{convolution_block.2} parent=27 // pred_region
          %158 = dma.done [#allocation4], 32
        $region32: #{convolution_block.2} parent=27 // pred_fallthru
          _
        %159 = sfence
        %p160 = scmp.lt.s32.totalorder %s16, 1
        %s161 = scalar_select %p160, %s16, 1
        %s162 = smul.addr %s161, 8
        %s163 = smul.addr %s162, 8
        %s164 = scalar_lea.vmem %s0, %s163
        %p165 = pneg %p37
        %p166 = pneg %p34
        %p167 = pneg %p58
        %p168 = pneg %p55
        %p169 = pneg %p84
        %p170 = pneg %p81
        %p171 = scmp.lt.s32.totalorder %s16, 1
        %s172 = scalar_select %p171, %s16, 1
        %s173 = smul.addr %s172, 3
        %s174 = smul.addr %s173, 4
        %s175 = scalar_lea.vmem %s2, %s174
        %p176 = pneg %p110
        %p177 = pneg %p107
        %p178 = scmp.lt.s32.totalorder %s16, 1
        %s179 = scalar_select %p178, %s16, 1
        %s180 = smul.addr %s179, 4
        %s181 = scalar_lea.vmem %s3, %s180
        %p182 = scmp.lt.s32.totalorder %s16, 1
        %s183 = scalar_select %p182, %s16, 1
        %s184 = smul.addr %s183, 8
        %s185 = smul.addr %s184, 8
        %s186 = scalar_lea.vmem %s0, %s185
        %p187 = scmp.lt.s32.totalorder %s16, 1
        %s188 = scalar_select %p187, %s16, 1
        %s189 = smul.addr %s188, 3
        %s190 = smul.addr %s189, 4
        %s191 = scalar_lea.vmem %s2, %s190
        %p192 = scmp.lt.s32.totalorder %s16, 1
        %s193 = scalar_select %p192, %s16, 1
        %s194 = smul.addr %s193, 4
        %s195 = scalar_lea.vmem %s3, %s194
        %196 = vst [vmem:[#allocation2] sm:$0xff] 0.0
        %vm197 = vcmask 846848
        %198 = vst.msk [vmem:[#allocation2 + $0x8] sm:$0xf] %vm197, 0.0
        %199 = vst [vmem:[#allocation2 + $0xc] sm:$0xff] 0.0
        %200 = vst.msk [vmem:[#allocation2 + $0x14] sm:$0xf] %vm197, 0.0
        %201 = vst [vmem:[#allocation2 + $0x18] sm:$0xff] 0.0
        %202 = vst.msk [vmem:[#allocation2 + $0x20] sm:$0xf] %vm197, 0.0
        %v203 = vld [vmem:[%s186] sm:$0x1]
        %v204 = vld [vmem:[%s186 + $0x10] sm:$0x1]
        %v205 = vld [vmem:[%s186 + $0x20] sm:$0x1]
        %v206 = vld [vmem:[%s186 + $0x30] sm:$0x1]
        %v211 = vrot.slane %v204, 7
        %vm212 = vcmask 1041409
        %v213 = vsel %vm212, %v211, %v203
        %vm214 = vcmask 1045509
        %v215 = vsel %vm214, %v211, %v213
        %v216 = vrot.slane %v205, 6
        %vm217 = vcmask 1042434
        %v218 = vsel %vm217, %v216, %v215
        %vm219 = vcmask 1046534
        %v220 = vsel %vm219, %v216, %v218
        %v221 = vrot.slane %v206, 5
        %vm222 = vcmask 1043459
        %v223 = vsel %vm222, %v221, %v220
        %vm224 = vcmask 1047559
        %v225 = vsel %vm224, %v221, %v223
        %226 = vrot.lane.b32.xlu0 %v225, 38
        %v227 = vpop.permute.xlu0 %226
        %vm229 = vcmask 437552
        %230 = vst.msk [vmem:[#allocation2] sm:$0xf] %vm229, %v227
        %231 = vrot.lane.b32.xlu0 %v225, 37
        %v232 = vpop.permute.xlu0 %231
        %s234 = scalar_lea.vmem [#allocation2], 12
        %vm235 = vcmask 429352
        %236 = vst.msk [vmem:[%s234] sm:$0xf] %vm235, %v232
        %237 = vrot.lane.b32.xlu0 %v225, 36
        %v238 = vpop.permute.xlu0 %237
        %s240 = scalar_lea.vmem [#allocation2], 24
        %vm241 = vcmask 421152
        %242 = vst.msk [vmem:[%s240] sm:$0xf] %vm241, %v238
        %v243 = vld [vmem:[%s186 + $0x1] sm:$0x1]
        %v244 = vld [vmem:[%s186 + $0x11] sm:$0x1]
        %v245 = vld [vmem:[%s186 + $0x21] sm:$0x1]
        %v246 = vld [vmem:[%s186 + $0x31] sm:$0x1]
        %v251 = vrot.slane %v244, 7
        %v252 = vsel %vm212, %v251, %v243
        %v253 = vsel %vm214, %v251, %v252
        %v254 = vrot.slane %v245, 6
        %v255 = vsel %vm217, %v254, %v253
        %v256 = vsel %vm219, %v254, %v255
        %v257 = vrot.slane %v246, 5
        %v258 = vsel %vm222, %v257, %v256
        %v259 = vsel %vm224, %v257, %v258
        %260 = vrot.lane.b32.xlu0 %v259, 56
        %v261 = vpop.permute.xlu0 %260
        %vm263 = vcmask 585152
        %264 = vst.msk [vmem:[#allocation2] sm:$0xf] %vm263, %v261
        %265 = vrot.lane.b32.xlu0 %v259, 55
        %v266 = vpop.permute.xlu0 %265
        %vm268 = vcmask 576952
        %269 = vst.msk [vmem:[%s234] sm:$0xf] %vm268, %v266
        %270 = vrot.lane.b32.xlu0 %v259, 54
        %v271 = vpop.permute.xlu0 %270
        %vm273 = vcmask 568752
        %274 = vst.msk [vmem:[%s240] sm:$0xf] %vm273, %v271
        %v275 = vld [vmem:[%s186 + $0x2] sm:$0x1]
        %v276 = vld [vmem:[%s186 + $0x12] sm:$0x1]
        %v277 = vld [vmem:[%s186 + $0x22] sm:$0x1]
        %v278 = vld [vmem:[%s186 + $0x32] sm:$0x1]
        %v283 = vrot.slane %v276, 7
        %v284 = vsel %vm212, %v283, %v275
        %v285 = vsel %vm214, %v283, %v284
        %v286 = vrot.slane %v277, 6
        %v287 = vsel %vm217, %v286, %v285
        %v288 = vsel %vm219, %v286, %v287
        %v289 = vrot.slane %v278, 5
        %v290 = vsel %vm222, %v289, %v288
        %v291 = vsel %vm224, %v289, %v290
        %292 = vrot.lane.b32.xlu0 %v291, 74
        %v293 = vpop.permute.xlu0 %292
        %vm295 = vcmask 732752
        %296 = vst.msk [vmem:[#allocation2] sm:$0xf] %vm295, %v293
        %297 = vrot.lane.b32.xlu0 %v291, 73
        %v298 = vpop.permute.xlu0 %297
        %vm300 = vcmask 724552
        %301 = vst.msk [vmem:[%s234] sm:$0xf] %vm300, %v298
        %302 = vrot.lane.b32.xlu0 %v291, 72
        %v303 = vpop.permute.xlu0 %302
        %vm305 = vcmask 716352
        %306 = vst.msk [vmem:[%s240] sm:$0xf] %vm305, %v303
        %v307 = vld [vmem:[%s186 + $0x3] sm:$0x1]
        %v308 = vld [vmem:[%s186 + $0x13] sm:$0x1]
        %v309 = vld [vmem:[%s186 + $0x23] sm:$0x1]
        %v310 = vld [vmem:[%s186 + $0x33] sm:$0x1]
        %v315 = vrot.slane %v308, 7
        %v316 = vsel %vm212, %v315, %v307
        %v317 = vsel %vm214, %v315, %v316
        %v318 = vrot.slane %v309, 6
        %v319 = vsel %vm217, %v318, %v317
        %v320 = vsel %vm219, %v318, %v319
        %v321 = vrot.slane %v310, 5
        %v322 = vsel %vm222, %v321, %v320
        %v323 = vsel %vm224, %v321, %v322
        %324 = vrot.lane.b32.xlu0 %v323, 92
        %v325 = vpop.permute.xlu0 %324
        %vm327 = vcmask 880352
        %328 = vst.msk [vmem:[#allocation2] sm:$0xf] %vm327, %v325
        %329 = vrot.lane.b32.xlu0 %v323, 91
        %v330 = vpop.permute.xlu0 %329
        %vm332 = vcmask 872152
        %333 = vst.msk [vmem:[%s234] sm:$0xf] %vm332, %v330
        %334 = vrot.lane.b32.xlu0 %v323, 90
        %v335 = vpop.permute.xlu0 %334
        %vm337 = vcmask 863952
        %338 = vst.msk [vmem:[%s240] sm:$0xf] %vm337, %v335
        %v339 = vld [vmem:[%s186 + $0x4] sm:$0x1]
        %v340 = vld [vmem:[%s186 + $0x14] sm:$0x1]
        %v341 = vld [vmem:[%s186 + $0x24] sm:$0x1]
        %v342 = vld [vmem:[%s186 + $0x34] sm:$0x1]
        %v347 = vrot.slane %v340, 7
        %v348 = vsel %vm212, %v347, %v339
        %v349 = vsel %vm214, %v347, %v348
        %v350 = vrot.slane %v341, 6
        %v351 = vsel %vm217, %v350, %v349
        %v352 = vsel %vm219, %v350, %v351
        %v353 = vrot.slane %v342, 5
        %v354 = vsel %vm222, %v353, %v352
        %v355 = vsel %vm224, %v353, %v354
        %356 = vrot.lane.b32.xlu0 %v355, 110
        %v357 = vpop.permute.xlu0 %356
        %vm359 = vcmask 1027952
        %360 = vst.msk [vmem:[#allocation2] sm:$0xf] %vm359, %v357
        %361 = vrot.lane.b32.xlu0 %v355, 109
        %v362 = vpop.permute.xlu0 %361
        %vm364 = vcmask 1019752
        %365 = vst.msk [vmem:[%s234] sm:$0xf] %vm364, %v362
        %366 = vrot.lane.b32.xlu0 %v355, 108
        %v367 = vpop.permute.xlu0 %366
        %vm369 = vcmask 1011552
        %370 = vst.msk [vmem:[%s240] sm:$0xf] %vm369, %v367
        %v371 = vld [vmem:[%s186 + $0x5] sm:$0x1]
        %v372 = vld [vmem:[%s186 + $0x15] sm:$0x1]
        %v373 = vld [vmem:[%s186 + $0x25] sm:$0x1]
        %v374 = vld [vmem:[%s186 + $0x35] sm:$0x1]
        %v379 = vrot.slane %v372, 7
        %v380 = vsel %vm212, %v379, %v371
        %v381 = vsel %vm214, %v379, %v380
        %v382 = vrot.slane %v373, 6
        %v383 = vsel %vm217, %v382, %v381
        %v384 = vsel %vm219, %v382, %v383
        %v385 = vrot.slane %v374, 5
        %v386 = vsel %vm222, %v385, %v384
        %v387 = vsel %vm224, %v385, %v386
        %vm389 = vcmask 125952
        %390 = vst.msk [vmem:[#allocation2 + $0x4] sm:$0xf] %vm389, %v387
        %391 = vrot.lane.b32.xlu0 %v387, 127
        %v392 = vpop.permute.xlu0 %391
        %v393 = vrot.slane %v392, 4
        %vm394 = vcmask 1039360
        %v395 = vsel %vm394, %v393, %v392
        %vm397 = vcmask 1044472
        %vm398 = vcmask 121860
        %vm399 = vmor %vm398, %vm397
        %400 = vst.msk [vmem:[%s234] sm:$0xff] %vm399, %v395
        %401 = vrot.lane.b32.xlu0 %v387, 126
        %v402 = vpop.permute.xlu0 %401
        %v403 = vrot.slane %v402, 4
        %vm404 = vcmask 1031168
        %v405 = vsel %vm404, %v403, %v402
        %vm407 = vcmask 1044464
        %vm408 = vcmask 113668
        %vm409 = vmor %vm408, %vm407
        %410 = vst.msk [vmem:[%s240] sm:$0xff] %vm409, %v405
        %v411 = vld [vmem:[%s186 + $0x6] sm:$0x1]
        %v412 = vld [vmem:[%s186 + $0x16] sm:$0x1]
        %v413 = vld [vmem:[%s186 + $0x26] sm:$0x1]
        %v414 = vld [vmem:[%s186 + $0x36] sm:$0x1]
        %v419 = vrot.slane %v412, 7
        %v420 = vsel %vm212, %v419, %v411
        %v421 = vsel %vm214, %v419, %v420
        %v422 = vrot.slane %v413, 6
        %v423 = vsel %vm217, %v422, %v421
        %v424 = vsel %vm219, %v422, %v423
        %v425 = vrot.slane %v414, 5
        %v426 = vsel %vm222, %v425, %v424
        %v427 = vsel %vm224, %v425, %v426
        %428 = vrot.lane.b32.xlu0 %v427, 18
        %v429 = vpop.permute.xlu0 %428
        %vm431 = vcmask 273552
        %432 = vst.msk [vmem:[#allocation2 + $0x4] sm:$0xf] %vm431, %v429
        %433 = vrot.lane.b32.xlu0 %v427, 17
        %v434 = vpop.permute.xlu0 %433
        %vm436 = vcmask 265352
        %437 = vst.msk [vmem:[%s234 + $0x4] sm:$0xf] %vm436, %v434
        %438 = vrot.lane.b32.xlu0 %v427, 16
        %v439 = vpop.permute.xlu0 %438
        %vm441 = vcmask 257152
        %442 = vst.msk [vmem:[%s240 + $0x4] sm:$0xf] %vm441, %v439
        %v443 = vld [vmem:[%s186 + $0x7] sm:$0x1]
        %v444 = vld [vmem:[%s186 + $0x17] sm:$0x1]
        %v445 = vld [vmem:[%s186 + $0x27] sm:$0x1]
        %v446 = vld [vmem:[%s186 + $0x37] sm:$0x1]
        %v451 = vrot.slane %v444, 7
        %v452 = vsel %vm212, %v451, %v443
        %v453 = vsel %vm214, %v451, %v452
        %v454 = vrot.slane %v445, 6
        %v455 = vsel %vm217, %v454, %v453
        %v456 = vsel %vm219, %v454, %v455
        %v457 = vrot.slane %v446, 5
        %v458 = vsel %vm222, %v457, %v456
        %v459 = vsel %vm224, %v457, %v458
        %460 = vrot.lane.b32.xlu0 %v459, 36
        %v461 = vpop.permute.xlu0 %460
        %463 = vst.msk [vmem:[#allocation2 + $0x4] sm:$0xf] %vm241, %v461
        %464 = vrot.lane.b32.xlu0 %v459, 35
        %v465 = vpop.permute.xlu0 %464
        %vm467 = vcmask 412952
        %468 = vst.msk [vmem:[%s234 + $0x4] sm:$0xf] %vm467, %v465
        %469 = vrot.lane.b32.xlu0 %v459, 34
        %v470 = vpop.permute.xlu0 %469
        %vm472 = vcmask 404752
        %473 = vst.msk [vmem:[%s240 + $0x4] sm:$0xf] %vm472, %v470
        %v474 = vld [vmem:[%s186 + $0x8] sm:$0x1]
        %v475 = vld [vmem:[%s186 + $0x18] sm:$0x1]
        %v476 = vld [vmem:[%s186 + $0x28] sm:$0x1]
        %v477 = vld [vmem:[%s186 + $0x38] sm:$0x1]
        %v482 = vrot.slane %v475, 7
        %v483 = vsel %vm212, %v482, %v474
        %v484 = vsel %vm214, %v482, %v483
        %v485 = vrot.slane %v476, 6
        %v486 = vsel %vm217, %v485, %v484
        %v487 = vsel %vm219, %v485, %v486
        %v488 = vrot.slane %v477, 5
        %v489 = vsel %vm222, %v488, %v487
        %v490 = vsel %vm224, %v488, %v489
        %491 = vrot.lane.b32.xlu0 %v490, 54
        %v492 = vpop.permute.xlu0 %491
        %494 = vst.msk [vmem:[#allocation2 + $0x4] sm:$0xf] %vm273, %v492
        %495 = vrot.lane.b32.xlu0 %v490, 53
        %v496 = vpop.permute.xlu0 %495
        %vm498 = vcmask 560552
        %499 = vst.msk [vmem:[%s234 + $0x4] sm:$0xf] %vm498, %v496
        %500 = vrot.lane.b32.xlu0 %v490, 52
        %v501 = vpop.permute.xlu0 %500
        %vm503 = vcmask 552352
        %504 = vst.msk [vmem:[%s240 + $0x4] sm:$0xf] %vm503, %v501
        %v505 = vld [vmem:[%s186 + $0x9] sm:$0x1]
        %v506 = vld [vmem:[%s186 + $0x19] sm:$0x1]
        %v507 = vld [vmem:[%s186 + $0x29] sm:$0x1]
        %v508 = vld [vmem:[%s186 + $0x39] sm:$0x1]
        %v513 = vrot.slane %v506, 7
        %v514 = vsel %vm212, %v513, %v505
        %v515 = vsel %vm214, %v513, %v514
        %v516 = vrot.slane %v507, 6
        %v517 = vsel %vm217, %v516, %v515
        %v518 = vsel %vm219, %v516, %v517
        %v519 = vrot.slane %v508, 5
        %v520 = vsel %vm222, %v519, %v518
        %v521 = vsel %vm224, %v519, %v520
        %522 = vrot.lane.b32.xlu0 %v521, 72
        %v523 = vpop.permute.xlu0 %522
        %525 = vst.msk [vmem:[#allocation2 + $0x4] sm:$0xf] %vm305, %v523
        %526 = vrot.lane.b32.xlu0 %v521, 71
        %v527 = vpop.permute.xlu0 %526
        %vm529 = vcmask 708152
        %530 = vst.msk [vmem:[%s234 + $0x4] sm:$0xf] %vm529, %v527
        %531 = vrot.lane.b32.xlu0 %v521, 70
        %v532 = vpop.permute.xlu0 %531
        %vm534 = vcmask 699952
        %535 = vst.msk [vmem:[%s240 + $0x4] sm:$0xf] %vm534, %v532
        %v536 = vld [vmem:[%s186 + $0xa] sm:$0x1]
        %v537 = vld [vmem:[%s186 + $0x1a] sm:$0x1]
        %v538 = vld [vmem:[%s186 + $0x2a] sm:$0x1]
        %v539 = vld [vmem:[%s186 + $0x3a] sm:$0x1]
        %v544 = vrot.slane %v537, 7
        %v545 = vsel %vm212, %v544, %v536
        %v546 = vsel %vm214, %v544, %v545
        %v547 = vrot.slane %v538, 6
        %v548 = vsel %vm217, %v547, %v546
        %v549 = vsel %vm219, %v547, %v548
        %v550 = vrot.slane %v539, 5
        %v551 = vsel %vm222, %v550, %v549
        %v552 = vsel %vm224, %v550, %v551
        %553 = vrot.lane.b32.xlu0 %v552, 90
        %v554 = vpop.permute.xlu0 %553
        %556 = vst.msk [vmem:[#allocation2 + $0x4] sm:$0xf] %vm337, %v554
        %557 = vrot.lane.b32.xlu0 %v552, 89
        %v558 = vpop.permute.xlu0 %557
        %vm560 = vcmask 855752
        %561 = vst.msk [vmem:[%s234 + $0x4] sm:$0xf] %vm560, %v558
        %562 = vrot.lane.b32.xlu0 %v552, 88
        %v563 = vpop.permute.xlu0 %562
        %vm565 = vcmask 847552
        %566 = vst.msk [vmem:[%s240 + $0x4] sm:$0xf] %vm565, %v563
        %v567 = vld [vmem:[%s186 + $0xb] sm:$0x1]
        %v568 = vld [vmem:[%s186 + $0x1b] sm:$0x1]
        %v569 = vld [vmem:[%s186 + $0x2b] sm:$0x1]
        %v570 = vld [vmem:[%s186 + $0x3b] sm:$0x1]
        %v575 = vrot.slane %v568, 7
        %v576 = vsel %vm212, %v575, %v567
        %v577 = vsel %vm214, %v575, %v576
        %v578 = vrot.slane %v569, 6
        %v579 = vsel %vm217, %v578, %v577
        %v580 = vsel %vm219, %v578, %v579
        %v581 = vrot.slane %v570, 5
        %v582 = vsel %vm222, %v581, %v580
        %v583 = vsel %vm224, %v581, %v582
        %584 = vrot.lane.b32.xlu0 %v583, 108
        %v585 = vpop.permute.xlu0 %584
        %587 = vst.msk [vmem:[#allocation2 + $0x4] sm:$0xf] %vm369, %v585
        %588 = vrot.lane.b32.xlu0 %v583, 107
        %v589 = vpop.permute.xlu0 %588
        %vm591 = vcmask 1003352
        %592 = vst.msk [vmem:[%s234 + $0x4] sm:$0xf] %vm591, %v589
        %593 = vrot.lane.b32.xlu0 %v583, 106
        %v594 = vpop.permute.xlu0 %593
        %vm596 = vcmask 995152
        %597 = vst.msk [vmem:[%s240 + $0x4] sm:$0xf] %vm596, %v594
        %v598 = vld [vmem:[%s186 + $0xc] sm:$0x1]
        %v599 = vld [vmem:[%s186 + $0x1c] sm:$0x1]
        %v600 = vld [vmem:[%s186 + $0x2c] sm:$0x1]
        %v601 = vld [vmem:[%s186 + $0x3c] sm:$0x1]
        %v606 = vrot.slane %v599, 7
        %v607 = vsel %vm212, %v606, %v598
        %v608 = vsel %vm214, %v606, %v607
        %v609 = vrot.slane %v600, 6
        %v610 = vsel %vm217, %v609, %v608
        %v611 = vsel %vm219, %v609, %v610
        %v612 = vrot.slane %v601, 5
        %v613 = vsel %vm222, %v612, %v611
        %v614 = vsel %vm224, %v612, %v613
        %615 = vrot.lane.b32.xlu0 %v614, 126
        %v616 = vpop.permute.xlu0 %615
        %v617 = vrot.slane %v616, 4
        %v618 = vsel %vm404, %v617, %v616
        %620 = vst.msk [vmem:[#allocation2 + $0x4] sm:$0xff] %vm409, %v618
        %621 = vrot.lane.b32.xlu0 %v614, 125
        %v622 = vpop.permute.xlu0 %621
        %v623 = vrot.slane %v622, 4
        %vm624 = vcmask 1022976
        %v625 = vsel %vm624, %v623, %v622
        %vm627 = vcmask 1044456
        %vm628 = vcmask 105476
        %vm629 = vmor %vm628, %vm627
        %630 = vst.msk [vmem:[%s234 + $0x4] sm:$0xff] %vm629, %v625
        %631 = vrot.lane.b32.xlu0 %v614, 124
        %v632 = vpop.permute.xlu0 %631
        %v633 = vrot.slane %v632, 4
        %vm634 = vcmask 1014784
        %v635 = vsel %vm634, %v633, %v632
        %vm637 = vcmask 1044448
        %vm638 = vcmask 97284
        %vm639 = vmor %vm638, %vm637
        %640 = vst.msk [vmem:[%s240 + $0x4] sm:$0xff] %vm639, %v635
        %v641 = vld [vmem:[%s186 + $0xd] sm:$0x1]
        %v642 = vld [vmem:[%s186 + $0x1d] sm:$0x1]
        %v643 = vld [vmem:[%s186 + $0x2d] sm:$0x1]
        %v644 = vld [vmem:[%s186 + $0x3d] sm:$0x1]
        %v649 = vrot.slane %v642, 7
        %v650 = vsel %vm212, %v649, %v641
        %v651 = vsel %vm214, %v649, %v650
        %v652 = vrot.slane %v643, 6
        %v653 = vsel %vm217, %v652, %v651
        %v654 = vsel %vm219, %v652, %v653
        %v655 = vrot.slane %v644, 5
        %v656 = vsel %vm222, %v655, %v654
        %v657 = vsel %vm224, %v655, %v656
        %658 = vrot.lane.b32.xlu0 %v657, 16
        %v659 = vpop.permute.xlu0 %658
        %661 = vst.msk [vmem:[#allocation2 + $0x8] sm:$0xf] %vm441, %v659
        %662 = vrot.lane.b32.xlu0 %v657, 15
        %v663 = vpop.permute.xlu0 %662
        %vm665 = vcmask 248952
        %666 = vst.msk [vmem:[%s234 + $0x8] sm:$0xf] %vm665, %v663
        %667 = vrot.lane.b32.xlu0 %v657, 14
        %v668 = vpop.permute.xlu0 %667
        %vm670 = vcmask 240752
        %671 = vst.msk [vmem:[%s240 + $0x8] sm:$0xf] %vm670, %v668
        %v672 = vld [vmem:[%s186 + $0xe] sm:$0x1]
        %v673 = vld [vmem:[%s186 + $0x1e] sm:$0x1]
        %v674 = vld [vmem:[%s186 + $0x2e] sm:$0x1]
        %v675 = vld [vmem:[%s186 + $0x3e] sm:$0x1]
        %v680 = vrot.slane %v673, 7
        %v681 = vsel %vm212, %v680, %v672
        %v682 = vsel %vm214, %v680, %v681
        %v683 = vrot.slane %v674, 6
        %v684 = vsel %vm217, %v683, %v682
        %v685 = vsel %vm219, %v683, %v684
        %v686 = vrot.slane %v675, 5
        %v687 = vsel %vm222, %v686, %v685
        %v688 = vsel %vm224, %v686, %v687
        %689 = vrot.lane.b32.xlu0 %v688, 34
        %v690 = vpop.permute.xlu0 %689
        %692 = vst.msk [vmem:[#allocation2 + $0x8] sm:$0xf] %vm472, %v690
        %693 = vrot.lane.b32.xlu0 %v688, 33
        %v694 = vpop.permute.xlu0 %693
        %vm696 = vcmask 396552
        %697 = vst.msk [vmem:[%s234 + $0x8] sm:$0xf] %vm696, %v694
        %698 = vrot.lane.b32.xlu0 %v688, 32
        %v699 = vpop.permute.xlu0 %698
        %vm701 = vcmask 388352
        %702 = vst.msk [vmem:[%s240 + $0x8] sm:$0xf] %vm701, %v699
        %v703 = vld [vmem:[%s186 + $0xf] sm:$0x1]
        %v704 = vld [vmem:[%s186 + $0x1f] sm:$0x1]
        %v705 = vld [vmem:[%s186 + $0x2f] sm:$0x1]
        %v706 = vld [vmem:[%s186 + $0x3f] sm:$0x1]
        %v711 = vrot.slane %v704, 7
        %v712 = vsel %vm212, %v711, %v703
        %v713 = vsel %vm214, %v711, %v712
        %v714 = vrot.slane %v705, 6
        %v715 = vsel %vm217, %v714, %v713
        %v716 = vsel %vm219, %v714, %v715
        %v717 = vrot.slane %v706, 5
        %v718 = vsel %vm222, %v717, %v716
        %v719 = vsel %vm224, %v717, %v718
        %720 = vrot.lane.b32.xlu0 %v719, 52
        %v721 = vpop.permute.xlu0 %720
        %723 = vst.msk [vmem:[#allocation2 + $0x8] sm:$0xf] %vm503, %v721
        %724 = vrot.lane.b32.xlu0 %v719, 51
        %v725 = vpop.permute.xlu0 %724
        %vm727 = vcmask 544152
        %728 = vst.msk [vmem:[%s234 + $0x8] sm:$0xf] %vm727, %v725
        %729 = vrot.lane.b32.xlu0 %v719, 50
        %v730 = vpop.permute.xlu0 %729
        %vm732 = vcmask 535952
        %733 = vst.msk [vmem:[%s240 + $0x8] sm:$0xf] %vm732, %v730
        %v734 = vld [vmem:[#allocation2] ss:$4 sm:$0x7]
        %s735 = sld [smem:[#allocation3]]
        %v736 = vstv %s735
        %v737 = vmul.f32 %v736, %v734
        %v738 = vld [vmem:[%s234] ss:$4 sm:$0x7]
        %s739 = sld [smem:[#allocation3 + $0x1]]
        %v740 = vstv %s739
        %v741 = vmul.f32 %v740, %v738
        %v742 = vadd.f32 %v737, %v741
        %v743 = vld [vmem:[%s240] ss:$4 sm:$0x7]
        %s744 = sld [smem:[#allocation3 + $0x2]]
        %v745 = vstv %s744
        %v746 = vmul.f32 %v745, %v743
        %v747 = vadd.f32 %v742, %v746
        %s748 = sld [smem:[#allocation3 + $0x3]]
        %v749 = vstv %s748
        %v750 = vmul.f32 %v749, %v734
        %752 = vrot.lane.b32.xlu0 %v750, 110
        %v753 = vpop.permute.xlu0 %752
        %v754 = vrot.slane %v753, 1
        %vm755 = vcmask 900096
        %v756 = vsel %vm755, %v753, %v754
        %v758 = vadd.f32 %v747, %v756
        %s759 = sld [smem:[#allocation3 + $0x4]]
        %v760 = vstv %s759
        %v761 = vmul.f32 %v760, %v738
        %763 = vrot.lane.b32.xlu0 %v761, 110
        %v764 = vpop.permute.xlu0 %763
        %v765 = vrot.slane %v764, 1
        %v766 = vsel %vm755, %v764, %v765
        %v768 = vadd.f32 %v758, %v766
        %s769 = sld [smem:[#allocation3 + $0x5]]
        %v770 = vstv %s769
        %v771 = vmul.f32 %v770, %v743
        %773 = vrot.lane.b32.xlu0 %v771, 110
        %v774 = vpop.permute.xlu0 %773
        %v775 = vrot.slane %v774, 1
        %v776 = vsel %vm755, %v774, %v775
        %v778 = vadd.f32 %v768, %v776
        %s779 = sld [smem:[#allocation3 + $0x6]]
        %v780 = vstv %s779
        %v781 = vmul.f32 %v780, %v734
        %783 = vrot.lane.b32.xlu0 %v781, 92
        %v784 = vpop.permute.xlu0 %783
        %v785 = vrot.slane %v784, 1
        %vm786 = vcmask 752640
        %v787 = vsel %vm786, %v784, %v785
        %v789 = vadd.f32 %v778, %v787
        %s790 = sld [smem:[#allocation3 + $0x7]]
        %v791 = vstv %s790
        %v792 = vmul.f32 %v791, %v738
        %794 = vrot.lane.b32.xlu0 %v792, 92
        %v795 = vpop.permute.xlu0 %794
        %v796 = vrot.slane %v795, 1
        %v797 = vsel %vm786, %v795, %v796
        %v799 = vadd.f32 %v789, %v797
        %s800 = sld [smem:[#allocation3 + $0x8]]
        %v801 = vstv %s800
        %v802 = vmul.f32 %v801, %v743
        %804 = vrot.lane.b32.xlu0 %v802, 92
        %v805 = vpop.permute.xlu0 %804
        %v806 = vrot.slane %v805, 1
        %v807 = vsel %vm786, %v805, %v806
        %v809 = vadd.f32 %v799, %v807
        %s810 = scalar_lea.vmem [#allocation2], 1
        %v811 = vld [vmem:[%s810] ss:$4 sm:$0x7]
        %s812 = sld [smem:[#allocation3 + $0x9]]
        %v813 = vstv %s812
        %v814 = vmul.f32 %v813, %v811
        %v815 = vadd.f32 %v809, %v814
        %s816 = scalar_lea.vmem %s234, 1 [#allocation2]
        %v817 = vld [vmem:[%s816] ss:$4 sm:$0x7]
        %s818 = sld [smem:[#allocation3 + $0xa]]
        %v819 = vstv %s818
        %v820 = vmul.f32 %v819, %v817
        %v821 = vadd.f32 %v815, %v820
        %s822 = scalar_lea.vmem %s240, 1 [#allocation2]
        %v823 = vld [vmem:[%s822] ss:$4 sm:$0x7]
        %s824 = sld [smem:[#allocation3 + $0xb]]
        %v825 = vstv %s824
        %v826 = vmul.f32 %v825, %v823
        %v827 = vadd.f32 %v821, %v826
        %s828 = sld [smem:[#allocation3 + $0xc]]
        %v829 = vstv %s828
        %v830 = vmul.f32 %v829, %v811
        %832 = vrot.lane.b32.xlu0 %v830, 110
        %v833 = vpop.permute.xlu0 %832
        %v834 = vrot.slane %v833, 1
        %v835 = vsel %vm755, %v833, %v834
        %v837 = vadd.f32 %v827, %v835
        %s838 = sld [smem:[#allocation3 + $0xd]]
        %v839 = vstv %s838
        %v840 = vmul.f32 %v839, %v817
        %842 = vrot.lane.b32.xlu0 %v840, 110
        %v843 = vpop.permute.xlu0 %842
        %v844 = vrot.slane %v843, 1
        %v845 = vsel %vm755, %v843, %v844
        %v847 = vadd.f32 %v837, %v845
        %s848 = sld [smem:[#allocation3 + $0xe]]
        %v849 = vstv %s848
        %v850 = vmul.f32 %v849, %v823
        %852 = vrot.lane.b32.xlu0 %v850, 110
        %v853 = vpop.permute.xlu0 %852
        %v854 = vrot.slane %v853, 1
        %v855 = vsel %vm755, %v853, %v854
        %v857 = vadd.f32 %v847, %v855
        %s858 = sld [smem:[#allocation3 + $0xf]]
        %v859 = vstv %s858
        %v860 = vmul.f32 %v859, %v811
        %862 = vrot.lane.b32.xlu0 %v860, 92
        %v863 = vpop.permute.xlu0 %862
        %v864 = vrot.slane %v863, 1
        %v865 = vsel %vm786, %v863, %v864
        %v867 = vadd.f32 %v857, %v865
        %s868 = sld [smem:[#allocation3 + $0x10]]
        %v869 = vstv %s868
        %v870 = vmul.f32 %v869, %v817
        %872 = vrot.lane.b32.xlu0 %v870, 92
        %v873 = vpop.permute.xlu0 %872
        %v874 = vrot.slane %v873, 1
        %v875 = vsel %vm786, %v873, %v874
        %v877 = vadd.f32 %v867, %v875
        %s878 = sld [smem:[#allocation3 + $0x11]]
        %v879 = vstv %s878
        %v880 = vmul.f32 %v879, %v823
        %882 = vrot.lane.b32.xlu0 %v880, 92
        %v883 = vpop.permute.xlu0 %882
        %v884 = vrot.slane %v883, 1
        %v885 = vsel %vm786, %v883, %v884
        %v887 = vadd.f32 %v877, %v885
        %s888 = scalar_lea.vmem [#allocation2], 2
        %v889 = vld [vmem:[%s888] ss:$4 sm:$0x7]
        %s890 = sld [smem:[#allocation3 + $0x12]]
        %v891 = vstv %s890
        %v892 = vmul.f32 %v891, %v889
        %v893 = vadd.f32 %v887, %v892
        %s894 = scalar_lea.vmem %s234, 2 [#allocation2]
        %v895 = vld [vmem:[%s894] ss:$4 sm:$0x7]
        %s896 = sld [smem:[#allocation3 + $0x13]]
        %v897 = vstv %s896
        %v898 = vmul.f32 %v897, %v895
        %v899 = vadd.f32 %v893, %v898
        %s900 = scalar_lea.vmem %s240, 2 [#allocation2]
        %v901 = vld [vmem:[%s900] ss:$4 sm:$0x7]
        %s902 = sld [smem:[#allocation3 + $0x14]]
        %v903 = vstv %s902
        %v904 = vmul.f32 %v903, %v901
        %v905 = vadd.f32 %v899, %v904
        %s906 = sld [smem:[#allocation3 + $0x15]]
        %v907 = vstv %s906
        %v908 = vmul.f32 %v907, %v889
        %910 = vrot.lane.b32.xlu0 %v908, 110
        %v911 = vpop.permute.xlu0 %910
        %v912 = vrot.slane %v911, 1
        %v913 = vsel %vm755, %v911, %v912
        %v915 = vadd.f32 %v905, %v913
        %s916 = sld [smem:[#allocation3 + $0x16]]
        %v917 = vstv %s916
        %v918 = vmul.f32 %v917, %v895
        %920 = vrot.lane.b32.xlu0 %v918, 110
        %v921 = vpop.permute.xlu0 %920
        %v922 = vrot.slane %v921, 1
        %v923 = vsel %vm755, %v921, %v922
        %v925 = vadd.f32 %v915, %v923
        %s926 = sld [smem:[#allocation3 + $0x17]]
        %v927 = vstv %s926
        %v928 = vmul.f32 %v927, %v901
        %930 = vrot.lane.b32.xlu0 %v928, 110
        %v931 = vpop.permute.xlu0 %930
        %v932 = vrot.slane %v931, 1
        %v933 = vsel %vm755, %v931, %v932
        %v935 = vadd.f32 %v925, %v933
        %s936 = sld [smem:[#allocation3 + $0x18]]
        %v937 = vstv %s936
        %v938 = vmul.f32 %v937, %v889
        %940 = vrot.lane.b32.xlu0 %v938, 92
        %v941 = vpop.permute.xlu0 %940
        %v942 = vrot.slane %v941, 1
        %v943 = vsel %vm786, %v941, %v942
        %v945 = vadd.f32 %v935, %v943
        %s946 = sld [smem:[#allocation3 + $0x19]]
        %v947 = vstv %s946
        %v948 = vmul.f32 %v947, %v895
        %950 = vrot.lane.b32.xlu0 %v948, 92
        %v951 = vpop.permute.xlu0 %950
        %v952 = vrot.slane %v951, 1
        %v953 = vsel %vm786, %v951, %v952
        %v955 = vadd.f32 %v945, %v953
        %s956 = sld [smem:[#allocation3 + $0x1a]]
        %v957 = vstv %s956
        %v958 = vmul.f32 %v957, %v901
        %960 = vrot.lane.b32.xlu0 %v958, 92
        %v961 = vpop.permute.xlu0 %960
        %v962 = vrot.slane %v961, 1
        %v963 = vsel %vm786, %v961, %v962
        %v965 = vadd.f32 %v955, %v963
        %s966 = scalar_lea.vmem [#allocation2], 3
        %v967 = vld [vmem:[%s966] ss:$4 sm:$0x7]
        %s968 = sld [smem:[#allocation3 + $0x1b]]
        %v969 = vstv %s968
        %v970 = vmul.f32 %v969, %v967
        %v971 = vadd.f32 %v965, %v970
        %s972 = scalar_lea.vmem %s234, 3 [#allocation2]
        %v973 = vld [vmem:[%s972] ss:$4 sm:$0x7]
        %s974 = sld [smem:[#allocation3 + $0x1c]]
        %v975 = vstv %s974
        %v976 = vmul.f32 %v975, %v973
        %v977 = vadd.f32 %v971, %v976
        %s978 = scalar_lea.vmem %s240, 3 [#allocation2]
        %v979 = vld [vmem:[%s978] ss:$4 sm:$0x7]
        %s980 = sld [smem:[#allocation3 + $0x1d]]
        %v981 = vstv %s980
        %v982 = vmul.f32 %v981, %v979
        %v983 = vadd.f32 %v977, %v982
        %s984 = sld [smem:[#allocation3 + $0x1e]]
        %v985 = vstv %s984
        %v986 = vmul.f32 %v985, %v967
        %988 = vrot.lane.b32.xlu0 %v986, 110
        %v989 = vpop.permute.xlu0 %988
        %v990 = vrot.slane %v989, 1
        %v991 = vsel %vm755, %v989, %v990
        %v993 = vadd.f32 %v983, %v991
        %s994 = sld [smem:[#allocation3 + $0x1f]]
        %v995 = vstv %s994
        %v996 = vmul.f32 %v995, %v973
        %998 = vrot.lane.b32.xlu0 %v996, 110
        %v999 = vpop.permute.xlu0 %998
        %v1000 = vrot.slane %v999, 1
        %v1001 = vsel %vm755, %v999, %v1000
        %v1003 = vadd.f32 %v993, %v1001
        %s1004 = sld [smem:[#allocation3 + $0x20]]
        %v1005 = vstv %s1004
        %v1006 = vmul.f32 %v1005, %v979
        %1008 = vrot.lane.b32.xlu0 %v1006, 110
        %v1009 = vpop.permute.xlu0 %1008
        %v1010 = vrot.slane %v1009, 1
        %v1011 = vsel %vm755, %v1009, %v1010
        %v1013 = vadd.f32 %v1003, %v1011
        %s1014 = sld [smem:[#allocation3 + $0x21]]
        %v1015 = vstv %s1014
        %v1016 = vmul.f32 %v1015, %v967
        %1018 = vrot.lane.b32.xlu0 %v1016, 92
        %v1019 = vpop.permute.xlu0 %1018
        %v1020 = vrot.slane %v1019, 1
        %v1021 = vsel %vm786, %v1019, %v1020
        %v1023 = vadd.f32 %v1013, %v1021
        %s1024 = sld [smem:[#allocation3 + $0x22]]
        %v1025 = vstv %s1024
        %v1026 = vmul.f32 %v1025, %v973
        %1028 = vrot.lane.b32.xlu0 %v1026, 92
        %v1029 = vpop.permute.xlu0 %1028
        %v1030 = vrot.slane %v1029, 1
        %v1031 = vsel %vm786, %v1029, %v1030
        %v1033 = vadd.f32 %v1023, %v1031
        %s1034 = sld [smem:[#allocation3 + $0x23]]
        %v1035 = vstv %s1034
        %v1036 = vmul.f32 %v1035, %v979
        %1038 = vrot.lane.b32.xlu0 %v1036, 92
        %v1039 = vpop.permute.xlu0 %1038
        %v1040 = vrot.slane %v1039, 1
        %v1041 = vsel %vm786, %v1039, %v1040
        %v1043 = vadd.f32 %v1033, %v1041
        %v1044 = vlaneseq
        %vm1045 = vcmp.ge.s32.totalorder %v1044, 0
        %vm1046 = vcmp.lt.s32.totalorder %v1044, 324
        %vm1047 = vmand %vm1045, %vm1046
        %1048 = vst.msk [vmem:[%s191] ss:$4 sm:$0x7] %vm1047, %v1043
        %v1049 = vld [vmem:[#allocation2] ss:$4 sm:$0x7]
        %s1050 = sld [smem:[#allocation3 + $0x24]]
        %v1051 = vstv %s1050
        %v1052 = vmul.f32 %v1051, %v1049
        %v1053 = vld [vmem:[%s234] ss:$4 sm:$0x7]
        %s1054 = sld [smem:[#allocation3 + $0x25]]
        %v1055 = vstv %s1054
        %v1056 = vmul.f32 %v1055, %v1053
        %v1057 = vadd.f32 %v1052, %v1056
        %v1058 = vld [vmem:[%s240] ss:$4 sm:$0x7]
        %s1059 = sld [smem:[#allocation3 + $0x26]]
        %v1060 = vstv %s1059
        %v1061 = vmul.f32 %v1060, %v1058
        %v1062 = vadd.f32 %v1057, %v1061
        %s1063 = sld [smem:[#allocation3 + $0x27]]
        %v1064 = vstv %s1063
        %v1065 = vmul.f32 %v1064, %v1049
        %1067 = vrot.lane.b32.xlu0 %v1065, 110
        %v1068 = vpop.permute.xlu0 %1067
        %v1069 = vrot.slane %v1068, 1
        %v1070 = vsel %vm755, %v1068, %v1069
        %v1072 = vadd.f32 %v1062, %v1070
        %s1073 = sld [smem:[#allocation3 + $0x28]]
        %v1074 = vstv %s1073
        %v1075 = vmul.f32 %v1074, %v1053
        %1077 = vrot.lane.b32.xlu0 %v1075, 110
        %v1078 = vpop.permute.xlu0 %1077
        %v1079 = vrot.slane %v1078, 1
        %v1080 = vsel %vm755, %v1078, %v1079
        %v1082 = vadd.f32 %v1072, %v1080
        %s1083 = sld [smem:[#allocation3 + $0x29]]
        %v1084 = vstv %s1083
        %v1085 = vmul.f32 %v1084, %v1058
        %1087 = vrot.lane.b32.xlu0 %v1085, 110
        %v1088 = vpop.permute.xlu0 %1087
        %v1089 = vrot.slane %v1088, 1
        %v1090 = vsel %vm755, %v1088, %v1089
        %v1092 = vadd.f32 %v1082, %v1090
        %s1093 = sld [smem:[#allocation3 + $0x2a]]
        %v1094 = vstv %s1093
        %v1095 = vmul.f32 %v1094, %v1049
        %1097 = vrot.lane.b32.xlu0 %v1095, 92
        %v1098 = vpop.permute.xlu0 %1097
        %v1099 = vrot.slane %v1098, 1
        %v1100 = vsel %vm786, %v1098, %v1099
        %v1102 = vadd.f32 %v1092, %v1100
        %s1103 = sld [smem:[#allocation3 + $0x2b]]
        %v1104 = vstv %s1103
        %v1105 = vmul.f32 %v1104, %v1053
        %1107 = vrot.lane.b32.xlu0 %v1105, 92
        %v1108 = vpop.permute.xlu0 %1107
        %v1109 = vrot.slane %v1108, 1
        %v1110 = vsel %vm786, %v1108, %v1109
        %v1112 = vadd.f32 %v1102, %v1110
        %s1113 = sld [smem:[#allocation3 + $0x2c]]
        %v1114 = vstv %s1113
        %v1115 = vmul.f32 %v1114, %v1058
        %1117 = vrot.lane.b32.xlu0 %v1115, 92
        %v1118 = vpop.permute.xlu0 %1117
        %v1119 = vrot.slane %v1118, 1
        %v1120 = vsel %vm786, %v1118, %v1119
        %v1122 = vadd.f32 %v1112, %v1120
        %v1123 = vld [vmem:[%s810] ss:$4 sm:$0x7]
        %s1124 = sld [smem:[#allocation3 + $0x2d]]
        %v1125 = vstv %s1124
        %v1126 = vmul.f32 %v1125, %v1123
        %v1127 = vadd.f32 %v1122, %v1126
        %v1128 = vld [vmem:[%s816] ss:$4 sm:$0x7]
        %s1129 = sld [smem:[#allocation3 + $0x2e]]
        %v1130 = vstv %s1129
        %v1131 = vmul.f32 %v1130, %v1128
        %v1132 = vadd.f32 %v1127, %v1131
        %v1133 = vld [vmem:[%s822] ss:$4 sm:$0x7]
        %s1134 = sld [smem:[#allocation3 + $0x2f]]
        %v1135 = vstv %s1134
        %v1136 = vmul.f32 %v1135, %v1133
        %v1137 = vadd.f32 %v1132, %v1136
        %s1138 = sld [smem:[#allocation3 + $0x30]]
        %v1139 = vstv %s1138
        %v1140 = vmul.f32 %v1139, %v1123
        %1142 = vrot.lane.b32.xlu0 %v1140, 110
        %v1143 = vpop.permute.xlu0 %1142
        %v1144 = vrot.slane %v1143, 1
        %v1145 = vsel %vm755, %v1143, %v1144
        %v1147 = vadd.f32 %v1137, %v1145
        %s1148 = sld [smem:[#allocation3 + $0x31]]
        %v1149 = vstv %s1148
        %v1150 = vmul.f32 %v1149, %v1128
        %1152 = vrot.lane.b32.xlu0 %v1150, 110
        %v1153 = vpop.permute.xlu0 %1152
        %v1154 = vrot.slane %v1153, 1
        %v1155 = vsel %vm755, %v1153, %v1154
        %v1157 = vadd.f32 %v1147, %v1155
        %s1158 = sld [smem:[#allocation3 + $0x32]]
        %v1159 = vstv %s1158
        %v1160 = vmul.f32 %v1159, %v1133
        %1162 = vrot.lane.b32.xlu0 %v1160, 110
        %v1163 = vpop.permute.xlu0 %1162
        %v1164 = vrot.slane %v1163, 1
        %v1165 = vsel %vm755, %v1163, %v1164
        %v1167 = vadd.f32 %v1157, %v1165
        %s1168 = sld [smem:[#allocation3 + $0x33]]
        %v1169 = vstv %s1168
        %v1170 = vmul.f32 %v1169, %v1123
        %1172 = vrot.lane.b32.xlu0 %v1170, 92
        %v1173 = vpop.permute.xlu0 %1172
        %v1174 = vrot.slane %v1173, 1
        %v1175 = vsel %vm786, %v1173, %v1174
        %v1177 = vadd.f32 %v1167, %v1175
        %s1178 = sld [smem:[#allocation3 + $0x34]]
        %v1179 = vstv %s1178
        %v1180 = vmul.f32 %v1179, %v1128
        %1182 = vrot.lane.b32.xlu0 %v1180, 92
        %v1183 = vpop.permute.xlu0 %1182
        %v1184 = vrot.slane %v1183, 1
        %v1185 = vsel %vm786, %v1183, %v1184
        %v1187 = vadd.f32 %v1177, %v1185
        %s1188 = sld [smem:[#allocation3 + $0x35]]
        %v1189 = vstv %s1188
        %v1190 = vmul.f32 %v1189, %v1133
        %1192 = vrot.lane.b32.xlu0 %v1190, 92
        %v1193 = vpop.permute.xlu0 %1192
        %v1194 = vrot.slane %v1193, 1
        %v1195 = vsel %vm786, %v1193, %v1194
        %v1197 = vadd.f32 %v1187, %v1195
        %v1198 = vld [vmem:[%s888] ss:$4 sm:$0x7]
        %s1199 = sld [smem:[#allocation3 + $0x36]]
        %v1200 = vstv %s1199
        %v1201 = vmul.f32 %v1200, %v1198
        %v1202 = vadd.f32 %v1197, %v1201
        %v1203 = vld [vmem:[%s894] ss:$4 sm:$0x7]
        %s1204 = sld [smem:[#allocation3 + $0x37]]
        %v1205 = vstv %s1204
        %v1206 = vmul.f32 %v1205, %v1203
        %v1207 = vadd.f32 %v1202, %v1206
        %v1208 = vld [vmem:[%s900] ss:$4 sm:$0x7]
        %s1209 = sld [smem:[#allocation3 + $0x38]]
        %v1210 = vstv %s1209
        %v1211 = vmul.f32 %v1210, %v1208
        %v1212 = vadd.f32 %v1207, %v1211
        %s1213 = sld [smem:[#allocation3 + $0x39]]
        %v1214 = vstv %s1213
        %v1215 = vmul.f32 %v1214, %v1198
        %1217 = vrot.lane.b32.xlu0 %v1215, 110
        %v1218 = vpop.permute.xlu0 %1217
        %v1219 = vrot.slane %v1218, 1
        %v1220 = vsel %vm755, %v1218, %v1219
        %v1222 = vadd.f32 %v1212, %v1220
        %s1223 = sld [smem:[#allocation3 + $0x3a]]
        %v1224 = vstv %s1223
        %v1225 = vmul.f32 %v1224, %v1203
        %1227 = vrot.lane.b32.xlu0 %v1225, 110
        %v1228 = vpop.permute.xlu0 %1227
        %v1229 = vrot.slane %v1228, 1
        %v1230 = vsel %vm755, %v1228, %v1229
        %v1232 = vadd.f32 %v1222, %v1230
        %s1233 = sld [smem:[#allocation3 + $0x3b]]
        %v1234 = vstv %s1233
        %v1235 = vmul.f32 %v1234, %v1208
        %1237 = vrot.lane.b32.xlu0 %v1235, 110
        %v1238 = vpop.permute.xlu0 %1237
        %v1239 = vrot.slane %v1238, 1
        %v1240 = vsel %vm755, %v1238, %v1239
        %v1242 = vadd.f32 %v1232, %v1240
        %s1243 = sld [smem:[#allocation3 + $0x3c]]
        %v1244 = vstv %s1243
        %v1245 = vmul.f32 %v1244, %v1198
        %1247 = vrot.lane.b32.xlu0 %v1245, 92
        %v1248 = vpop.permute.xlu0 %1247
        %v1249 = vrot.slane %v1248, 1
        %v1250 = vsel %vm786, %v1248, %v1249
        %v1252 = vadd.f32 %v1242, %v1250
        %s1253 = sld [smem:[#allocation3 + $0x3d]]
        %v1254 = vstv %s1253
        %v1255 = vmul.f32 %v1254, %v1203
        %1257 = vrot.lane.b32.xlu0 %v1255, 92
        %v1258 = vpop.permute.xlu0 %1257
        %v1259 = vrot.slane %v1258, 1
        %v1260 = vsel %vm786, %v1258, %v1259
        %v1262 = vadd.f32 %v1252, %v1260
        %s1263 = sld [smem:[#allocation3 + $0x3e]]
        %v1264 = vstv %s1263
        %v1265 = vmul.f32 %v1264, %v1208
        %1267 = vrot.lane.b32.xlu0 %v1265, 92
        %v1268 = vpop.permute.xlu0 %1267
        %v1269 = vrot.slane %v1268, 1
        %v1270 = vsel %vm786, %v1268, %v1269
        %v1272 = vadd.f32 %v1262, %v1270
        %v1273 = vld [vmem:[%s966] ss:$4 sm:$0x7]
        %s1274 = sld [smem:[#allocation3 + $0x3f]]
        %v1275 = vstv %s1274
        %v1276 = vmul.f32 %v1275, %v1273
        %v1277 = vadd.f32 %v1272, %v1276
        %v1278 = vld [vmem:[%s972] ss:$4 sm:$0x7]
        %s1279 = sld [smem:[#allocation3 + $0x40]]
        %v1280 = vstv %s1279
        %v1281 = vmul.f32 %v1280, %v1278
        %v1282 = vadd.f32 %v1277, %v1281
        %v1283 = vld [vmem:[%s978] ss:$4 sm:$0x7]
        %s1284 = sld [smem:[#allocation3 + $0x41]]
        %v1285 = vstv %s1284
        %v1286 = vmul.f32 %v1285, %v1283
        %v1287 = vadd.f32 %v1282, %v1286
        %s1288 = sld [smem:[#allocation3 + $0x42]]
        %v1289 = vstv %s1288
        %v1290 = vmul.f32 %v1289, %v1273
        %1292 = vrot.lane.b32.xlu0 %v1290, 110
        %v1293 = vpop.permute.xlu0 %1292
        %v1294 = vrot.slane %v1293, 1
        %v1295 = vsel %vm755, %v1293, %v1294
        %v1297 = vadd.f32 %v1287, %v1295
        %s1298 = sld [smem:[#allocation3 + $0x43]]
        %v1299 = vstv %s1298
        %v1300 = vmul.f32 %v1299, %v1278
        %1302 = vrot.lane.b32.xlu0 %v1300, 110
        %v1303 = vpop.permute.xlu0 %1302
        %v1304 = vrot.slane %v1303, 1
        %v1305 = vsel %vm755, %v1303, %v1304
        %v1307 = vadd.f32 %v1297, %v1305
        %s1308 = sld [smem:[#allocation3 + $0x44]]
        %v1309 = vstv %s1308
        %v1310 = vmul.f32 %v1309, %v1283
        %1312 = vrot.lane.b32.xlu0 %v1310, 110
        %v1313 = vpop.permute.xlu0 %1312
        %v1314 = vrot.slane %v1313, 1
        %v1315 = vsel %vm755, %v1313, %v1314
        %v1317 = vadd.f32 %v1307, %v1315
        %s1318 = sld [smem:[#allocation3 + $0x45]]
        %v1319 = vstv %s1318
        %v1320 = vmul.f32 %v1319, %v1273
        %1322 = vrot.lane.b32.xlu0 %v1320, 92
        %v1323 = vpop.permute.xlu0 %1322
        %v1324 = vrot.slane %v1323, 1
        %v1325 = vsel %vm786, %v1323, %v1324
        %v1327 = vadd.f32 %v1317, %v1325
        %s1328 = sld [smem:[#allocation3 + $0x46]]
        %v1329 = vstv %s1328
        %v1330 = vmul.f32 %v1329, %v1278
        %1332 = vrot.lane.b32.xlu0 %v1330, 92
        %v1333 = vpop.permute.xlu0 %1332
        %v1334 = vrot.slane %v1333, 1
        %v1335 = vsel %vm786, %v1333, %v1334
        %v1337 = vadd.f32 %v1327, %v1335
        %s1338 = sld [smem:[#allocation3 + $0x47]]
        %v1339 = vstv %s1338
        %v1340 = vmul.f32 %v1339, %v1283
        %1342 = vrot.lane.b32.xlu0 %v1340, 92
        %v1343 = vpop.permute.xlu0 %1342
        %v1344 = vrot.slane %v1343, 1
        %v1345 = vsel %vm786, %v1343, %v1344
        %v1347 = vadd.f32 %v1337, %v1345
        %s1348 = scalar_lea.vmem %s191, 1
        %1349 = vst.msk [vmem:[%s1348] ss:$4 sm:$0x7] %vm1047, %v1347
        %v1350 = vld [vmem:[#allocation2] ss:$4 sm:$0x7]
        %s1351 = sld [smem:[#allocation3 + $0x48]]
        %v1352 = vstv %s1351
        %v1353 = vmul.f32 %v1352, %v1350
        %v1354 = vld [vmem:[%s234] ss:$4 sm:$0x7]
        %s1355 = sld [smem:[#allocation3 + $0x49]]
        %v1356 = vstv %s1355
        %v1357 = vmul.f32 %v1356, %v1354
        %v1358 = vadd.f32 %v1353, %v1357
        %v1359 = vld [vmem:[%s240] ss:$4 sm:$0x7]
        %s1360 = sld [smem:[#allocation3 + $0x4a]]
        %v1361 = vstv %s1360
        %v1362 = vmul.f32 %v1361, %v1359
        %v1363 = vadd.f32 %v1358, %v1362
        %s1364 = sld [smem:[#allocation3 + $0x4b]]
        %v1365 = vstv %s1364
        %v1366 = vmul.f32 %v1365, %v1350
        %1368 = vrot.lane.b32.xlu0 %v1366, 110
        %v1369 = vpop.permute.xlu0 %1368
        %v1370 = vrot.slane %v1369, 1
        %v1371 = vsel %vm755, %v1369, %v1370
        %v1373 = vadd.f32 %v1363, %v1371
        %s1374 = sld [smem:[#allocation3 + $0x4c]]
        %v1375 = vstv %s1374
        %v1376 = vmul.f32 %v1375, %v1354
        %1378 = vrot.lane.b32.xlu0 %v1376, 110
        %v1379 = vpop.permute.xlu0 %1378
        %v1380 = vrot.slane %v1379, 1
        %v1381 = vsel %vm755, %v1379, %v1380
        %v1383 = vadd.f32 %v1373, %v1381
        %s1384 = sld [smem:[#allocation3 + $0x4d]]
        %v1385 = vstv %s1384
        %v1386 = vmul.f32 %v1385, %v1359
        %1388 = vrot.lane.b32.xlu0 %v1386, 110
        %v1389 = vpop.permute.xlu0 %1388
        %v1390 = vrot.slane %v1389, 1
        %v1391 = vsel %vm755, %v1389, %v1390
        %v1393 = vadd.f32 %v1383, %v1391
        %s1394 = sld [smem:[#allocation3 + $0x4e]]
        %v1395 = vstv %s1394
        %v1396 = vmul.f32 %v1395, %v1350
        %1398 = vrot.lane.b32.xlu0 %v1396, 92
        %v1399 = vpop.permute.xlu0 %1398
        %v1400 = vrot.slane %v1399, 1
        %v1401 = vsel %vm786, %v1399, %v1400
        %v1403 = vadd.f32 %v1393, %v1401
        %s1404 = sld [smem:[#allocation3 + $0x4f]]
        %v1405 = vstv %s1404
        %v1406 = vmul.f32 %v1405, %v1354
        %1408 = vrot.lane.b32.xlu0 %v1406, 92
        %v1409 = vpop.permute.xlu0 %1408
        %v1410 = vrot.slane %v1409, 1
        %v1411 = vsel %vm786, %v1409, %v1410
        %v1413 = vadd.f32 %v1403, %v1411
        %s1414 = sld [smem:[#allocation3 + $0x50]]
        %v1415 = vstv %s1414
        %v1416 = vmul.f32 %v1415, %v1359
        %1418 = vrot.lane.b32.xlu0 %v1416, 92
        %v1419 = vpop.permute.xlu0 %1418
        %v1420 = vrot.slane %v1419, 1
        %v1421 = vsel %vm786, %v1419, %v1420
        %v1423 = vadd.f32 %v1413, %v1421
        %v1424 = vld [vmem:[%s810] ss:$4 sm:$0x7]
        %s1425 = sld [smem:[#allocation3 + $0x51]]
        %v1426 = vstv %s1425
        %v1427 = vmul.f32 %v1426, %v1424
        %v1428 = vadd.f32 %v1423, %v1427
        %v1429 = vld [vmem:[%s816] ss:$4 sm:$0x7]
        %s1430 = sld [smem:[#allocation3 + $0x52]]
        %v1431 = vstv %s1430
        %v1432 = vmul.f32 %v1431, %v1429
        %v1433 = vadd.f32 %v1428, %v1432
        %v1434 = vld [vmem:[%s822] ss:$4 sm:$0x7]
        %s1435 = sld [smem:[#allocation3 + $0x53]]
        %v1436 = vstv %s1435
        %v1437 = vmul.f32 %v1436, %v1434
        %v1438 = vadd.f32 %v1433, %v1437
        %s1439 = sld [smem:[#allocation3 + $0x54]]
        %v1440 = vstv %s1439
        %v1441 = vmul.f32 %v1440, %v1424
        %1443 = vrot.lane.b32.xlu0 %v1441, 110
        %v1444 = vpop.permute.xlu0 %1443
        %v1445 = vrot.slane %v1444, 1
        %v1446 = vsel %vm755, %v1444, %v1445
        %v1448 = vadd.f32 %v1438, %v1446
        %s1449 = sld [smem:[#allocation3 + $0x55]]
        %v1450 = vstv %s1449
        %v1451 = vmul.f32 %v1450, %v1429
        %1453 = vrot.lane.b32.xlu0 %v1451, 110
        %v1454 = vpop.permute.xlu0 %1453
        %v1455 = vrot.slane %v1454, 1
        %v1456 = vsel %vm755, %v1454, %v1455
        %v1458 = vadd.f32 %v1448, %v1456
        %s1459 = sld [smem:[#allocation3 + $0x56]]
        %v1460 = vstv %s1459
        %v1461 = vmul.f32 %v1460, %v1434
        %1463 = vrot.lane.b32.xlu0 %v1461, 110
        %v1464 = vpop.permute.xlu0 %1463
        %v1465 = vrot.slane %v1464, 1
        %v1466 = vsel %vm755, %v1464, %v1465
        %v1468 = vadd.f32 %v1458, %v1466
        %s1469 = sld [smem:[#allocation3 + $0x57]]
        %v1470 = vstv %s1469
        %v1471 = vmul.f32 %v1470, %v1424
        %1473 = vrot.lane.b32.xlu0 %v1471, 92
        %v1474 = vpop.permute.xlu0 %1473
        %v1475 = vrot.slane %v1474, 1
        %v1476 = vsel %vm786, %v1474, %v1475
        %v1478 = vadd.f32 %v1468, %v1476
        %s1479 = sld [smem:[#allocation3 + $0x58]]
        %v1480 = vstv %s1479
        %v1481 = vmul.f32 %v1480, %v1429
        %1483 = vrot.lane.b32.xlu0 %v1481, 92
        %v1484 = vpop.permute.xlu0 %1483
        %v1485 = vrot.slane %v1484, 1
        %v1486 = vsel %vm786, %v1484, %v1485
        %v1488 = vadd.f32 %v1478, %v1486
        %s1489 = sld [smem:[#allocation3 + $0x59]]
        %v1490 = vstv %s1489
        %v1491 = vmul.f32 %v1490, %v1434
        %1493 = vrot.lane.b32.xlu0 %v1491, 92
        %v1494 = vpop.permute.xlu0 %1493
        %v1495 = vrot.slane %v1494, 1
        %v1496 = vsel %vm786, %v1494, %v1495
        %v1498 = vadd.f32 %v1488, %v1496
        %v1499 = vld [vmem:[%s888] ss:$4 sm:$0x7]
        %s1500 = sld [smem:[#allocation3 + $0x5a]]
        %v1501 = vstv %s1500
        %v1502 = vmul.f32 %v1501, %v1499
        %v1503 = vadd.f32 %v1498, %v1502
        %v1504 = vld [vmem:[%s894] ss:$4 sm:$0x7]
        %s1505 = sld [smem:[#allocation3 + $0x5b]]
        %v1506 = vstv %s1505
        %v1507 = vmul.f32 %v1506, %v1504
        %v1508 = vadd.f32 %v1503, %v1507
        %v1509 = vld [vmem:[%s900] ss:$4 sm:$0x7]
        %s1510 = sld [smem:[#allocation3 + $0x5c]]
        %v1511 = vstv %s1510
        %v1512 = vmul.f32 %v1511, %v1509
        %v1513 = vadd.f32 %v1508, %v1512
        %s1514 = sld [smem:[#allocation3 + $0x5d]]
        %v1515 = vstv %s1514
        %v1516 = vmul.f32 %v1515, %v1499
        %1518 = vrot.lane.b32.xlu0 %v1516, 110
        %v1519 = vpop.permute.xlu0 %1518
        %v1520 = vrot.slane %v1519, 1
        %v1521 = vsel %vm755, %v1519, %v1520
        %v1523 = vadd.f32 %v1513, %v1521
        %s1524 = sld [smem:[#allocation3 + $0x5e]]
        %v1525 = vstv %s1524
        %v1526 = vmul.f32 %v1525, %v1504
        %1528 = vrot.lane.b32.xlu0 %v1526, 110
        %v1529 = vpop.permute.xlu0 %1528
        %v1530 = vrot.slane %v1529, 1
        %v1531 = vsel %vm755, %v1529, %v1530
        %v1533 = vadd.f32 %v1523, %v1531
        %s1534 = sld [smem:[#allocation3 + $0x5f]]
        %v1535 = vstv %s1534
        %v1536 = vmul.f32 %v1535, %v1509
        %1538 = vrot.lane.b32.xlu0 %v1536, 110
        %v1539 = vpop.permute.xlu0 %1538
        %v1540 = vrot.slane %v1539, 1
        %v1541 = vsel %vm755, %v1539, %v1540
        %v1543 = vadd.f32 %v1533, %v1541
        %s1544 = sld [smem:[#allocation3 + $0x60]]
        %v1545 = vstv %s1544
        %v1546 = vmul.f32 %v1545, %v1499
        %1548 = vrot.lane.b32.xlu0 %v1546, 92
        %v1549 = vpop.permute.xlu0 %1548
        %v1550 = vrot.slane %v1549, 1
        %v1551 = vsel %vm786, %v1549, %v1550
        %v1553 = vadd.f32 %v1543, %v1551
        %s1554 = sld [smem:[#allocation3 + $0x61]]
        %v1555 = vstv %s1554
        %v1556 = vmul.f32 %v1555, %v1504
        %1558 = vrot.lane.b32.xlu0 %v1556, 92
        %v1559 = vpop.permute.xlu0 %1558
        %v1560 = vrot.slane %v1559, 1
        %v1561 = vsel %vm786, %v1559, %v1560
        %v1563 = vadd.f32 %v1553, %v1561
        %s1564 = sld [smem:[#allocation3 + $0x62]]
        %v1565 = vstv %s1564
        %v1566 = vmul.f32 %v1565, %v1509
        %1568 = vrot.lane.b32.xlu0 %v1566, 92
        %v1569 = vpop.permute.xlu0 %1568
        %v1570 = vrot.slane %v1569, 1
        %v1571 = vsel %vm786, %v1569, %v1570
        %v1573 = vadd.f32 %v1563, %v1571
        %v1574 = vld [vmem:[%s966] ss:$4 sm:$0x7]
        %s1575 = sld [smem:[#allocation3 + $0x63]]
        %v1576 = vstv %s1575
        %v1577 = vmul.f32 %v1576, %v1574
        %v1578 = vadd.f32 %v1573, %v1577
        %v1579 = vld [vmem:[%s972] ss:$4 sm:$0x7]
        %s1580 = sld [smem:[#allocation3 + $0x64]]
        %v1581 = vstv %s1580
        %v1582 = vmul.f32 %v1581, %v1579
        %v1583 = vadd.f32 %v1578, %v1582
        %v1584 = vld [vmem:[%s978] ss:$4 sm:$0x7]
        %s1585 = sld [smem:[#allocation3 + $0x65]]
        %v1586 = vstv %s1585
        %v1587 = vmul.f32 %v1586, %v1584
        %v1588 = vadd.f32 %v1583, %v1587
        %s1589 = sld [smem:[#allocation3 + $0x66]]
        %v1590 = vstv %s1589
        %v1591 = vmul.f32 %v1590, %v1574
        %1593 = vrot.lane.b32.xlu0 %v1591, 110
        %v1594 = vpop.permute.xlu0 %1593
        %v1595 = vrot.slane %v1594, 1
        %v1596 = vsel %vm755, %v1594, %v1595
        %v1598 = vadd.f32 %v1588, %v1596
        %s1599 = sld [smem:[#allocation3 + $0x67]]
        %v1600 = vstv %s1599
        %v1601 = vmul.f32 %v1600, %v1579
        %1603 = vrot.lane.b32.xlu0 %v1601, 110
        %v1604 = vpop.permute.xlu0 %1603
        %v1605 = vrot.slane %v1604, 1
        %v1606 = vsel %vm755, %v1604, %v1605
        %v1608 = vadd.f32 %v1598, %v1606
        %s1609 = sld [smem:[#allocation3 + $0x68]]
        %v1610 = vstv %s1609
        %v1611 = vmul.f32 %v1610, %v1584
        %1613 = vrot.lane.b32.xlu0 %v1611, 110
        %v1614 = vpop.permute.xlu0 %1613
        %v1615 = vrot.slane %v1614, 1
        %v1616 = vsel %vm755, %v1614, %v1615
        %v1618 = vadd.f32 %v1608, %v1616
        %s1619 = sld [smem:[#allocation3 + $0x69]]
        %v1620 = vstv %s1619
        %v1621 = vmul.f32 %v1620, %v1574
        %1623 = vrot.lane.b32.xlu0 %v1621, 92
        %v1624 = vpop.permute.xlu0 %1623
        %v1625 = vrot.slane %v1624, 1
        %v1626 = vsel %vm786, %v1624, %v1625
        %v1628 = vadd.f32 %v1618, %v1626
        %s1629 = sld [smem:[#allocation3 + $0x6a]]
        %v1630 = vstv %s1629
        %v1631 = vmul.f32 %v1630, %v1579
        %1633 = vrot.lane.b32.xlu0 %v1631, 92
        %v1634 = vpop.permute.xlu0 %1633
        %v1635 = vrot.slane %v1634, 1
        %v1636 = vsel %vm786, %v1634, %v1635
        %v1638 = vadd.f32 %v1628, %v1636
        %s1639 = sld [smem:[#allocation3 + $0x6b]]
        %v1640 = vstv %s1639
        %v1641 = vmul.f32 %v1640, %v1584
        %1643 = vrot.lane.b32.xlu0 %v1641, 92
        %v1644 = vpop.permute.xlu0 %1643
        %v1645 = vrot.slane %v1644, 1
        %v1646 = vsel %vm786, %v1644, %v1645
        %v1648 = vadd.f32 %v1638, %v1646
        %s1649 = scalar_lea.vmem %s191, 2
        %1650 = vst.msk [vmem:[%s1649] ss:$4 sm:$0x7] %vm1047, %v1648
        %v1651 = vld [vmem:[#allocation2] ss:$4 sm:$0x7]
        %s1652 = sld [smem:[#allocation3 + $0x6c]]
        %v1653 = vstv %s1652
        %v1654 = vmul.f32 %v1653, %v1651
        %v1655 = vld [vmem:[%s234] ss:$4 sm:$0x7]
        %s1656 = sld [smem:[#allocation3 + $0x6d]]
        %v1657 = vstv %s1656
        %v1658 = vmul.f32 %v1657, %v1655
        %v1659 = vadd.f32 %v1654, %v1658
        %v1660 = vld [vmem:[%s240] ss:$4 sm:$0x7]
        %s1661 = sld [smem:[#allocation3 + $0x6e]]
        %v1662 = vstv %s1661
        %v1663 = vmul.f32 %v1662, %v1660
        %v1664 = vadd.f32 %v1659, %v1663
        %s1665 = sld [smem:[#allocation3 + $0x6f]]
        %v1666 = vstv %s1665
        %v1667 = vmul.f32 %v1666, %v1651
        %1669 = vrot.lane.b32.xlu0 %v1667, 110
        %v1670 = vpop.permute.xlu0 %1669
        %v1671 = vrot.slane %v1670, 1
        %v1672 = vsel %vm755, %v1670, %v1671
        %v1674 = vadd.f32 %v1664, %v1672
        %s1675 = sld [smem:[#allocation3 + $0x70]]
        %v1676 = vstv %s1675
        %v1677 = vmul.f32 %v1676, %v1655
        %1679 = vrot.lane.b32.xlu0 %v1677, 110
        %v1680 = vpop.permute.xlu0 %1679
        %v1681 = vrot.slane %v1680, 1
        %v1682 = vsel %vm755, %v1680, %v1681
        %v1684 = vadd.f32 %v1674, %v1682
        %s1685 = sld [smem:[#allocation3 + $0x71]]
        %v1686 = vstv %s1685
        %v1687 = vmul.f32 %v1686, %v1660
        %1689 = vrot.lane.b32.xlu0 %v1687, 110
        %v1690 = vpop.permute.xlu0 %1689
        %v1691 = vrot.slane %v1690, 1
        %v1692 = vsel %vm755, %v1690, %v1691
        %v1694 = vadd.f32 %v1684, %v1692
        %s1695 = sld [smem:[#allocation3 + $0x72]]
        %v1696 = vstv %s1695
        %v1697 = vmul.f32 %v1696, %v1651
        %1699 = vrot.lane.b32.xlu0 %v1697, 92
        %v1700 = vpop.permute.xlu0 %1699
        %v1701 = vrot.slane %v1700, 1
        %v1702 = vsel %vm786, %v1700, %v1701
        %v1704 = vadd.f32 %v1694, %v1702
        %s1705 = sld [smem:[#allocation3 + $0x73]]
        %v1706 = vstv %s1705
        %v1707 = vmul.f32 %v1706, %v1655
        %1709 = vrot.lane.b32.xlu0 %v1707, 92
        %v1710 = vpop.permute.xlu0 %1709
        %v1711 = vrot.slane %v1710, 1
        %v1712 = vsel %vm786, %v1710, %v1711
        %v1714 = vadd.f32 %v1704, %v1712
        %s1715 = sld [smem:[#allocation3 + $0x74]]
        %v1716 = vstv %s1715
        %v1717 = vmul.f32 %v1716, %v1660
        %1719 = vrot.lane.b32.xlu0 %v1717, 92
        %v1720 = vpop.permute.xlu0 %1719
        %v1721 = vrot.slane %v1720, 1
        %v1722 = vsel %vm786, %v1720, %v1721
        %v1724 = vadd.f32 %v1714, %v1722
        %v1725 = vld [vmem:[%s810] ss:$4 sm:$0x7]
        %s1726 = sld [smem:[#allocation3 + $0x75]]
        %v1727 = vstv %s1726
        %v1728 = vmul.f32 %v1727, %v1725
        %v1729 = vadd.f32 %v1724, %v1728
        %v1730 = vld [vmem:[%s816] ss:$4 sm:$0x7]
        %s1731 = sld [smem:[#allocation3 + $0x76]]
        %v1732 = vstv %s1731
        %v1733 = vmul.f32 %v1732, %v1730
        %v1734 = vadd.f32 %v1729, %v1733
        %v1735 = vld [vmem:[%s822] ss:$4 sm:$0x7]
        %s1736 = sld [smem:[#allocation3 + $0x77]]
        %v1737 = vstv %s1736
        %v1738 = vmul.f32 %v1737, %v1735
        %v1739 = vadd.f32 %v1734, %v1738
        %s1740 = sld [smem:[#allocation3 + $0x78]]
        %v1741 = vstv %s1740
        %v1742 = vmul.f32 %v1741, %v1725
        %1744 = vrot.lane.b32.xlu0 %v1742, 110
        %v1745 = vpop.permute.xlu0 %1744
        %v1746 = vrot.slane %v1745, 1
        %v1747 = vsel %vm755, %v1745, %v1746
        %v1749 = vadd.f32 %v1739, %v1747
        %s1750 = sld [smem:[#allocation3 + $0x79]]
        %v1751 = vstv %s1750
        %v1752 = vmul.f32 %v1751, %v1730
        %1754 = vrot.lane.b32.xlu0 %v1752, 110
        %v1755 = vpop.permute.xlu0 %1754
        %v1756 = vrot.slane %v1755, 1
        %v1757 = vsel %vm755, %v1755, %v1756
        %v1759 = vadd.f32 %v1749, %v1757
        %s1760 = sld [smem:[#allocation3 + $0x7a]]
        %v1761 = vstv %s1760
        %v1762 = vmul.f32 %v1761, %v1735
        %1764 = vrot.lane.b32.xlu0 %v1762, 110
        %v1765 = vpop.permute.xlu0 %1764
        %v1766 = vrot.slane %v1765, 1
        %v1767 = vsel %vm755, %v1765, %v1766
        %v1769 = vadd.f32 %v1759, %v1767
        %s1770 = sld [smem:[#allocation3 + $0x7b]]
        %v1771 = vstv %s1770
        %v1772 = vmul.f32 %v1771, %v1725
        %1774 = vrot.lane.b32.xlu0 %v1772, 92
        %v1775 = vpop.permute.xlu0 %1774
        %v1776 = vrot.slane %v1775, 1
        %v1777 = vsel %vm786, %v1775, %v1776
        %v1779 = vadd.f32 %v1769, %v1777
        %s1780 = sld [smem:[#allocation3 + $0x7c]]
        %v1781 = vstv %s1780
        %v1782 = vmul.f32 %v1781, %v1730
        %1784 = vrot.lane.b32.xlu0 %v1782, 92
        %v1785 = vpop.permute.xlu0 %1784
        %v1786 = vrot.slane %v1785, 1
        %v1787 = vsel %vm786, %v1785, %v1786
        %v1789 = vadd.f32 %v1779, %v1787
        %s1790 = sld [smem:[#allocation3 + $0x7d]]
        %v1791 = vstv %s1790
        %v1792 = vmul.f32 %v1791, %v1735
        %1794 = vrot.lane.b32.xlu0 %v1792, 92
        %v1795 = vpop.permute.xlu0 %1794
        %v1796 = vrot.slane %v1795, 1
        %v1797 = vsel %vm786, %v1795, %v1796
        %v1799 = vadd.f32 %v1789, %v1797
        %v1800 = vld [vmem:[%s888] ss:$4 sm:$0x7]
        %s1801 = sld [smem:[#allocation3 + $0x7e]]
        %v1802 = vstv %s1801
        %v1803 = vmul.f32 %v1802, %v1800
        %v1804 = vadd.f32 %v1799, %v1803
        %v1805 = vld [vmem:[%s894] ss:$4 sm:$0x7]
        %s1806 = sld [smem:[#allocation3 + $0x7f]]
        %v1807 = vstv %s1806
        %v1808 = vmul.f32 %v1807, %v1805
        %v1809 = vadd.f32 %v1804, %v1808
        %v1810 = vld [vmem:[%s900] ss:$4 sm:$0x7]
        %s1811 = sld [smem:[#allocation3 + $0x80]]
        %v1812 = vstv %s1811
        %v1813 = vmul.f32 %v1812, %v1810
        %v1814 = vadd.f32 %v1809, %v1813
        %s1815 = sld [smem:[#allocation3 + $0x81]]
        %v1816 = vstv %s1815
        %v1817 = vmul.f32 %v1816, %v1800
        %1819 = vrot.lane.b32.xlu0 %v1817, 110
        %v1820 = vpop.permute.xlu0 %1819
        %v1821 = vrot.slane %v1820, 1
        %v1822 = vsel %vm755, %v1820, %v1821
        %v1824 = vadd.f32 %v1814, %v1822
        %s1825 = sld [smem:[#allocation3 + $0x82]]
        %v1826 = vstv %s1825
        %v1827 = vmul.f32 %v1826, %v1805
        %1829 = vrot.lane.b32.xlu0 %v1827, 110
        %v1830 = vpop.permute.xlu0 %1829
        %v1831 = vrot.slane %v1830, 1
        %v1832 = vsel %vm755, %v1830, %v1831
        %v1834 = vadd.f32 %v1824, %v1832
        %s1835 = sld [smem:[#allocation3 + $0x83]]
        %v1836 = vstv %s1835
        %v1837 = vmul.f32 %v1836, %v1810
        %1839 = vrot.lane.b32.xlu0 %v1837, 110
        %v1840 = vpop.permute.xlu0 %1839
        %v1841 = vrot.slane %v1840, 1
        %v1842 = vsel %vm755, %v1840, %v1841
        %v1844 = vadd.f32 %v1834, %v1842
        %s1845 = sld [smem:[#allocation3 + $0x84]]
        %v1846 = vstv %s1845
        %v1847 = vmul.f32 %v1846, %v1800
        %1849 = vrot.lane.b32.xlu0 %v1847, 92
        %v1850 = vpop.permute.xlu0 %1849
        %v1851 = vrot.slane %v1850, 1
        %v1852 = vsel %vm786, %v1850, %v1851
        %v1854 = vadd.f32 %v1844, %v1852
        %s1855 = sld [smem:[#allocation3 + $0x85]]
        %v1856 = vstv %s1855
        %v1857 = vmul.f32 %v1856, %v1805
        %1859 = vrot.lane.b32.xlu0 %v1857, 92
        %v1860 = vpop.permute.xlu0 %1859
        %v1861 = vrot.slane %v1860, 1
        %v1862 = vsel %vm786, %v1860, %v1861
        %v1864 = vadd.f32 %v1854, %v1862
        %s1865 = sld [smem:[#allocation3 + $0x86]]
        %v1866 = vstv %s1865
        %v1867 = vmul.f32 %v1866, %v1810
        %1869 = vrot.lane.b32.xlu0 %v1867, 92
        %v1870 = vpop.permute.xlu0 %1869
        %v1871 = vrot.slane %v1870, 1
        %v1872 = vsel %vm786, %v1870, %v1871
        %v1874 = vadd.f32 %v1864, %v1872
        %v1875 = vld [vmem:[%s966] ss:$4 sm:$0x7]
        %s1876 = sld [smem:[#allocation3 + $0x87]]
        %v1877 = vstv %s1876
        %v1878 = vmul.f32 %v1877, %v1875
        %v1879 = vadd.f32 %v1874, %v1878
        %v1880 = vld [vmem:[%s972] ss:$4 sm:$0x7]
        %s1881 = sld [smem:[#allocation3 + $0x88]]
        %v1882 = vstv %s1881
        %v1883 = vmul.f32 %v1882, %v1880
        %v1884 = vadd.f32 %v1879, %v1883
        %v1885 = vld [vmem:[%s978] ss:$4 sm:$0x7]
        %s1886 = sld [smem:[#allocation3 + $0x89]]
        %v1887 = vstv %s1886
        %v1888 = vmul.f32 %v1887, %v1885
        %v1889 = vadd.f32 %v1884, %v1888
        %s1890 = sld [smem:[#allocation3 + $0x8a]]
        %v1891 = vstv %s1890
        %v1892 = vmul.f32 %v1891, %v1875
        %1894 = vrot.lane.b32.xlu0 %v1892, 110
        %v1895 = vpop.permute.xlu0 %1894
        %v1896 = vrot.slane %v1895, 1
        %v1897 = vsel %vm755, %v1895, %v1896
        %v1899 = vadd.f32 %v1889, %v1897
        %s1900 = sld [smem:[#allocation3 + $0x8b]]
        %v1901 = vstv %s1900
        %v1902 = vmul.f32 %v1901, %v1880
        %1904 = vrot.lane.b32.xlu0 %v1902, 110
        %v1905 = vpop.permute.xlu0 %1904
        %v1906 = vrot.slane %v1905, 1
        %v1907 = vsel %vm755, %v1905, %v1906
        %v1909 = vadd.f32 %v1899, %v1907
        %s1910 = sld [smem:[#allocation3 + $0x8c]]
        %v1911 = vstv %s1910
        %v1912 = vmul.f32 %v1911, %v1885
        %1914 = vrot.lane.b32.xlu0 %v1912, 110
        %v1915 = vpop.permute.xlu0 %1914
        %v1916 = vrot.slane %v1915, 1
        %v1917 = vsel %vm755, %v1915, %v1916
        %v1919 = vadd.f32 %v1909, %v1917
        %s1920 = sld [smem:[#allocation3 + $0x8d]]
        %v1921 = vstv %s1920
        %v1922 = vmul.f32 %v1921, %v1875
        %1924 = vrot.lane.b32.xlu0 %v1922, 92
        %v1925 = vpop.permute.xlu0 %1924
        %v1926 = vrot.slane %v1925, 1
        %v1927 = vsel %vm786, %v1925, %v1926
        %v1929 = vadd.f32 %v1919, %v1927
        %s1930 = sld [smem:[#allocation3 + $0x8e]]
        %v1931 = vstv %s1930
        %v1932 = vmul.f32 %v1931, %v1880
        %1934 = vrot.lane.b32.xlu0 %v1932, 92
        %v1935 = vpop.permute.xlu0 %1934
        %v1936 = vrot.slane %v1935, 1
        %v1937 = vsel %vm786, %v1935, %v1936
        %v1939 = vadd.f32 %v1929, %v1937
        %s1940 = sld [smem:[#allocation3 + $0x8f]]
        %v1941 = vstv %s1940
        %v1942 = vmul.f32 %v1941, %v1885
        %1944 = vrot.lane.b32.xlu0 %v1942, 92
        %v1945 = vpop.permute.xlu0 %1944
        %v1946 = vrot.slane %v1945, 1
        %v1947 = vsel %vm786, %v1945, %v1946
        %v1949 = vadd.f32 %v1939, %v1947
        %s1950 = scalar_lea.vmem %s191, 3
        %1951 = vst.msk [vmem:[%s1950] ss:$4 sm:$0x7] %vm1047, %v1949
        %v1952 = vld [vmem:[%s191] sm:$0xff]
        %v1953 = vld [vmem:[%s191 + $0x8] sm:$0xf]
        %v1955 = vcombine.high %v1952, %v1952
        %vm1957 = vcmask 1043456
        %v1958 = vsel %vm1957, %v1952, 0.0
        %v1959 = vsel %vm1957, %v1955, 0.0
        %v1960 = vadd.f32 %v1958, %v1959
        %vm1961 = vcmask 551936
        %v1962 = vsel %vm1961, %v1953, 0.0
        %v1963 = vadd.f32 %v1960, %v1962
        %1964 = vadd.xlane.f32.xlu0 %v1963
        %v1965 = vpop.xlane.xlu0 %1964
        %vm1966 = vcmask 3072
        %1967 = vst.msk [vmem:[%s195] sm:$0xf] %vm1966, %v1965
        %v1968 = vmul.f32 %v1952, %v1952
        %v1969 = vmul.f32 %v1953, %v1953
        %v1971 = vcombine.high %v1968, %v1968
        %v1973 = vsel %vm1957, %v1968, 0.0
        %v1974 = vsel %vm1957, %v1971, 0.0
        %v1975 = vadd.f32 %v1973, %v1974
        %v1976 = vsel %vm1961, %v1969, 0.0
        %v1977 = vadd.f32 %v1975, %v1976
        %1978 = vadd.xlane.f32.xlu0 %v1977
        %v1979 = vpop.xlane.xlu0 %1978
        %vm1980 = vcmask 11272
        %1981 = vst.msk [vmem:[%s195] sm:$0xf] %vm1980, %v1979
        %p1982 = scmp.lt.s32.totalorder %s16, 1
        %s1983 = scalar_select %p1982, %s16, 1
        %s1984 = smul.addr %s1983, 3
        %s1985 = smul.addr %s1984, 4
        %s1986 = scalar_lea.vmem %s2, %s1985
        %p1987 = scmp.lt.s32.totalorder %s16, 1
        %s1988 = scalar_select %p1987, %s16, 1
        %s1989 = smul.addr %s1988, 4
        %s1990 = scalar_lea.vmem %s3, %s1989
        // Predicated region
        $region33: #{convolution_block.2} parent=27 // pred_check
          %p1991 = pneg %p81
        $region34: #{convolution_block.2} parent=27 // pred_check_branch
          %1993 = sbr.rel (%p1991) target = $region36
        $region35: #{convolution_block.2} parent=27 // pred_region
          _
        $region36: #{convolution_block.2} parent=27 // pred_fallthru
          _
        // Predicated region
        $region37: #{convolution_block.2} parent=27 // pred_check
          %p1994 = pneg %p107
        $region38: #{convolution_block.2} parent=27 // pred_check_branch
          %1996 = sbr.rel (%p1994) target = $region40
        $region39: #{convolution_block.2} parent=27 // pred_region
          _
        $region40: #{convolution_block.2} parent=27 // pred_fallthru
          _
      $region28: #{convolution_block.2} parent=5 // pred_fallthru
        _
      %p1997 = scmp.le.s32.totalorder 2, %s11
      // Predicated region
      $region41: #{convolution_block.2} parent=5 // pred_check
        %p1998 = pneg %p1997
      $region42: #{convolution_block.2} parent=5 // pred_check_branch
        %2000 = sbr.rel (%p1998) target = $region44
      $region43: #{convolution_block.2} parent=5 // pred_region
        %s2001 = ssub.s32 %s11, 2
        // Predicated region
        $region45: #{convolution_block.2} parent=43 // pred_check
          %p2002 = pneg %p87
        $region46: #{convolution_block.2} parent=43 // pred_check_branch
          %2004 = sbr.rel (%p2002) target = $region48
        $region47: #{convolution_block.2} parent=43 // pred_region
          %p2005 = scmp.lt.s32.totalorder %s17, 1
          %s2006 = scalar_select %p2005, %s17, 1
          %s2007 = smul.addr %s2006, 3
          %s2008 = smul.addr %s2007, 4
          %s2009 = scalar_lea.vmem %s2, %s2008
        $region48: #{convolution_block.2} parent=43 // pred_fallthru
          _
        // Predicated region
        $region49: #{convolution_block.2} parent=43 // pred_check
          %p2010 = pneg %p113
        $region50: #{convolution_block.2} parent=43 // pred_check_branch
          %2012 = sbr.rel (%p2010) target = $region52
        $region51: #{convolution_block.2} parent=43 // pred_region
          %p2013 = scmp.lt.s32.totalorder %s17, 1
          %s2014 = scalar_select %p2013, %s17, 1
          %s2015 = smul.addr %s2014, 4
          %s2016 = scalar_lea.vmem %s3, %s2015
        $region52: #{convolution_block.2} parent=43 // pred_fallthru
          _
      $region44: #{convolution_block.2} parent=5 // pred_fallthru
        _
    $region6: #{convolution_block.2} parent=1 // loop_footer
      %s15 = sadd.s32 1, %s11
    $region7: #{convolution_block.2} parent=1 // loop_footer_branch
      %10 = sbr.rel target = $region3
    $region8: #{convolution_block.2} parent=1 // loop_exit
      _
    %2017 = vsyncpa [#allocation4], 1
    %s2018 = scalar_lea.sflag [#allocation4], 1
    %2019 = vsyncpa %s2018, 1

</llo_original>
